<compile_context>
chip_gen: v5e
topology: v5e:2x2
jax: 0.10.0
libtpu: 0.0.40
codegen_flags: <defaults>
</compile_context>

<pallas_src>
import functools

import jax
import jax.numpy as jnp
from jax.experimental import pallas as pl
from jax.experimental.pallas import tpu as pltpu

K_CHEB = 5            # ChebConv K
LAMBDA_MAX = 2.0      # PyG default for 'sym' normalization when lambda_max=None
LIN1_PAD = 1024       # 1000 -> 1024 lanes
LIN2_PAD = 128        # 50   -> 128 lanes
OUT_PAD = 128         # out_size -> 128 lanes (sliced off in the wrapper)
GRAPHS_PER_BLOCK = 8  # graphs per grid step (sublane-aligned; raise toward 128
                      # for large batches to fill more MXU rows per step)


def _round_up(n, m):
    return ((n + m - 1) // m) * m


# ----------------------------------------------------------------------------
# Fused Pallas kernel: ChebConv1 + ReLU + ChebConv2 + ReLU + flatten + MLP head
# ----------------------------------------------------------------------------
def _graph_head_kernel(t_ref, x_ref, w1_ref, b1_ref, w2_ref, b2_ref,
                       wl1_ref, bl1_ref, wl2_ref, bl2_ref, wl3_ref, bl3_ref,
                       o_ref, *, graphs_per_block, input_size, hidden):
    f32 = jnp.float32
    GB, I, H, K = graphs_per_block, input_size, hidden, K_CHEB

    T = t_ref[...]                                      # [GB, K*I, I] Chebyshev stack
    x = x_ref[...]                                      # [GB, I, 1]

    # ---- ChebConv1 (Cin=1): all K Chebyshev hops in ONE batched matmul ------
    # basis1[:, k*I:(k+1)*I, c] = T_k(L_g) @ x_g  (replicated across lanes c;
    # the MXU pads N to 128 anyway, so the replication is free).
    xh = jnp.broadcast_to(x, (GB, I, H))
    basis1 = jnp.einsum('gmi,gic->gmc', T, xh, preferred_element_type=f32)
    w1 = w1_ref[...]                                    # [K, H]
    h = basis1[:, 0:I, :] * w1[0:1, :]
    for k in range(1, K):
        h = h + basis1[:, k * I:(k + 1) * I, :] * w1[k:k + 1, :]
    h = jnp.maximum(h + b1_ref[...], 0.0)               # fused .relu(), [GB, I, H]

    # ---- ChebConv2 basis: ONE batched matmul (no dependent recurrence) ------
    basis2 = jnp.einsum('gmi,gic->gmc', T, h, preferred_element_type=f32)  # [GB,K*I,H]
    b2w = jnp.concatenate(
        [basis2[:, k * I:(k + 1) * I, :] for k in range(K)], axis=-1)      # [GB,I,K*H]

    # ---- per graph: stacked conv2 weight matmul + row-major flatten ---------
    # (independent per-graph 2-D work, statically unrolled; GB is small)
    w2 = w2_ref[...]                                    # [K*H, H]
    b2 = b2_ref[...]                                    # [1, H]
    rows = []
    for g in range(GB):
        h2_g = jnp.dot(b2w[g], w2, preferred_element_type=f32) + b2        # [I, H]
        h2_g = jnp.maximum(h2_g, 0.0)                   # fused .relu()
        # torch.reshape(x, (B, I*H)) == lane-concat of the I unit row slices.
        rows.append(jnp.concatenate([h2_g[i:i + 1, :] for i in range(I)], axis=-1))
    flat = jnp.concatenate(rows, axis=0)                # [GB, I*H] lane-dense

    # ---- MLP head on the whole graph block (sublane-aligned, fat M) ---------
    z = jnp.dot(flat, wl1_ref[...], preferred_element_type=f32)
    z = jnp.maximum(z + bl1_ref[...], 0.0)
    z = jnp.dot(z, wl2_ref[...], preferred_element_type=f32)
    z = jnp.maximum(z + bl2_ref[...], 0.0)
    # TODO(synk): dropout is identity in eval mode; training-mode dropout not implemented.
    z = jnp.dot(z, wl3_ref[...], preferred_element_type=f32)
    o_ref[...] = jnp.clip(z + bl3_ref[...], 0.0, 110.0)  # torch.clamp(x, 0, 110)


def graph_head_fused(t_stack, x_nodes, p, *, graphs_per_block, input_size, hidden):
    """t_stack: [BP, K*I, I] f32, x_nodes: [BP, I, 1] f32, BP % graphs_per_block == 0."""
    BP = t_stack.shape[0]
    GB = graphs_per_block
    KI = K_CHEB * input_size
    out_pad = p["lin3_b"].shape[1]

    def full_spec(a):
        n = a.ndim
        return pl.BlockSpec(a.shape, lambda g: (0,) * n)

    kernel = functools.partial(_graph_head_kernel, graphs_per_block=GB,
                               input_size=input_size, hidden=hidden)
    weights = (p["conv1_w"], p["conv1_b"], p["conv2_w"], p["conv2_b"],
               p["lin1_w"], p["lin1_b"], p["lin2_w"], p["lin2_b"],
               p["lin3_w"], p["lin3_b"])
    return pl.pallas_call(
        kernel,
        grid=(BP // GB,),
        in_specs=[pl.BlockSpec((GB, KI, input_size), lambda g: (g, 0, 0)),
                  pl.BlockSpec((GB, input_size, 1), lambda g: (g, 0, 0))]
                 + [full_spec(w) for w in weights],
        out_specs=pl.BlockSpec((GB, out_pad), lambda g: (g, 0)),
        out_shape=jax.ShapeDtypeStruct((BP, out_pad), jnp.float32),
        compiler_params=pltpu.CompilerParams(
            dimension_semantics=("parallel",),   # shards graph blocks across v7x's 2 TCs
            vmem_limit_bytes=32 * 1024 * 1024),
    )(t_stack, x_nodes, *weights)


# ----------------------------------------------------------------------------
# Plain-JAX glue
# ----------------------------------------------------------------------------
def build_cheb_stack(edge_index, batch_size, input_size, lambda_max=LAMBDA_MAX):
    """Per-graph Chebyshev operator stack [B, K*I, I] (PyG ChebConv 'sym' norm).

    Exploits the block-diagonal structure of the batched graph: graphs are
    disjoint, so only the B diagonal [I, I] blocks are built, and the T_k
    recurrence is collapsed into 3 batched matmuls here (outside the kernel).
    Assumes the standard PyG layout: nodes of graph b are rows
    [b*I, (b+1)*I) and no edge crosses graphs (same assumption the reference
    reshape makes).
    """
    I = input_size
    r, c = edge_index[0], edge_index[1]
    adj = jnp.zeros((batch_size, I, I), jnp.float32).at[r // I, r % I, c % I].add(1.0)
    deg = adj.sum(axis=2)
    d_is = jnp.where(deg > 0, jax.lax.rsqrt(deg), 0.0)
    a_norm = d_is[:, :, None] * adj * d_is[:, None, :]
    eye = jnp.eye(I, dtype=jnp.float32)
    l_hat = (2.0 / lambda_max) * (eye - a_norm) - eye           # [B, I, I]
    ts = [jnp.broadcast_to(eye, l_hat.shape), l_hat]
    for _ in range(2, K_CHEB):
        ts.append(2.0 * jnp.einsum('bij,bjk->bik', l_hat, ts[-1]) - ts[-2])
    return jnp.concatenate(ts, axis=1)                          # [B, K*I, I]


def init_params(key, hidden_channels, input_size, out_size):
    """Deterministic synthetic parameters in kernel-ready (f32) layouts.

    Linear/conv weights are stored pre-transposed as [in, out]; conv2's K
    weights are row-stacked to [K*H, H] matching the lane-concatenated
    Chebyshev basis; MLP dims are zero-padded to lane-dense 1024 / 128 / 128.
    """
    H = hidden_channels
    lin_in = input_size * H                      # final_pool == 'None'
    ks = jax.random.split(key, 10)

    def w(k, shape, scale=0.1):
        return (scale * jax.random.normal(k, shape)).astype(jnp.float32)

    def pad2(a, rows, cols):
        return jnp.zeros((rows, cols), a.dtype).at[:a.shape[0], :a.shape[1]].set(a)

    conv2_w = w(ks[2], (K_CHEB, H, H)).reshape(K_CHEB * H, H)
    return {
        "conv1_w": w(ks[0], (K_CHEB, H)),                         # [K, H] (Cin=1)
        "conv1_b": w(ks[1], (1, H)),
        "conv2_w": conv2_w,                                       # [K*H, H]
        "conv2_b": w(ks[3], (1, H)),
        "lin1_w": pad2(w(ks[4], (lin_in, 1000), 0.05), lin_in, LIN1_PAD),
        "lin1_b": pad2(w(ks[5], (1, 1000)), 1, LIN1_PAD),
        "lin2_w": pad2(w(ks[6], (1000, 50), 0.05), LIN1_PAD, LIN2_PAD),
        "lin2_b": pad2(w(ks[7], (1, 50)), 1, LIN2_PAD),
        "lin3_w": pad2(w(ks[8], (50, out_size), 0.05), LIN2_PAD, OUT_PAD),
        "lin3_b": pad2(w(ks[9], (1, out_size)), 1, OUT_PAD),
    }


@functools.partial(jax.jit, static_argnames=("batch_size", "hidden_channels",
                                              "input_size", "out_size"))
def graph_head_forward(params, x, edge_index, edge_attr, batch, *,
                       batch_size, hidden_channels, input_size, out_size):
    # batch_size is static: the reference `torch.max(batch).item() + 1` forces a
    # device->host sync and breaks jit.  The reference forward never passes
    # edge_attr to the ChebConvs, so it (and `batch`) is unused here.
    del edge_attr, batch
    B, I = batch_size, input_size

    t_stack = build_cheb_stack(edge_index, B, I)                 # [B, K*I, I]
    x_nodes = x.astype(jnp.float32).reshape(B, I, 1)             # [B, I, 1]

    # Pad the graph batch to a multiple of GRAPHS_PER_BLOCK (sublane-aligned
    # MLP rows and an unmasked lane-dense output store); pad graphs use T=0.
    gb = GRAPHS_PER_BLOCK
    bp = _round_up(B, gb)
    t_pad = jnp.zeros((bp,) + t_stack.shape[1:], jnp.float32).at[:B].set(t_stack)
    x_pad = jnp.zeros((bp, I, 1), jnp.float32).at[:B].set(x_nodes)

    out_full = graph_head_fused(t_pad, x_pad, params, graphs_per_block=gb,
                                input_size=I, hidden=hidden_channels)
    # TODO(synk): final_pool in {'mean','max','add'} not implemented (module uses 'None').
    return jnp.squeeze(out_full[:B, :out_size])


# ----------------------------------------------------------------------------
# Demo
# ----------------------------------------------------------------------------
if __name__ == "__main__":
    hidden_channels = 8
    input_size = 16          # nodes per graph
    out_size = 4
    batch_size = 2
    num_nodes = batch_size * input_size

    key = jax.random.PRNGKey(0)
    k_x, k_p = jax.random.split(key)

    # node features: [N, 1] (ChebConv(1, hidden) implies 1 input channel)
    x = jax.random.normal(k_x, (num_nodes, 1), dtype=jnp.float32)

    # ring graph within each sample, bidirectional edges
    src, dst = [], []
    for b in range(batch_size):
        off = b * input_size
        for i in range(input_size):
            j = (i + 1) % input_size
            src += [off + i, off + j]
            dst += [off + j, off + i]
    edge_index = jnp.array([src, dst], dtype=jnp.int32)         # [2, 64]
    edge_attr = jnp.ones((edge_index.shape[1],), jnp.float32)   # unused by reference
    batch = jnp.repeat(jnp.arange(batch_size, dtype=jnp.int32), input_size)

    params = init_params(k_p, hidden_channels, input_size, out_size)

    out = graph_head_forward(params, x, edge_index, edge_attr, batch,
                             batch_size=batch_size,
                             hidden_channels=hidden_channels,
                             input_size=input_size, out_size=out_size)
    out = jax.block_until_ready(out)
    assert out.shape == (batch_size, out_size)
    assert bool(jnp.all(out >= 0.0)) and bool(jnp.all(out <= 110.0))
    print("KERNEL_OK")
</pallas_src>

<mosaic_0001>
module attributes {stable_mosaic.version = 11 : i64} {
  func.func @_graph_head_kernel(%arg0: i32, %arg1: memref<8x80x16xf32, #tpu.memory_space<vmem>>, %arg2: memref<8x16x1xf32, #tpu.memory_space<vmem>>, %arg3: memref<5x8xf32, #tpu.memory_space<vmem>>, %arg4: memref<1x8xf32, #tpu.memory_space<vmem>>, %arg5: memref<40x8xf32, #tpu.memory_space<vmem>>, %arg6: memref<1x8xf32, #tpu.memory_space<vmem>>, %arg7: memref<128x1024xf32, #tpu.memory_space<vmem>>, %arg8: memref<1x1024xf32, #tpu.memory_space<vmem>>, %arg9: memref<1024x128xf32, #tpu.memory_space<vmem>>, %arg10: memref<1x128xf32, #tpu.memory_space<vmem>>, %arg11: memref<128x128xf32, #tpu.memory_space<vmem>>, %arg12: memref<1x128xf32, #tpu.memory_space<vmem>>, %arg13: memref<8x128xf32, #tpu.memory_space<vmem>>) attributes {dimension_semantics = [#tpu.dimension_semantics<parallel>], iteration_bounds = array<i64: 1>, scalar_prefetch = 0 : i64, scratch_operands = 0 : i64, tpu.core_type = #tpu.core_type<tc>, window_params = [{transform_indices = @transform_0, window_bounds = array<i64: 8, 80, 16>}, {transform_indices = @transform_1, window_bounds = array<i64: 8, 16, 1>}, {pipeline_mode = #tpu.pipeline_mode<synchronous>, transform_indices = @transform_2, window_bounds = array<i64: 5, 8>}, {pipeline_mode = #tpu.pipeline_mode<synchronous>, transform_indices = @transform_3, window_bounds = array<i64: 1, 8>}, {pipeline_mode = #tpu.pipeline_mode<synchronous>, transform_indices = @transform_4, window_bounds = array<i64: 40, 8>}, {pipeline_mode = #tpu.pipeline_mode<synchronous>, transform_indices = @transform_5, window_bounds = array<i64: 1, 8>}, {pipeline_mode = #tpu.pipeline_mode<synchronous>, transform_indices = @transform_6, window_bounds = array<i64: 128, 1024>}, {pipeline_mode = #tpu.pipeline_mode<synchronous>, transform_indices = @transform_7, window_bounds = array<i64: 1, 1024>}, {pipeline_mode = #tpu.pipeline_mode<synchronous>, transform_indices = @transform_8, window_bounds = array<i64: 1024, 128>}, {pipeline_mode = #tpu.pipeline_mode<synchronous>, transform_indices = @transform_9, window_bounds = array<i64: 1, 128>}, {pipeline_mode = #tpu.pipeline_mode<synchronous>, transform_indices = @transform_10, window_bounds = array<i64: 128, 128>}, {pipeline_mode = #tpu.pipeline_mode<synchronous>, transform_indices = @transform_11, window_bounds = array<i64: 1, 128>}, {transform_indices = @transform_12, window_bounds = array<i64: 8, 128>}]} {
    %c0 = arith.constant 0 : index
    %c0_0 = arith.constant 0 : index
    %c0_1 = arith.constant 0 : index
    %0 = vector.load %arg1[%c0, %c0_0, %c0_1] : memref<8x80x16xf32, #tpu.memory_space<vmem>>, vector<8x80x16xf32>
    %c0_2 = arith.constant 0 : index
    %c0_3 = arith.constant 0 : index
    %c0_4 = arith.constant 0 : index
    %1 = vector.load %arg2[%c0_2, %c0_3, %c0_4] : memref<8x16x1xf32, #tpu.memory_space<vmem>>, vector<8x16x1xf32>
    %2 = vector.shape_cast %1 : vector<8x16x1xf32> to vector<8x16x1xf32>
    %3 = vector.broadcast %2 : vector<8x16x1xf32> to vector<8x16x8xf32>
    "tpu.trace_start"() <{level = 10 : i32, message = "gmi,gic->gmc"}> : () -> ()
    %cst = arith.constant dense<0.000000e+00> : vector<8x80x8xf32>
    %4 = tpu.matmul %0, %3, %cst {dimension_numbers = #tpu.dot_dimension_numbers<[2], [1], [1], [2], [0, 0, 0, 1, 1, 2], [0], [0]>} : vector<8x80x16xf32>, vector<8x16x8xf32>, vector<8x80x8xf32> -> vector<8x80x8xf32>
    "tpu.trace_stop"() : () -> ()
    %c0_5 = arith.constant 0 : index
    %c0_6 = arith.constant 0 : index
    %5 = vector.load %arg3[%c0_5, %c0_6] : memref<5x8xf32, #tpu.memory_space<vmem>>, vector<5x8xf32>
    %6 = vector.extract_strided_slice %4 {offsets = [0, 0, 0], sizes = [8, 16, 8], strides = [1, 1, 1]} : vector<8x80x8xf32> to vector<8x16x8xf32>
    %7 = vector.extract_strided_slice %5 {offsets = [0, 0], sizes = [1, 8], strides = [1, 1]} : vector<5x8xf32> to vector<1x8xf32>
    %8 = vector.shape_cast %7 : vector<1x8xf32> to vector<1x1x8xf32>
    %9 = vector.broadcast %8 : vector<1x1x8xf32> to vector<8x16x8xf32>
    %10 = arith.mulf %6, %9 : vector<8x16x8xf32>
    %11 = vector.extract_strided_slice %4 {offsets = [0, 16, 0], sizes = [8, 16, 8], strides = [1, 1, 1]} : vector<8x80x8xf32> to vector<8x16x8xf32>
    %12 = vector.extract_strided_slice %5 {offsets = [1, 0], sizes = [1, 8], strides = [1, 1]} : vector<5x8xf32> to vector<1x8xf32>
    %13 = vector.shape_cast %12 : vector<1x8xf32> to vector<1x1x8xf32>
    %14 = vector.broadcast %13 : vector<1x1x8xf32> to vector<8x16x8xf32>
    %15 = arith.mulf %11, %14 : vector<8x16x8xf32>
    %16 = arith.addf %10, %15 : vector<8x16x8xf32>
    %17 = vector.extract_strided_slice %4 {offsets = [0, 32, 0], sizes = [8, 16, 8], strides = [1, 1, 1]} : vector<8x80x8xf32> to vector<8x16x8xf32>
    %18 = vector.extract_strided_slice %5 {offsets = [2, 0], sizes = [1, 8], strides = [1, 1]} : vector<5x8xf32> to vector<1x8xf32>
    %19 = vector.shape_cast %18 : vector<1x8xf32> to vector<1x1x8xf32>
    %20 = vector.broadcast %19 : vector<1x1x8xf32> to vector<8x16x8xf32>
    %21 = arith.mulf %17, %20 : vector<8x16x8xf32>
    %22 = arith.addf %16, %21 : vector<8x16x8xf32>
    %23 = vector.extract_strided_slice %4 {offsets = [0, 48, 0], sizes = [8, 16, 8], strides = [1, 1, 1]} : vector<8x80x8xf32> to vector<8x16x8xf32>
    %24 = vector.extract_strided_slice %5 {offsets = [3, 0], sizes = [1, 8], strides = [1, 1]} : vector<5x8xf32> to vector<1x8xf32>
    %25 = vector.shape_cast %24 : vector<1x8xf32> to vector<1x1x8xf32>
    %26 = vector.broadcast %25 : vector<1x1x8xf32> to vector<8x16x8xf32>
    %27 = arith.mulf %23, %26 : vector<8x16x8xf32>
    %28 = arith.addf %22, %27 : vector<8x16x8xf32>
    %29 = vector.extract_strided_slice %4 {offsets = [0, 64, 0], sizes = [8, 16, 8], strides = [1, 1, 1]} : vector<8x80x8xf32> to vector<8x16x8xf32>
    %30 = vector.extract_strided_slice %5 {offsets = [4, 0], sizes = [1, 8], strides = [1, 1]} : vector<5x8xf32> to vector<1x8xf32>
    %31 = vector.shape_cast %30 : vector<1x8xf32> to vector<1x1x8xf32>
    %32 = vector.broadcast %31 : vector<1x1x8xf32> to vector<8x16x8xf32>
    %33 = arith.mulf %29, %32 : vector<8x16x8xf32>
    %34 = arith.addf %28, %33 : vector<8x16x8xf32>
    %c0_7 = arith.constant 0 : index
    %c0_8 = arith.constant 0 : index
    %35 = vector.load %arg4[%c0_7, %c0_8] : memref<1x8xf32, #tpu.memory_space<vmem>>, vector<1x8xf32>
    %36 = vector.shape_cast %35 : vector<1x8xf32> to vector<1x1x8xf32>
    %37 = vector.broadcast %36 : vector<1x1x8xf32> to vector<8x16x8xf32>
    %38 = arith.addf %34, %37 : vector<8x16x8xf32>
    %cst_9 = arith.constant 0.000000e+00 : f32
    %39 = vector.broadcast %cst_9 : f32 to vector<8x16x8xf32>
    %40 = arith.maximumf %38, %39 : vector<8x16x8xf32>
    "tpu.trace_start"() <{level = 10 : i32, message = "gmi,gic->gmc"}> : () -> ()
    %cst_10 = arith.constant dense<0.000000e+00> : vector<8x80x8xf32>
    %41 = tpu.matmul %0, %40, %cst_10 {dimension_numbers = #tpu.dot_dimension_numbers<[2], [1], [1], [2], [0, 0, 0, 1, 1, 2], [0], [0]>} : vector<8x80x16xf32>, vector<8x16x8xf32>, vector<8x80x8xf32> -> vector<8x80x8xf32>
    "tpu.trace_stop"() : () -> ()
    %42 = vector.extract_strided_slice %41 {offsets = [0, 0, 0], sizes = [8, 16, 8], strides = [1, 1, 1]} : vector<8x80x8xf32> to vector<8x16x8xf32>
    %43 = vector.extract_strided_slice %41 {offsets = [0, 16, 0], sizes = [8, 16, 8], strides = [1, 1, 1]} : vector<8x80x8xf32> to vector<8x16x8xf32>
    %44 = vector.extract_strided_slice %41 {offsets = [0, 32, 0], sizes = [8, 16, 8], strides = [1, 1, 1]} : vector<8x80x8xf32> to vector<8x16x8xf32>
    %45 = vector.extract_strided_slice %41 {offsets = [0, 48, 0], sizes = [8, 16, 8], strides = [1, 1, 1]} : vector<8x80x8xf32> to vector<8x16x8xf32>
    %46 = vector.extract_strided_slice %41 {offsets = [0, 64, 0], sizes = [8, 16, 8], strides = [1, 1, 1]} : vector<8x80x8xf32> to vector<8x16x8xf32>
    %47 = tpu.concatenate %42, %43, %44, %45, %46 in 2 : vector<8x16x8xf32>, vector<8x16x8xf32>, vector<8x16x8xf32>, vector<8x16x8xf32>, vector<8x16x8xf32> -> vector<8x16x40xf32>
    %c0_11 = arith.constant 0 : index
    %c0_12 = arith.constant 0 : index
    %48 = vector.load %arg5[%c0_11, %c0_12] : memref<40x8xf32, #tpu.memory_space<vmem>>, vector<40x8xf32>
    %c0_13 = arith.constant 0 : index
    %c0_14 = arith.constant 0 : index
    %49 = vector.load %arg6[%c0_13, %c0_14] : memref<1x8xf32, #tpu.memory_space<vmem>>, vector<1x8xf32>
    %50 = vector.extract_strided_slice %47 {offsets = [0, 0, 0], sizes = [1, 16, 40], strides = [1, 1, 1]} : vector<8x16x40xf32> to vector<1x16x40xf32>
    %51 = vector.shape_cast %50 : vector<1x16x40xf32> to vector<16x40xf32>
    %cst_15 = arith.constant dense<0.000000e+00> : vector<16x8xf32>
    %52 = tpu.matmul %51, %48, %cst_15 {dimension_numbers = #tpu.dot_dimension_numbers<[1], [0], [0], [1], [0, 0, 1, 1], [], []>} : vector<16x40xf32>, vector<40x8xf32>, vector<16x8xf32> -> vector<16x8xf32>
    %53 = vector.broadcast %49 : vector<1x8xf32> to vector<16x8xf32>
    %54 = arith.addf %52, %53 : vector<16x8xf32>
    %cst_16 = arith.constant 0.000000e+00 : f32
    %55 = vector.broadcast %cst_16 : f32 to vector<16x8xf32>
    %56 = arith.maximumf %54, %55 : vector<16x8xf32>
    %57 = vector.extract_strided_slice %56 {offsets = [0, 0], sizes = [1, 8], strides = [1, 1]} : vector<16x8xf32> to vector<1x8xf32>
    %58 = vector.extract_strided_slice %56 {offsets = [1, 0], sizes = [1, 8], strides = [1, 1]} : vector<16x8xf32> to vector<1x8xf32>
    %59 = vector.extract_strided_slice %56 {offsets = [2, 0], sizes = [1, 8], strides = [1, 1]} : vector<16x8xf32> to vector<1x8xf32>
    %60 = vector.extract_strided_slice %56 {offsets = [3, 0], sizes = [1, 8], strides = [1, 1]} : vector<16x8xf32> to vector<1x8xf32>
    %61 = vector.extract_strided_slice %56 {offsets = [4, 0], sizes = [1, 8], strides = [1, 1]} : vector<16x8xf32> to vector<1x8xf32>
    %62 = vector.extract_strided_slice %56 {offsets = [5, 0], sizes = [1, 8], strides = [1, 1]} : vector<16x8xf32> to vector<1x8xf32>
    %63 = vector.extract_strided_slice %56 {offsets = [6, 0], sizes = [1, 8], strides = [1, 1]} : vector<16x8xf32> to vector<1x8xf32>
    %64 = vector.extract_strided_slice %56 {offsets = [7, 0], sizes = [1, 8], strides = [1, 1]} : vector<16x8xf32> to vector<1x8xf32>
    %65 = vector.extract_strided_slice %56 {offsets = [8, 0], sizes = [1, 8], strides = [1, 1]} : vector<16x8xf32> to vector<1x8xf32>
    %66 = vector.extract_strided_slice %56 {offsets = [9, 0], sizes = [1, 8], strides = [1, 1]} : vector<16x8xf32> to vector<1x8xf32>
    %67 = vector.extract_strided_slice %56 {offsets = [10, 0], sizes = [1, 8], strides = [1, 1]} : vector<16x8xf32> to vector<1x8xf32>
    %68 = vector.extract_strided_slice %56 {offsets = [11, 0], sizes = [1, 8], strides = [1, 1]} : vector<16x8xf32> to vector<1x8xf32>
    %69 = vector.extract_strided_slice %56 {offsets = [12, 0], sizes = [1, 8], strides = [1, 1]} : vector<16x8xf32> to vector<1x8xf32>
    %70 = vector.extract_strided_slice %56 {offsets = [13, 0], sizes = [1, 8], strides = [1, 1]} : vector<16x8xf32> to vector<1x8xf32>
    %71 = vector.extract_strided_slice %56 {offsets = [14, 0], sizes = [1, 8], strides = [1, 1]} : vector<16x8xf32> to vector<1x8xf32>
    %72 = vector.extract_strided_slice %56 {offsets = [15, 0], sizes = [1, 8], strides = [1, 1]} : vector<16x8xf32> to vector<1x8xf32>
    %73 = tpu.concatenate %57, %58, %59, %60, %61, %62, %63, %64, %65, %66, %67, %68, %69, %70, %71, %72 in 1 : vector<1x8xf32>, vector<1x8xf32>, vector<1x8xf32>, vector<1x8xf32>, vector<1x8xf32>, vector<1x8xf32>, vector<1x8xf32>, vector<1x8xf32>, vector<1x8xf32>, vector<1x8xf32>, vector<1x8xf32>, vector<1x8xf32>, vector<1x8xf32>, vector<1x8xf32>, vector<1x8xf32>, vector<1x8xf32> -> vector<1x128xf32>
    %74 = vector.extract_strided_slice %47 {offsets = [1, 0, 0], sizes = [1, 16, 40], strides = [1, 1, 1]} : vector<8x16x40xf32> to vector<1x16x40xf32>
    %75 = vector.shape_cast %74 : vector<1x16x40xf32> to vector<16x40xf32>
    %cst_17 = arith.constant dense<0.000000e+00> : vector<16x8xf32>
    %76 = tpu.matmul %75, %48, %cst_17 {dimension_numbers = #tpu.dot_dimension_numbers<[1], [0], [0], [1], [0, 0, 1, 1], [], []>} : vector<16x40xf32>, vector<40x8xf32>, vector<16x8xf32> -> vector<16x8xf32>
    %77 = vector.broadcast %49 : vector<1x8xf32> to vector<16x8xf32>
    %78 = arith.addf %76, %77 : vector<16x8xf32>
    %cst_18 = arith.constant 0.000000e+00 : f32
    %79 = vector.broadcast %cst_18 : f32 to vector<16x8xf32>
    %80 = arith.maximumf %78, %79 : vector<16x8xf32>
    %81 = vector.extract_strided_slice %80 {offsets = [0, 0], sizes = [1, 8], strides = [1, 1]} : vector<16x8xf32> to vector<1x8xf32>
    %82 = vector.extract_strided_slice %80 {offsets = [1, 0], sizes = [1, 8], strides = [1, 1]} : vector<16x8xf32> to vector<1x8xf32>
    %83 = vector.extract_strided_slice %80 {offsets = [2, 0], sizes = [1, 8], strides = [1, 1]} : vector<16x8xf32> to vector<1x8xf32>
    %84 = vector.extract_strided_slice %80 {offsets = [3, 0], sizes = [1, 8], strides = [1, 1]} : vector<16x8xf32> to vector<1x8xf32>
    %85 = vector.extract_strided_slice %80 {offsets = [4, 0], sizes = [1, 8], strides = [1, 1]} : vector<16x8xf32> to vector<1x8xf32>
    %86 = vector.extract_strided_slice %80 {offsets = [5, 0], sizes = [1, 8], strides = [1, 1]} : vector<16x8xf32> to vector<1x8xf32>
    %87 = vector.extract_strided_slice %80 {offsets = [6, 0], sizes = [1, 8], strides = [1, 1]} : vector<16x8xf32> to vector<1x8xf32>
    %88 = vector.extract_strided_slice %80 {offsets = [7, 0], sizes = [1, 8], strides = [1, 1]} : vector<16x8xf32> to vector<1x8xf32>
    %89 = vector.extract_strided_slice %80 {offsets = [8, 0], sizes = [1, 8], strides = [1, 1]} : vector<16x8xf32> to vector<1x8xf32>
    %90 = vector.extract_strided_slice %80 {offsets = [9, 0], sizes = [1, 8], strides = [1, 1]} : vector<16x8xf32> to vector<1x8xf32>
    %91 = vector.extract_strided_slice %80 {offsets = [10, 0], sizes = [1, 8], strides = [1, 1]} : vector<16x8xf32> to vector<1x8xf32>
    %92 = vector.extract_strided_slice %80 {offsets = [11, 0], sizes = [1, 8], strides = [1, 1]} : vector<16x8xf32> to vector<1x8xf32>
    %93 = vector.extract_strided_slice %80 {offsets = [12, 0], sizes = [1, 8], strides = [1, 1]} : vector<16x8xf32> to vector<1x8xf32>
    %94 = vector.extract_strided_slice %80 {offsets = [13, 0], sizes = [1, 8], strides = [1, 1]} : vector<16x8xf32> to vector<1x8xf32>
    %95 = vector.extract_strided_slice %80 {offsets = [14, 0], sizes = [1, 8], strides = [1, 1]} : vector<16x8xf32> to vector<1x8xf32>
    %96 = vector.extract_strided_slice %80 {offsets = [15, 0], sizes = [1, 8], strides = [1, 1]} : vector<16x8xf32> to vector<1x8xf32>
    %97 = tpu.concatenate %81, %82, %83, %84, %85, %86, %87, %88, %89, %90, %91, %92, %93, %94, %95, %96 in 1 : vector<1x8xf32>, vector<1x8xf32>, vector<1x8xf32>, vector<1x8xf32>, vector<1x8xf32>, vector<1x8xf32>, vector<1x8xf32>, vector<1x8xf32>, vector<1x8xf32>, vector<1x8xf32>, vector<1x8xf32>, vector<1x8xf32>, vector<1x8xf32>, vector<1x8xf32>, vector<1x8xf32>, vector<1x8xf32> -> vector<1x128xf32>
    %98 = vector.extract_strided_slice %47 {offsets = [2, 0, 0], sizes = [1, 16, 40], strides = [1, 1, 1]} : vector<8x16x40xf32> to vector<1x16x40xf32>
    %99 = vector.shape_cast %98 : vector<1x16x40xf32> to vector<16x40xf32>
    %cst_19 = arith.constant dense<0.000000e+00> : vector<16x8xf32>
    %100 = tpu.matmul %99, %48, %cst_19 {dimension_numbers = #tpu.dot_dimension_numbers<[1], [0], [0], [1], [0, 0, 1, 1], [], []>} : vector<16x40xf32>, vector<40x8xf32>, vector<16x8xf32> -> vector<16x8xf32>
    %101 = vector.broadcast %49 : vector<1x8xf32> to vector<16x8xf32>
    %102 = arith.addf %100, %101 : vector<16x8xf32>
    %cst_20 = arith.constant 0.000000e+00 : f32
    %103 = vector.broadcast %cst_20 : f32 to vector<16x8xf32>
    %104 = arith.maximumf %102, %103 : vector<16x8xf32>
    %105 = vector.extract_strided_slice %104 {offsets = [0, 0], sizes = [1, 8], strides = [1, 1]} : vector<16x8xf32> to vector<1x8xf32>
    %106 = vector.extract_strided_slice %104 {offsets = [1, 0], sizes = [1, 8], strides = [1, 1]} : vector<16x8xf32> to vector<1x8xf32>
    %107 = vector.extract_strided_slice %104 {offsets = [2, 0], sizes = [1, 8], strides = [1, 1]} : vector<16x8xf32> to vector<1x8xf32>
    %108 = vector.extract_strided_slice %104 {offsets = [3, 0], sizes = [1, 8], strides = [1, 1]} : vector<16x8xf32> to vector<1x8xf32>
    %109 = vector.extract_strided_slice %104 {offsets = [4, 0], sizes = [1, 8], strides = [1, 1]} : vector<16x8xf32> to vector<1x8xf32>
    %110 = vector.extract_strided_slice %104 {offsets = [5, 0], sizes = [1, 8], strides = [1, 1]} : vector<16x8xf32> to vector<1x8xf32>
    %111 = vector.extract_strided_slice %104 {offsets = [6, 0], sizes = [1, 8], strides = [1, 1]} : vector<16x8xf32> to vector<1x8xf32>
    %112 = vector.extract_strided_slice %104 {offsets = [7, 0], sizes = [1, 8], strides = [1, 1]} : vector<16x8xf32> to vector<1x8xf32>
    %113 = vector.extract_strided_slice %104 {offsets = [8, 0], sizes = [1, 8], strides = [1, 1]} : vector<16x8xf32> to vector<1x8xf32>
    %114 = vector.extract_strided_slice %104 {offsets = [9, 0], sizes = [1, 8], strides = [1, 1]} : vector<16x8xf32> to vector<1x8xf32>
    %115 = vector.extract_strided_slice %104 {offsets = [10, 0], sizes = [1, 8], strides = [1, 1]} : vector<16x8xf32> to vector<1x8xf32>
    %116 = vector.extract_strided_slice %104 {offsets = [11, 0], sizes = [1, 8], strides = [1, 1]} : vector<16x8xf32> to vector<1x8xf32>
    %117 = vector.extract_strided_slice %104 {offsets = [12, 0], sizes = [1, 8], strides = [1, 1]} : vector<16x8xf32> to vector<1x8xf32>
    %118 = vector.extract_strided_slice %104 {offsets = [13, 0], sizes = [1, 8], strides = [1, 1]} : vector<16x8xf32> to vector<1x8xf32>
    %119 = vector.extract_strided_slice %104 {offsets = [14, 0], sizes = [1, 8], strides = [1, 1]} : vector<16x8xf32> to vector<1x8xf32>
    %120 = vector.extract_strided_slice %104 {offsets = [15, 0], sizes = [1, 8], strides = [1, 1]} : vector<16x8xf32> to vector<1x8xf32>
    %121 = tpu.concatenate %105, %106, %107, %108, %109, %110, %111, %112, %113, %114, %115, %116, %117, %118, %119, %120 in 1 : vector<1x8xf32>, vector<1x8xf32>, vector<1x8xf32>, vector<1x8xf32>, vector<1x8xf32>, vector<1x8xf32>, vector<1x8xf32>, vector<1x8xf32>, vector<1x8xf32>, vector<1x8xf32>, vector<1x8xf32>, vector<1x8xf32>, vector<1x8xf32>, vector<1x8xf32>, vector<1x8xf32>, vector<1x8xf32> -> vector<1x128xf32>
    %122 = vector.extract_strided_slice %47 {offsets = [3, 0, 0], sizes = [1, 16, 40], strides = [1, 1, 1]} : vector<8x16x40xf32> to vector<1x16x40xf32>
    %123 = vector.shape_cast %122 : vector<1x16x40xf32> to vector<16x40xf32>
    %cst_21 = arith.constant dense<0.000000e+00> : vector<16x8xf32>
    %124 = tpu.matmul %123, %48, %cst_21 {dimension_numbers = #tpu.dot_dimension_numbers<[1], [0], [0], [1], [0, 0, 1, 1], [], []>} : vector<16x40xf32>, vector<40x8xf32>, vector<16x8xf32> -> vector<16x8xf32>
    %125 = vector.broadcast %49 : vector<1x8xf32> to vector<16x8xf32>
    %126 = arith.addf %124, %125 : vector<16x8xf32>
    %cst_22 = arith.constant 0.000000e+00 : f32
    %127 = vector.broadcast %cst_22 : f32 to vector<16x8xf32>
    %128 = arith.maximumf %126, %127 : vector<16x8xf32>
    %129 = vector.extract_strided_slice %128 {offsets = [0, 0], sizes = [1, 8], strides = [1, 1]} : vector<16x8xf32> to vector<1x8xf32>
    %130 = vector.extract_strided_slice %128 {offsets = [1, 0], sizes = [1, 8], strides = [1, 1]} : vector<16x8xf32> to vector<1x8xf32>
    %131 = vector.extract_strided_slice %128 {offsets = [2, 0], sizes = [1, 8], strides = [1, 1]} : vector<16x8xf32> to vector<1x8xf32>
    %132 = vector.extract_strided_slice %128 {offsets = [3, 0], sizes = [1, 8], strides = [1, 1]} : vector<16x8xf32> to vector<1x8xf32>
    %133 = vector.extract_strided_slice %128 {offsets = [4, 0], sizes = [1, 8], strides = [1, 1]} : vector<16x8xf32> to vector<1x8xf32>
    %134 = vector.extract_strided_slice %128 {offsets = [5, 0], sizes = [1, 8], strides = [1, 1]} : vector<16x8xf32> to vector<1x8xf32>
    %135 = vector.extract_strided_slice %128 {offsets = [6, 0], sizes = [1, 8], strides = [1, 1]} : vector<16x8xf32> to vector<1x8xf32>
    %136 = vector.extract_strided_slice %128 {offsets = [7, 0], sizes = [1, 8], strides = [1, 1]} : vector<16x8xf32> to vector<1x8xf32>
    %137 = vector.extract_strided_slice %128 {offsets = [8, 0], sizes = [1, 8], strides = [1, 1]} : vector<16x8xf32> to vector<1x8xf32>
    %138 = vector.extract_strided_slice %128 {offsets = [9, 0], sizes = [1, 8], strides = [1, 1]} : vector<16x8xf32> to vector<1x8xf32>
    %139 = vector.extract_strided_slice %128 {offsets = [10, 0], sizes = [1, 8], strides = [1, 1]} : vector<16x8xf32> to vector<1x8xf32>
    %140 = vector.extract_strided_slice %128 {offsets = [11, 0], sizes = [1, 8], strides = [1, 1]} : vector<16x8xf32> to vector<1x8xf32>
    %141 = vector.extract_strided_slice %128 {offsets = [12, 0], sizes = [1, 8], strides = [1, 1]} : vector<16x8xf32> to vector<1x8xf32>
    %142 = vector.extract_strided_slice %128 {offsets = [13, 0], sizes = [1, 8], strides = [1, 1]} : vector<16x8xf32> to vector<1x8xf32>
    %143 = vector.extract_strided_slice %128 {offsets = [14, 0], sizes = [1, 8], strides = [1, 1]} : vector<16x8xf32> to vector<1x8xf32>
    %144 = vector.extract_strided_slice %128 {offsets = [15, 0], sizes = [1, 8], strides = [1, 1]} : vector<16x8xf32> to vector<1x8xf32>
    %145 = tpu.concatenate %129, %130, %131, %132, %133, %134, %135, %136, %137, %138, %139, %140, %141, %142, %143, %144 in 1 : vector<1x8xf32>, vector<1x8xf32>, vector<1x8xf32>, vector<1x8xf32>, vector<1x8xf32>, vector<1x8xf32>, vector<1x8xf32>, vector<1x8xf32>, vector<1x8xf32>, vector<1x8xf32>, vector<1x8xf32>, vector<1x8xf32>, vector<1x8xf32>, vector<1x8xf32>, vector<1x8xf32>, vector<1x8xf32> -> vector<1x128xf32>
    %146 = vector.extract_strided_slice %47 {offsets = [4, 0, 0], sizes = [1, 16, 40], strides = [1, 1, 1]} : vector<8x16x40xf32> to vector<1x16x40xf32>
    %147 = vector.shape_cast %146 : vector<1x16x40xf32> to vector<16x40xf32>
    %cst_23 = arith.constant dense<0.000000e+00> : vector<16x8xf32>
    %148 = tpu.matmul %147, %48, %cst_23 {dimension_numbers = #tpu.dot_dimension_numbers<[1], [0], [0], [1], [0, 0, 1, 1], [], []>} : vector<16x40xf32>, vector<40x8xf32>, vector<16x8xf32> -> vector<16x8xf32>
    %149 = vector.broadcast %49 : vector<1x8xf32> to vector<16x8xf32>
    %150 = arith.addf %148, %149 : vector<16x8xf32>
    %cst_24 = arith.constant 0.000000e+00 : f32
    %151 = vector.broadcast %cst_24 : f32 to vector<16x8xf32>
    %152 = arith.maximumf %150, %151 : vector<16x8xf32>
    %153 = vector.extract_strided_slice %152 {offsets = [0, 0], sizes = [1, 8], strides = [1, 1]} : vector<16x8xf32> to vector<1x8xf32>
    %154 = vector.extract_strided_slice %152 {offsets = [1, 0], sizes = [1, 8], strides = [1, 1]} : vector<16x8xf32> to vector<1x8xf32>
    %155 = vector.extract_strided_slice %152 {offsets = [2, 0], sizes = [1, 8], strides = [1, 1]} : vector<16x8xf32> to vector<1x8xf32>
    %156 = vector.extract_strided_slice %152 {offsets = [3, 0], sizes = [1, 8], strides = [1, 1]} : vector<16x8xf32> to vector<1x8xf32>
    %157 = vector.extract_strided_slice %152 {offsets = [4, 0], sizes = [1, 8], strides = [1, 1]} : vector<16x8xf32> to vector<1x8xf32>
    %158 = vector.extract_strided_slice %152 {offsets = [5, 0], sizes = [1, 8], strides = [1, 1]} : vector<16x8xf32> to vector<1x8xf32>
    %159 = vector.extract_strided_slice %152 {offsets = [6, 0], sizes = [1, 8], strides = [1, 1]} : vector<16x8xf32> to vector<1x8xf32>
    %160 = vector.extract_strided_slice %152 {offsets = [7, 0], sizes = [1, 8], strides = [1, 1]} : vector<16x8xf32> to vector<1x8xf32>
    %161 = vector.extract_strided_slice %152 {offsets = [8, 0], sizes = [1, 8], strides = [1, 1]} : vector<16x8xf32> to vector<1x8xf32>
    %162 = vector.extract_strided_slice %152 {offsets = [9, 0], sizes = [1, 8], strides = [1, 1]} : vector<16x8xf32> to vector<1x8xf32>
    %163 = vector.extract_strided_slice %152 {offsets = [10, 0], sizes = [1, 8], strides = [1, 1]} : vector<16x8xf32> to vector<1x8xf32>
    %164 = vector.extract_strided_slice %152 {offsets = [11, 0], sizes = [1, 8], strides = [1, 1]} : vector<16x8xf32> to vector<1x8xf32>
    %165 = vector.extract_strided_slice %152 {offsets = [12, 0], sizes = [1, 8], strides = [1, 1]} : vector<16x8xf32> to vector<1x8xf32>
    %166 = vector.extract_strided_slice %152 {offsets = [13, 0], sizes = [1, 8], strides = [1, 1]} : vector<16x8xf32> to vector<1x8xf32>
    %167 = vector.extract_strided_slice %152 {offsets = [14, 0], sizes = [1, 8], strides = [1, 1]} : vector<16x8xf32> to vector<1x8xf32>
    %168 = vector.extract_strided_slice %152 {offsets = [15, 0], sizes = [1, 8], strides = [1, 1]} : vector<16x8xf32> to vector<1x8xf32>
    %169 = tpu.concatenate %153, %154, %155, %156, %157, %158, %159, %160, %161, %162, %163, %164, %165, %166, %167, %168 in 1 : vector<1x8xf32>, vector<1x8xf32>, vector<1x8xf32>, vector<1x8xf32>, vector<1x8xf32>, vector<1x8xf32>, vector<1x8xf32>, vector<1x8xf32>, vector<1x8xf32>, vector<1x8xf32>, vector<1x8xf32>, vector<1x8xf32>, vector<1x8xf32>, vector<1x8xf32>, vector<1x8xf32>, vector<1x8xf32> -> vector<1x128xf32>
    %170 = vector.extract_strided_slice %47 {offsets = [5, 0, 0], sizes = [1, 16, 40], strides = [1, 1, 1]} : vector<8x16x40xf32> to vector<1x16x40xf32>
    %171 = vector.shape_cast %170 : vector<1x16x40xf32> to vector<16x40xf32>
    %cst_25 = arith.constant dense<0.000000e+00> : vector<16x8xf32>
    %172 = tpu.matmul %171, %48, %cst_25 {dimension_numbers = #tpu.dot_dimension_numbers<[1], [0], [0], [1], [0, 0, 1, 1], [], []>} : vector<16x40xf32>, vector<40x8xf32>, vector<16x8xf32> -> vector<16x8xf32>
    %173 = vector.broadcast %49 : vector<1x8xf32> to vector<16x8xf32>
    %174 = arith.addf %172, %173 : vector<16x8xf32>
    %cst_26 = arith.constant 0.000000e+00 : f32
    %175 = vector.broadcast %cst_26 : f32 to vector<16x8xf32>
    %176 = arith.maximumf %174, %175 : vector<16x8xf32>
    %177 = vector.extract_strided_slice %176 {offsets = [0, 0], sizes = [1, 8], strides = [1, 1]} : vector<16x8xf32> to vector<1x8xf32>
    %178 = vector.extract_strided_slice %176 {offsets = [1, 0], sizes = [1, 8], strides = [1, 1]} : vector<16x8xf32> to vector<1x8xf32>
    %179 = vector.extract_strided_slice %176 {offsets = [2, 0], sizes = [1, 8], strides = [1, 1]} : vector<16x8xf32> to vector<1x8xf32>
    %180 = vector.extract_strided_slice %176 {offsets = [3, 0], sizes = [1, 8], strides = [1, 1]} : vector<16x8xf32> to vector<1x8xf32>
    %181 = vector.extract_strided_slice %176 {offsets = [4, 0], sizes = [1, 8], strides = [1, 1]} : vector<16x8xf32> to vector<1x8xf32>
    %182 = vector.extract_strided_slice %176 {offsets = [5, 0], sizes = [1, 8], strides = [1, 1]} : vector<16x8xf32> to vector<1x8xf32>
    %183 = vector.extract_strided_slice %176 {offsets = [6, 0], sizes = [1, 8], strides = [1, 1]} : vector<16x8xf32> to vector<1x8xf32>
    %184 = vector.extract_strided_slice %176 {offsets = [7, 0], sizes = [1, 8], strides = [1, 1]} : vector<16x8xf32> to vector<1x8xf32>
    %185 = vector.extract_strided_slice %176 {offsets = [8, 0], sizes = [1, 8], strides = [1, 1]} : vector<16x8xf32> to vector<1x8xf32>
    %186 = vector.extract_strided_slice %176 {offsets = [9, 0], sizes = [1, 8], strides = [1, 1]} : vector<16x8xf32> to vector<1x8xf32>
    %187 = vector.extract_strided_slice %176 {offsets = [10, 0], sizes = [1, 8], strides = [1, 1]} : vector<16x8xf32> to vector<1x8xf32>
    %188 = vector.extract_strided_slice %176 {offsets = [11, 0], sizes = [1, 8], strides = [1, 1]} : vector<16x8xf32> to vector<1x8xf32>
    %189 = vector.extract_strided_slice %176 {offsets = [12, 0], sizes = [1, 8], strides = [1, 1]} : vector<16x8xf32> to vector<1x8xf32>
    %190 = vector.extract_strided_slice %176 {offsets = [13, 0], sizes = [1, 8], strides = [1, 1]} : vector<16x8xf32> to vector<1x8xf32>
    %191 = vector.extract_strided_slice %176 {offsets = [14, 0], sizes = [1, 8], strides = [1, 1]} : vector<16x8xf32> to vector<1x8xf32>
    %192 = vector.extract_strided_slice %176 {offsets = [15, 0], sizes = [1, 8], strides = [1, 1]} : vector<16x8xf32> to vector<1x8xf32>
    %193 = tpu.concatenate %177, %178, %179, %180, %181, %182, %183, %184, %185, %186, %187, %188, %189, %190, %191, %192 in 1 : vector<1x8xf32>, vector<1x8xf32>, vector<1x8xf32>, vector<1x8xf32>, vector<1x8xf32>, vector<1x8xf32>, vector<1x8xf32>, vector<1x8xf32>, vector<1x8xf32>, vector<1x8xf32>, vector<1x8xf32>, vector<1x8xf32>, vector<1x8xf32>, vector<1x8xf32>, vector<1x8xf32>, vector<1x8xf32> -> vector<1x128xf32>
    %194 = vector.extract_strided_slice %47 {offsets = [6, 0, 0], sizes = [1, 16, 40], strides = [1, 1, 1]} : vector<8x16x40xf32> to vector<1x16x40xf32>
    %195 = vector.shape_cast %194 : vector<1x16x40xf32> to vector<16x40xf32>
    %cst_27 = arith.constant dense<0.000000e+00> : vector<16x8xf32>
    %196 = tpu.matmul %195, %48, %cst_27 {dimension_numbers = #tpu.dot_dimension_numbers<[1], [0], [0], [1], [0, 0, 1, 1], [], []>} : vector<16x40xf32>, vector<40x8xf32>, vector<16x8xf32> -> vector<16x8xf32>
    %197 = vector.broadcast %49 : vector<1x8xf32> to vector<16x8xf32>
    %198 = arith.addf %196, %197 : vector<16x8xf32>
    %cst_28 = arith.constant 0.000000e+00 : f32
    %199 = vector.broadcast %cst_28 : f32 to vector<16x8xf32>
    %200 = arith.maximumf %198, %199 : vector<16x8xf32>
    %201 = vector.extract_strided_slice %200 {offsets = [0, 0], sizes = [1, 8], strides = [1, 1]} : vector<16x8xf32> to vector<1x8xf32>
    %202 = vector.extract_strided_slice %200 {offsets = [1, 0], sizes = [1, 8], strides = [1, 1]} : vector<16x8xf32> to vector<1x8xf32>
    %203 = vector.extract_strided_slice %200 {offsets = [2, 0], sizes = [1, 8], strides = [1, 1]} : vector<16x8xf32> to vector<1x8xf32>
    %204 = vector.extract_strided_slice %200 {offsets = [3, 0], sizes = [1, 8], strides = [1, 1]} : vector<16x8xf32> to vector<1x8xf32>
    %205 = vector.extract_strided_slice %200 {offsets = [4, 0], sizes = [1, 8], strides = [1, 1]} : vector<16x8xf32> to vector<1x8xf32>
    %206 = vector.extract_strided_slice %200 {offsets = [5, 0], sizes = [1, 8], strides = [1, 1]} : vector<16x8xf32> to vector<1x8xf32>
    %207 = vector.extract_strided_slice %200 {offsets = [6, 0], sizes = [1, 8], strides = [1, 1]} : vector<16x8xf32> to vector<1x8xf32>
    %208 = vector.extract_strided_slice %200 {offsets = [7, 0], sizes = [1, 8], strides = [1, 1]} : vector<16x8xf32> to vector<1x8xf32>
    %209 = vector.extract_strided_slice %200 {offsets = [8, 0], sizes = [1, 8], strides = [1, 1]} : vector<16x8xf32> to vector<1x8xf32>
    %210 = vector.extract_strided_slice %200 {offsets = [9, 0], sizes = [1, 8], strides = [1, 1]} : vector<16x8xf32> to vector<1x8xf32>
    %211 = vector.extract_strided_slice %200 {offsets = [10, 0], sizes = [1, 8], strides = [1, 1]} : vector<16x8xf32> to vector<1x8xf32>
    %212 = vector.extract_strided_slice %200 {offsets = [11, 0], sizes = [1, 8], strides = [1, 1]} : vector<16x8xf32> to vector<1x8xf32>
    %213 = vector.extract_strided_slice %200 {offsets = [12, 0], sizes = [1, 8], strides = [1, 1]} : vector<16x8xf32> to vector<1x8xf32>
    %214 = vector.extract_strided_slice %200 {offsets = [13, 0], sizes = [1, 8], strides = [1, 1]} : vector<16x8xf32> to vector<1x8xf32>
    %215 = vector.extract_strided_slice %200 {offsets = [14, 0], sizes = [1, 8], strides = [1, 1]} : vector<16x8xf32> to vector<1x8xf32>
    %216 = vector.extract_strided_slice %200 {offsets = [15, 0], sizes = [1, 8], strides = [1, 1]} : vector<16x8xf32> to vector<1x8xf32>
    %217 = tpu.concatenate %201, %202, %203, %204, %205, %206, %207, %208, %209, %210, %211, %212, %213, %214, %215, %216 in 1 : vector<1x8xf32>, vector<1x8xf32>, vector<1x8xf32>, vector<1x8xf32>, vector<1x8xf32>, vector<1x8xf32>, vector<1x8xf32>, vector<1x8xf32>, vector<1x8xf32>, vector<1x8xf32>, vector<1x8xf32>, vector<1x8xf32>, vector<1x8xf32>, vector<1x8xf32>, vector<1x8xf32>, vector<1x8xf32> -> vector<1x128xf32>
    %218 = vector.extract_strided_slice %47 {offsets = [7, 0, 0], sizes = [1, 16, 40], strides = [1, 1, 1]} : vector<8x16x40xf32> to vector<1x16x40xf32>
    %219 = vector.shape_cast %218 : vector<1x16x40xf32> to vector<16x40xf32>
    %cst_29 = arith.constant dense<0.000000e+00> : vector<16x8xf32>
    %220 = tpu.matmul %219, %48, %cst_29 {dimension_numbers = #tpu.dot_dimension_numbers<[1], [0], [0], [1], [0, 0, 1, 1], [], []>} : vector<16x40xf32>, vector<40x8xf32>, vector<16x8xf32> -> vector<16x8xf32>
    %221 = vector.broadcast %49 : vector<1x8xf32> to vector<16x8xf32>
    %222 = arith.addf %220, %221 : vector<16x8xf32>
    %cst_30 = arith.constant 0.000000e+00 : f32
    %223 = vector.broadcast %cst_30 : f32 to vector<16x8xf32>
    %224 = arith.maximumf %222, %223 : vector<16x8xf32>
    %225 = vector.extract_strided_slice %224 {offsets = [0, 0], sizes = [1, 8], strides = [1, 1]} : vector<16x8xf32> to vector<1x8xf32>
    %226 = vector.extract_strided_slice %224 {offsets = [1, 0], sizes = [1, 8], strides = [1, 1]} : vector<16x8xf32> to vector<1x8xf32>
    %227 = vector.extract_strided_slice %224 {offsets = [2, 0], sizes = [1, 8], strides = [1, 1]} : vector<16x8xf32> to vector<1x8xf32>
    %228 = vector.extract_strided_slice %224 {offsets = [3, 0], sizes = [1, 8], strides = [1, 1]} : vector<16x8xf32> to vector<1x8xf32>
    %229 = vector.extract_strided_slice %224 {offsets = [4, 0], sizes = [1, 8], strides = [1, 1]} : vector<16x8xf32> to vector<1x8xf32>
    %230 = vector.extract_strided_slice %224 {offsets = [5, 0], sizes = [1, 8], strides = [1, 1]} : vector<16x8xf32> to vector<1x8xf32>
    %231 = vector.extract_strided_slice %224 {offsets = [6, 0], sizes = [1, 8], strides = [1, 1]} : vector<16x8xf32> to vector<1x8xf32>
    %232 = vector.extract_strided_slice %224 {offsets = [7, 0], sizes = [1, 8], strides = [1, 1]} : vector<16x8xf32> to vector<1x8xf32>
    %233 = vector.extract_strided_slice %224 {offsets = [8, 0], sizes = [1, 8], strides = [1, 1]} : vector<16x8xf32> to vector<1x8xf32>
    %234 = vector.extract_strided_slice %224 {offsets = [9, 0], sizes = [1, 8], strides = [1, 1]} : vector<16x8xf32> to vector<1x8xf32>
    %235 = vector.extract_strided_slice %224 {offsets = [10, 0], sizes = [1, 8], strides = [1, 1]} : vector<16x8xf32> to vector<1x8xf32>
    %236 = vector.extract_strided_slice %224 {offsets = [11, 0], sizes = [1, 8], strides = [1, 1]} : vector<16x8xf32> to vector<1x8xf32>
    %237 = vector.extract_strided_slice %224 {offsets = [12, 0], sizes = [1, 8], strides = [1, 1]} : vector<16x8xf32> to vector<1x8xf32>
    %238 = vector.extract_strided_slice %224 {offsets = [13, 0], sizes = [1, 8], strides = [1, 1]} : vector<16x8xf32> to vector<1x8xf32>
    %239 = vector.extract_strided_slice %224 {offsets = [14, 0], sizes = [1, 8], strides = [1, 1]} : vector<16x8xf32> to vector<1x8xf32>
    %240 = vector.extract_strided_slice %224 {offsets = [15, 0], sizes = [1, 8], strides = [1, 1]} : vector<16x8xf32> to vector<1x8xf32>
    %241 = tpu.concatenate %225, %226, %227, %228, %229, %230, %231, %232, %233, %234, %235, %236, %237, %238, %239, %240 in 1 : vector<1x8xf32>, vector<1x8xf32>, vector<1x8xf32>, vector<1x8xf32>, vector<1x8xf32>, vector<1x8xf32>, vector<1x8xf32>, vector<1x8xf32>, vector<1x8xf32>, vector<1x8xf32>, vector<1x8xf32>, vector<1x8xf32>, vector<1x8xf32>, vector<1x8xf32>, vector<1x8xf32>, vector<1x8xf32> -> vector<1x128xf32>
    %242 = tpu.concatenate %73, %97, %121, %145, %169, %193, %217, %241 in 0 : vector<1x128xf32>, vector<1x128xf32>, vector<1x128xf32>, vector<1x128xf32>, vector<1x128xf32>, vector<1x128xf32>, vector<1x128xf32>, vector<1x128xf32> -> vector<8x128xf32>
    %c0_31 = arith.constant 0 : index
    %c0_32 = arith.constant 0 : index
    %243 = vector.load %arg7[%c0_31, %c0_32] : memref<128x1024xf32, #tpu.memory_space<vmem>>, vector<128x1024xf32>
    %cst_33 = arith.constant dense<0.000000e+00> : vector<8x1024xf32>
    %244 = tpu.matmul %242, %243, %cst_33 {dimension_numbers = #tpu.dot_dimension_numbers<[1], [0], [0], [1], [0, 0, 1, 1], [], []>} : vector<8x128xf32>, vector<128x1024xf32>, vector<8x1024xf32> -> vector<8x1024xf32>
    %c0_34 = arith.constant 0 : index
    %c0_35 = arith.constant 0 : index
    %245 = vector.load %arg8[%c0_34, %c0_35] : memref<1x1024xf32, #tpu.memory_space<vmem>>, vector<1x1024xf32>
    %246 = vector.broadcast %245 : vector<1x1024xf32> to vector<8x1024xf32>
    %247 = arith.addf %244, %246 : vector<8x1024xf32>
    %cst_36 = arith.constant 0.000000e+00 : f32
    %248 = vector.broadcast %cst_36 : f32 to vector<8x1024xf32>
    %249 = arith.maximumf %247, %248 : vector<8x1024xf32>
    %c0_37 = arith.constant 0 : index
    %c0_38 = arith.constant 0 : index
    %250 = vector.load %arg9[%c0_37, %c0_38] : memref<1024x128xf32, #tpu.memory_space<vmem>>, vector<1024x128xf32>
    %cst_39 = arith.constant dense<0.000000e+00> : vector<8x128xf32>
    %251 = tpu.matmul %249, %250, %cst_39 {dimension_numbers = #tpu.dot_dimension_numbers<[1], [0], [0], [1], [0, 0, 1, 1], [], []>} : vector<8x1024xf32>, vector<1024x128xf32>, vector<8x128xf32> -> vector<8x128xf32>
    %c0_40 = arith.constant 0 : index
    %c0_41 = arith.constant 0 : index
    %252 = vector.load %arg10[%c0_40, %c0_41] : memref<1x128xf32, #tpu.memory_space<vmem>>, vector<1x128xf32>
    %253 = vector.broadcast %252 : vector<1x128xf32> to vector<8x128xf32>
    %254 = arith.addf %251, %253 : vector<8x128xf32>
    %cst_42 = arith.constant 0.000000e+00 : f32
    %255 = vector.broadcast %cst_42 : f32 to vector<8x128xf32>
    %256 = arith.maximumf %254, %255 : vector<8x128xf32>
    %c0_43 = arith.constant 0 : index
    %c0_44 = arith.constant 0 : index
    %257 = vector.load %arg11[%c0_43, %c0_44] : memref<128x128xf32, #tpu.memory_space<vmem>>, vector<128x128xf32>
    %cst_45 = arith.constant dense<0.000000e+00> : vector<8x128xf32>
    %258 = tpu.matmul %256, %257, %cst_45 {dimension_numbers = #tpu.dot_dimension_numbers<[1], [0], [0], [1], [0, 0, 1, 1], [], []>} : vector<8x128xf32>, vector<128x128xf32>, vector<8x128xf32> -> vector<8x128xf32>
    %c0_46 = arith.constant 0 : index
    %c0_47 = arith.constant 0 : index
    %259 = vector.load %arg12[%c0_46, %c0_47] : memref<1x128xf32, #tpu.memory_space<vmem>>, vector<1x128xf32>
    %260 = vector.broadcast %259 : vector<1x128xf32> to vector<8x128xf32>
    %261 = arith.addf %258, %260 : vector<8x128xf32>
    %cst_48 = arith.constant 0.000000e+00 : f32
    %cst_49 = arith.constant 1.100000e+02 : f32
    %262 = vector.broadcast %cst_48 : f32 to vector<8x128xf32>
    %263 = arith.maximumf %262, %261 : vector<8x128xf32>
    %264 = vector.broadcast %cst_49 : f32 to vector<8x128xf32>
    %265 = arith.minimumf %264, %263 : vector<8x128xf32>
    %c0_50 = arith.constant 0 : index
    %c0_51 = arith.constant 0 : index
    %266 = vector.load %arg13[%c0_50, %c0_51] : memref<8x128xf32, #tpu.memory_space<vmem>>, vector<8x128xf32>
    tpu.vector_store %arg13[%c0_50, %c0_51], %265 {strides = array<i32>} : memref<8x128xf32, #tpu.memory_space<vmem>>, vector<8x128xf32>,
    return
  }
  func.func @transform_0(%arg0: i32) -> (i32, i32, i32) {
    %c0_i32 = arith.constant 0 : i32
    %c0_i32_0 = arith.constant 0 : i32
    %c0_i32_1 = arith.constant 0 : i32
    return %arg0, %c0_i32, %c0_i32_0 : i32, i32, i32
  }
  func.func @transform_1(%arg0: i32) -> (i32, i32, i32) {
    %c0_i32 = arith.constant 0 : i32
    %c0_i32_0 = arith.constant 0 : i32
    %c0_i32_1 = arith.constant 0 : i32
    return %arg0, %c0_i32, %c0_i32_0 : i32, i32, i32
  }
  func.func @transform_2(%arg0: i32) -> (i32, i32) {
    %c0_i32 = arith.constant 0 : i32
    %c0_i32_0 = arith.constant 0 : i32
    %c0_i32_1 = arith.constant 0 : i32
    return %c0_i32, %c0_i32_0 : i32, i32
  }
  func.func @transform_3(%arg0: i32) -> (i32, i32) {
    %c0_i32 = arith.constant 0 : i32
    %c0_i32_0 = arith.constant 0 : i32
    %c0_i32_1 = arith.constant 0 : i32
    return %c0_i32, %c0_i32_0 : i32, i32
  }
  func.func @transform_4(%arg0: i32) -> (i32, i32) {
    %c0_i32 = arith.constant 0 : i32
    %c0_i32_0 = arith.constant 0 : i32
    %c0_i32_1 = arith.constant 0 : i32
    return %c0_i32, %c0_i32_0 : i32, i32
  }
  func.func @transform_5(%arg0: i32) -> (i32, i32) {
    %c0_i32 = arith.constant 0 : i32
    %c0_i32_0 = arith.constant 0 : i32
    %c0_i32_1 = arith.constant 0 : i32
    return %c0_i32, %c0_i32_0 : i32, i32
  }
  func.func @transform_6(%arg0: i32) -> (i32, i32) {
    %c0_i32 = arith.constant 0 : i32
    %c0_i32_0 = arith.constant 0 : i32
    %c0_i32_1 = arith.constant 0 : i32
    return %c0_i32, %c0_i32_0 : i32, i32
  }
  func.func @transform_7(%arg0: i32) -> (i32, i32) {
    %c0_i32 = arith.constant 0 : i32
    %c0_i32_0 = arith.constant 0 : i32
    %c0_i32_1 = arith.constant 0 : i32
    return %c0_i32, %c0_i32_0 : i32, i32
  }
  func.func @transform_8(%arg0: i32) -> (i32, i32) {
    %c0_i32 = arith.constant 0 : i32
    %c0_i32_0 = arith.constant 0 : i32
    %c0_i32_1 = arith.constant 0 : i32
    return %c0_i32, %c0_i32_0 : i32, i32
  }
  func.func @transform_9(%arg0: i32) -> (i32, i32) {
    %c0_i32 = arith.constant 0 : i32
    %c0_i32_0 = arith.constant 0 : i32
    %c0_i32_1 = arith.constant 0 : i32
    return %c0_i32, %c0_i32_0 : i32, i32
  }
  func.func @transform_10(%arg0: i32) -> (i32, i32) {
    %c0_i32 = arith.constant 0 : i32
    %c0_i32_0 = arith.constant 0 : i32
    %c0_i32_1 = arith.constant 0 : i32
    return %c0_i32, %c0_i32_0 : i32, i32
  }
  func.func @transform_11(%arg0: i32) -> (i32, i32) {
    %c0_i32 = arith.constant 0 : i32
    %c0_i32_0 = arith.constant 0 : i32
    %c0_i32_1 = arith.constant 0 : i32
    return %c0_i32, %c0_i32_0 : i32, i32
  }
  func.func @transform_12(%arg0: i32) -> (i32, i32) {
    %c0_i32 = arith.constant 0 : i32
    %c0_i32_0 = arith.constant 0 : i32
    return %arg0, %c0_i32 : i32, i32
  }
}

</mosaic_0001>

<llo_original>
// kernel: graph_head_forward.1
$region0: #{graph_head_forward.1}
  #allocation0 [shape = 'u32[]', space=smem, size = 0x4, offset = 0x4, fixed_abs, tag = 'smem constant byte address 0x4 - core index']
  #allocation1 [shape = 'u32[72,128]{1,0:T(1,128)}', space=vmem, size = 0x9000, scoped, tag = 'internal scratch']
  %s0 = inlined_call_operand.vmem [shape: f32[8,80,16], index: 0, kind: input, shape index: {}]
  %s1 = inlined_call_operand.vmem [shape: f32[8,16,1], index: 1, kind: input, shape index: {}]
  %s2 = inlined_call_operand.vmem [shape: f32[5,8], index: 2, kind: input, shape index: {}]
  %s3 = inlined_call_operand.vmem [shape: f32[1,8], index: 3, kind: input, shape index: {}]
  %s4 = inlined_call_operand.vmem [shape: f32[40,8], index: 4, kind: input, shape index: {}]
  %s5 = inlined_call_operand.vmem [shape: f32[1,8], index: 5, kind: input, shape index: {}]
  %s6 = inlined_call_operand.vmem [shape: f32[128,1024], index: 6, kind: input, shape index: {}]
  %s7 = inlined_call_operand.vmem [shape: f32[1,1024], index: 7, kind: input, shape index: {}]
  %s8 = inlined_call_operand.vmem [shape: f32[1024,128], index: 8, kind: input, shape index: {}]
  %s9 = inlined_call_operand.vmem [shape: f32[1,128], index: 9, kind: input, shape index: {}]
  %s10 = inlined_call_operand.vmem [shape: f32[128,128], index: 10, kind: input, shape index: {}]
  %s11 = inlined_call_operand.vmem [shape: f32[1,128], index: 11, kind: input, shape index: {}]
  %s12 = inlined_call_operand.vmem [shape: f32[8,128], index: 12, kind: output, shape index: {}]
  %s13 = sld [smem:[#allocation0]]
  $region58: #{graph_head_forward.1} parent=0
    _
  %s15 = ssub.s32 1, %s13
  %s16 = scalar_select 0, %s15, %s13
  // Predicated region
  $region2: #{graph_head_forward.1} parent=0 // pred_check
    _
  $region3: #{graph_head_forward.1} parent=0 // pred_check_branch
    %18 = sbr.rel (0) target = $region5
  $region4: #{graph_head_forward.1} parent=0 // pred_region
    _
  $region5: #{graph_head_forward.1} parent=0 // pred_fallthru
    _
  // Predicated region
  $region6: #{graph_head_forward.1} parent=0 // pred_check
    _
  $region7: #{graph_head_forward.1} parent=0 // pred_check_branch
    %20 = sbr.rel (0) target = $region9
  $region8: #{graph_head_forward.1} parent=0 // pred_region
    _
  $region9: #{graph_head_forward.1} parent=0 // pred_fallthru
    _
  // Predicated region
  $region10: #{graph_head_forward.1} parent=0 // pred_check
    _
  $region11: #{graph_head_forward.1} parent=0 // pred_check_branch
    %22 = sbr.rel (0) target = $region13
  $region12: #{graph_head_forward.1} parent=0 // pred_region
    _
  $region13: #{graph_head_forward.1} parent=0 // pred_fallthru
    _
  // Predicated region
  $region14: #{graph_head_forward.1} parent=0 // pred_check
    _
  $region15: #{graph_head_forward.1} parent=0 // pred_check_branch
    %24 = sbr.rel (0) target = $region17
  $region16: #{graph_head_forward.1} parent=0 // pred_region
    _
  $region17: #{graph_head_forward.1} parent=0 // pred_fallthru
    _
  // Predicated region
  $region18: #{graph_head_forward.1} parent=0 // pred_check
    _
  $region19: #{graph_head_forward.1} parent=0 // pred_check_branch
    %26 = sbr.rel (0) target = $region21
  $region20: #{graph_head_forward.1} parent=0 // pred_region
    _
  $region21: #{graph_head_forward.1} parent=0 // pred_fallthru
    _
  // Predicated region
  $region22: #{graph_head_forward.1} parent=0 // pred_check
    _
  $region23: #{graph_head_forward.1} parent=0 // pred_check_branch
    %28 = sbr.rel (0) target = $region25
  $region24: #{graph_head_forward.1} parent=0 // pred_region
    _
  $region25: #{graph_head_forward.1} parent=0 // pred_fallthru
    _
  // Predicated region
  $region26: #{graph_head_forward.1} parent=0 // pred_check
    _
  $region27: #{graph_head_forward.1} parent=0 // pred_check_branch
    %30 = sbr.rel (0) target = $region29
  $region28: #{graph_head_forward.1} parent=0 // pred_region
    _
  $region29: #{graph_head_forward.1} parent=0 // pred_fallthru
    _
  // Predicated region
  $region30: #{graph_head_forward.1} parent=0 // pred_check
    _
  $region31: #{graph_head_forward.1} parent=0 // pred_check_branch
    %32 = sbr.rel (0) target = $region33
  $region32: #{graph_head_forward.1} parent=0 // pred_region
    _
  $region33: #{graph_head_forward.1} parent=0 // pred_fallthru
    _
  // Predicated region
  $region34: #{graph_head_forward.1} parent=0 // pred_check
    _
  $region35: #{graph_head_forward.1} parent=0 // pred_check_branch
    %34 = sbr.rel (0) target = $region37
  $region36: #{graph_head_forward.1} parent=0 // pred_region
    _
  $region37: #{graph_head_forward.1} parent=0 // pred_fallthru
    _
  // Predicated region
  $region38: #{graph_head_forward.1} parent=0 // pred_check
    _
  $region39: #{graph_head_forward.1} parent=0 // pred_check_branch
    %36 = sbr.rel (0) target = $region41
  $region40: #{graph_head_forward.1} parent=0 // pred_region
    _
  $region41: #{graph_head_forward.1} parent=0 // pred_fallthru
    _
  // Predicated region
  $region42: #{graph_head_forward.1} parent=0 // pred_check
    _
  $region43: #{graph_head_forward.1} parent=0 // pred_check_branch
    %38 = sbr.rel (0) target = $region45
  $region44: #{graph_head_forward.1} parent=0 // pred_region
    _
  $region45: #{graph_head_forward.1} parent=0 // pred_fallthru
    _
  // Predicated region
  $region46: #{graph_head_forward.1} parent=0 // pred_check
    _
  $region47: #{graph_head_forward.1} parent=0 // pred_check_branch
    %40 = sbr.rel (0) target = $region49
  $region48: #{graph_head_forward.1} parent=0 // pred_region
    _
  $region49: #{graph_head_forward.1} parent=0 // pred_fallthru
    _
  %v41 = vld [vmem:[%s0] sm:$0xff]
  %v42 = vld [vmem:[%s0 + $0x8] sm:$0xff]
  %v43 = vld [vmem:[%s0 + $0x10] sm:$0xff]
  %v44 = vld [vmem:[%s0 + $0x18] sm:$0xff]
  %v45 = vld [vmem:[%s0 + $0x20] sm:$0xff]
  %v46 = vld [vmem:[%s0 + $0x28] sm:$0xff]
  %v47 = vld [vmem:[%s0 + $0x30] sm:$0xff]
  %v48 = vld [vmem:[%s0 + $0x38] sm:$0xff]
  %v49 = vld [vmem:[%s0 + $0x40] sm:$0xff]
  %v50 = vld [vmem:[%s0 + $0x48] sm:$0xff]
  %v51 = vld [vmem:[%s0 + $0x50] sm:$0xff]
  %v52 = vld [vmem:[%s0 + $0x58] sm:$0xff]
  %v53 = vld [vmem:[%s0 + $0x60] sm:$0xff]
  %v54 = vld [vmem:[%s0 + $0x68] sm:$0xff]
  %v55 = vld [vmem:[%s0 + $0x70] sm:$0xff]
  %v56 = vld [vmem:[%s0 + $0x78] sm:$0xff]
  %v57 = vld [vmem:[%s0 + $0x80] sm:$0xff]
  %v58 = vld [vmem:[%s0 + $0x88] sm:$0xff]
  %v59 = vld [vmem:[%s0 + $0x90] sm:$0xff]
  %v60 = vld [vmem:[%s0 + $0x98] sm:$0xff]
  %v61 = vld [vmem:[%s0 + $0xa0] sm:$0xff]
  %v62 = vld [vmem:[%s0 + $0xa8] sm:$0xff]
  %v63 = vld [vmem:[%s0 + $0xb0] sm:$0xff]
  %v64 = vld [vmem:[%s0 + $0xb8] sm:$0xff]
  %v65 = vld [vmem:[%s0 + $0xc0] sm:$0xff]
  %v66 = vld [vmem:[%s0 + $0xc8] sm:$0xff]
  %v67 = vld [vmem:[%s0 + $0xd0] sm:$0xff]
  %v68 = vld [vmem:[%s0 + $0xd8] sm:$0xff]
  %v69 = vld [vmem:[%s0 + $0xe0] sm:$0xff]
  %v70 = vld [vmem:[%s0 + $0xe8] sm:$0xff]
  %v71 = vld [vmem:[%s0 + $0xf0] sm:$0xff]
  %v72 = vld [vmem:[%s0 + $0xf8] sm:$0xff]
  %v73 = vld [vmem:[%s0 + $0x100] sm:$0xff]
  %v74 = vld [vmem:[%s0 + $0x108] sm:$0xff]
  %v75 = vld [vmem:[%s0 + $0x110] sm:$0xff]
  %v76 = vld [vmem:[%s0 + $0x118] sm:$0xff]
  %v77 = vld [vmem:[%s0 + $0x120] sm:$0xff]
  %v78 = vld [vmem:[%s0 + $0x128] sm:$0xff]
  %v79 = vld [vmem:[%s0 + $0x130] sm:$0xff]
  %v80 = vld [vmem:[%s0 + $0x138] sm:$0xff]
  %v81 = vld [vmem:[%s0 + $0x140] sm:$0xff]
  %v82 = vld [vmem:[%s0 + $0x148] sm:$0xff]
  %v83 = vld [vmem:[%s0 + $0x150] sm:$0xff]
  %v84 = vld [vmem:[%s0 + $0x158] sm:$0xff]
  %v85 = vld [vmem:[%s0 + $0x160] sm:$0xff]
  %v86 = vld [vmem:[%s0 + $0x168] sm:$0xff]
  %v87 = vld [vmem:[%s0 + $0x170] sm:$0xff]
  %v88 = vld [vmem:[%s0 + $0x178] sm:$0xff]
  %v89 = vld [vmem:[%s0 + $0x180] sm:$0xff]
  %v90 = vld [vmem:[%s0 + $0x188] sm:$0xff]
  %v91 = vld [vmem:[%s0 + $0x190] sm:$0xff]
  %v92 = vld [vmem:[%s0 + $0x198] sm:$0xff]
  %v93 = vld [vmem:[%s0 + $0x1a0] sm:$0xff]
  %v94 = vld [vmem:[%s0 + $0x1a8] sm:$0xff]
  %v95 = vld [vmem:[%s0 + $0x1b0] sm:$0xff]
  %v96 = vld [vmem:[%s0 + $0x1b8] sm:$0xff]
  %v97 = vld [vmem:[%s0 + $0x1c0] sm:$0xff]
  %v98 = vld [vmem:[%s0 + $0x1c8] sm:$0xff]
  %v99 = vld [vmem:[%s0 + $0x1d0] sm:$0xff]
  %v100 = vld [vmem:[%s0 + $0x1d8] sm:$0xff]
  %v101 = vld [vmem:[%s0 + $0x1e0] sm:$0xff]
  %v102 = vld [vmem:[%s0 + $0x1e8] sm:$0xff]
  %v103 = vld [vmem:[%s0 + $0x1f0] sm:$0xff]
  %v104 = vld [vmem:[%s0 + $0x1f8] sm:$0xff]
  %v105 = vld [vmem:[%s0 + $0x200] sm:$0xff]
  %v106 = vld [vmem:[%s0 + $0x208] sm:$0xff]
  %v107 = vld [vmem:[%s0 + $0x210] sm:$0xff]
  %v108 = vld [vmem:[%s0 + $0x218] sm:$0xff]
  %v109 = vld [vmem:[%s0 + $0x220] sm:$0xff]
  %v110 = vld [vmem:[%s0 + $0x228] sm:$0xff]
  %v111 = vld [vmem:[%s0 + $0x230] sm:$0xff]
  %v112 = vld [vmem:[%s0 + $0x238] sm:$0xff]
  %v113 = vld [vmem:[%s0 + $0x240] sm:$0xff]
  %v114 = vld [vmem:[%s0 + $0x248] sm:$0xff]
  %v115 = vld [vmem:[%s0 + $0x250] sm:$0xff]
  %v116 = vld [vmem:[%s0 + $0x258] sm:$0xff]
  %v117 = vld [vmem:[%s0 + $0x260] sm:$0xff]
  %v118 = vld [vmem:[%s0 + $0x268] sm:$0xff]
  %v119 = vld [vmem:[%s0 + $0x270] sm:$0xff]
  %v120 = vld [vmem:[%s0 + $0x278] sm:$0xff]
  %v121 = vld [vmem:[%s1] sm:$0xff]
  %v122 = vld [vmem:[%s1 + $0x8] sm:$0xff]
  %v123 = vld [vmem:[%s1 + $0x10] sm:$0xff]
  %v124 = vld [vmem:[%s1 + $0x18] sm:$0xff]
  %v125 = vld [vmem:[%s1 + $0x20] sm:$0xff]
  %v126 = vld [vmem:[%s1 + $0x28] sm:$0xff]
  %v127 = vld [vmem:[%s1 + $0x30] sm:$0xff]
  %v128 = vld [vmem:[%s1 + $0x38] sm:$0xff]
  %v129 = vld [vmem:[%s1 + $0x40] sm:$0xff]
  %v130 = vld [vmem:[%s1 + $0x48] sm:$0xff]
  %v131 = vld [vmem:[%s1 + $0x50] sm:$0xff]
  %v132 = vld [vmem:[%s1 + $0x58] sm:$0xff]
  %v133 = vld [vmem:[%s1 + $0x60] sm:$0xff]
  %v134 = vld [vmem:[%s1 + $0x68] sm:$0xff]
  %v135 = vld [vmem:[%s1 + $0x70] sm:$0xff]
  %v136 = vld [vmem:[%s1 + $0x78] sm:$0xff]
  %138 = vset.pattern.permute.xlu0 0
  %139 = vperm.xlu0 %138, %v121
  %v140 = vpop.permute.xlu0 %139
  %143 = vset.pattern.permute.xlu0 0
  %144 = vperm.xlu0 %143, %v122
  %v145 = vpop.permute.xlu0 %144
  %148 = vset.pattern.permute.xlu0 0
  %149 = vperm.xlu0 %148, %v123
  %v150 = vpop.permute.xlu0 %149
  %153 = vset.pattern.permute.xlu0 0
  %154 = vperm.xlu0 %153, %v124
  %v155 = vpop.permute.xlu0 %154
  %158 = vset.pattern.permute.xlu0 0
  %159 = vperm.xlu0 %158, %v125
  %v160 = vpop.permute.xlu0 %159
  %163 = vset.pattern.permute.xlu0 0
  %164 = vperm.xlu0 %163, %v126
  %v165 = vpop.permute.xlu0 %164
  %168 = vset.pattern.permute.xlu0 0
  %169 = vperm.xlu0 %168, %v127
  %v170 = vpop.permute.xlu0 %169
  %173 = vset.pattern.permute.xlu0 0
  %174 = vperm.xlu0 %173, %v128
  %v175 = vpop.permute.xlu0 %174
  %178 = vset.pattern.permute.xlu0 0
  %179 = vperm.xlu0 %178, %v129
  %v180 = vpop.permute.xlu0 %179
  %183 = vset.pattern.permute.xlu0 0
  %184 = vperm.xlu0 %183, %v130
  %v185 = vpop.permute.xlu0 %184
  %188 = vset.pattern.permute.xlu0 0
  %189 = vperm.xlu0 %188, %v131
  %v190 = vpop.permute.xlu0 %189
  %193 = vset.pattern.permute.xlu0 0
  %194 = vperm.xlu0 %193, %v132
  %v195 = vpop.permute.xlu0 %194
  %198 = vset.pattern.permute.xlu0 0
  %199 = vperm.xlu0 %198, %v133
  %v200 = vpop.permute.xlu0 %199
  %203 = vset.pattern.permute.xlu0 0
  %204 = vperm.xlu0 %203, %v134
  %v205 = vpop.permute.xlu0 %204
  %208 = vset.pattern.permute.xlu0 0
  %209 = vperm.xlu0 %208, %v135
  %v210 = vpop.permute.xlu0 %209
  %213 = vset.pattern.permute.xlu0 0
  %214 = vperm.xlu0 %213, %v136
  %v215 = vpop.permute.xlu0 %214
  %vm217 = vcmask 130048
  %v219 = vsel %vm217, %v41, 0
  %v222 = vsel %vm217, %v42, 0
  %v225 = vsel %vm217, %v43, 0
  %v228 = vsel %vm217, %v44, 0
  %v231 = vsel %vm217, %v45, 0
  %v234 = vsel %vm217, %v46, 0
  %v237 = vsel %vm217, %v47, 0
  %v240 = vsel %vm217, %v48, 0
  %v243 = vsel %vm217, %v49, 0
  %v246 = vsel %vm217, %v50, 0
  %248 = vmatpush.msra.mxu0 0.0
  %249 = vmatpush.msra.mxu0 0.0
  %250 = vmatpush.msra.mxu0 0.0
  %251 = vmatpush.msra.mxu0 0.0
  %252 = vmatpush.msra.mxu0 0.0
  %253 = vmatpush.msra.mxu0 0.0
  %254 = vmatpush.msra.mxu0 0.0
  %255 = vmatpush.msra.mxu0 0.0
  %256 = vmatpush.msra.mxu0 0.0
  %257 = vmatpush.msra.mxu0 0.0
  %258 = vmatpush.msra.mxu0 0.0
  %259 = vmatpush.msra.mxu0 0.0
  %260 = vmatpush.msra.mxu0 0.0
  %261 = vmatpush.msra.mxu0 0.0
  %262 = vmatpush.msra.mxu0 %v145
  %263 = vmatpush.msra.mxu0 %v140
  %264 = vmatmul.f32.gmra.mxu0 %v219
  %v265 = vpop.f32.mrf.mxu0
  %v266 = vadd.f32 0.0, %v265
  %267 = vmatmul.f32.gmra.mxu0 %v222
  %v268 = vpop.f32.mrf.mxu0
  %v269 = vadd.f32 0.0, %v268
  %270 = vmatmul.f32.gmra.mxu0 %v225
  %v271 = vpop.f32.mrf.mxu0
  %v272 = vadd.f32 0.0, %v271
  %273 = vmatmul.f32.gmra.mxu0 %v228
  %v274 = vpop.f32.mrf.mxu0
  %v275 = vadd.f32 0.0, %v274
  %276 = vmatmul.f32.gmra.mxu0 %v231
  %v277 = vpop.f32.mrf.mxu0
  %v278 = vadd.f32 0.0, %v277
  %279 = vmatmul.f32.gmra.mxu0 %v234
  %v280 = vpop.f32.mrf.mxu0
  %v281 = vadd.f32 0.0, %v280
  %282 = vmatmul.f32.gmra.mxu0 %v237
  %v283 = vpop.f32.mrf.mxu0
  %v284 = vadd.f32 0.0, %v283
  %285 = vmatmul.f32.gmra.mxu0 %v240
  %v286 = vpop.f32.mrf.mxu0
  %v287 = vadd.f32 0.0, %v286
  %288 = vmatmul.f32.gmra.mxu0 %v243
  %v289 = vpop.f32.mrf.mxu0
  %v290 = vadd.f32 0.0, %v289
  %291 = vmatmul.f32.gmra.mxu0 %v246
  %v292 = vpop.f32.mrf.mxu0
  %v293 = vadd.f32 0.0, %v292
  %294 = vdwg.mxu0
  %v296 = vsel %vm217, %v51, 0
  %v299 = vsel %vm217, %v52, 0
  %v302 = vsel %vm217, %v53, 0
  %v305 = vsel %vm217, %v54, 0
  %v308 = vsel %vm217, %v55, 0
  %v311 = vsel %vm217, %v56, 0
  %v314 = vsel %vm217, %v57, 0
  %v317 = vsel %vm217, %v58, 0
  %v320 = vsel %vm217, %v59, 0
  %v323 = vsel %vm217, %v60, 0
  %325 = vmatpush.msra.mxu0 0.0
  %326 = vmatpush.msra.mxu0 0.0
  %327 = vmatpush.msra.mxu0 0.0
  %328 = vmatpush.msra.mxu0 0.0
  %329 = vmatpush.msra.mxu0 0.0
  %330 = vmatpush.msra.mxu0 0.0
  %331 = vmatpush.msra.mxu0 0.0
  %332 = vmatpush.msra.mxu0 0.0
  %333 = vmatpush.msra.mxu0 0.0
  %334 = vmatpush.msra.mxu0 0.0
  %335 = vmatpush.msra.mxu0 0.0
  %336 = vmatpush.msra.mxu0 0.0
  %337 = vmatpush.msra.mxu0 0.0
  %338 = vmatpush.msra.mxu0 0.0
  %339 = vmatpush.msra.mxu0 %v155
  %340 = vmatpush.msra.mxu0 %v150
  %341 = vmatmul.f32.gmra.mxu0 %v296
  %v342 = vpop.f32.mrf.mxu0
  %v343 = vadd.f32 0.0, %v342
  %344 = vmatmul.f32.gmra.mxu0 %v299
  %v345 = vpop.f32.mrf.mxu0
  %v346 = vadd.f32 0.0, %v345
  %347 = vmatmul.f32.gmra.mxu0 %v302
  %v348 = vpop.f32.mrf.mxu0
  %v349 = vadd.f32 0.0, %v348
  %350 = vmatmul.f32.gmra.mxu0 %v305
  %v351 = vpop.f32.mrf.mxu0
  %v352 = vadd.f32 0.0, %v351
  %353 = vmatmul.f32.gmra.mxu0 %v308
  %v354 = vpop.f32.mrf.mxu0
  %v355 = vadd.f32 0.0, %v354
  %356 = vmatmul.f32.gmra.mxu0 %v311
  %v357 = vpop.f32.mrf.mxu0
  %v358 = vadd.f32 0.0, %v357
  %359 = vmatmul.f32.gmra.mxu0 %v314
  %v360 = vpop.f32.mrf.mxu0
  %v361 = vadd.f32 0.0, %v360
  %362 = vmatmul.f32.gmra.mxu0 %v317
  %v363 = vpop.f32.mrf.mxu0
  %v364 = vadd.f32 0.0, %v363
  %365 = vmatmul.f32.gmra.mxu0 %v320
  %v366 = vpop.f32.mrf.mxu0
  %v367 = vadd.f32 0.0, %v366
  %368 = vmatmul.f32.gmra.mxu0 %v323
  %v369 = vpop.f32.mrf.mxu0
  %v370 = vadd.f32 0.0, %v369
  %371 = vdwg.mxu0
  %v373 = vsel %vm217, %v61, 0
  %v376 = vsel %vm217, %v62, 0
  %v379 = vsel %vm217, %v63, 0
  %v382 = vsel %vm217, %v64, 0
  %v385 = vsel %vm217, %v65, 0
  %v388 = vsel %vm217, %v66, 0
  %v391 = vsel %vm217, %v67, 0
  %v394 = vsel %vm217, %v68, 0
  %v397 = vsel %vm217, %v69, 0
  %v400 = vsel %vm217, %v70, 0
  %402 = vmatpush.msra.mxu0 0.0
  %403 = vmatpush.msra.mxu0 0.0
  %404 = vmatpush.msra.mxu0 0.0
  %405 = vmatpush.msra.mxu0 0.0
  %406 = vmatpush.msra.mxu0 0.0
  %407 = vmatpush.msra.mxu0 0.0
  %408 = vmatpush.msra.mxu0 0.0
  %409 = vmatpush.msra.mxu0 0.0
  %410 = vmatpush.msra.mxu0 0.0
  %411 = vmatpush.msra.mxu0 0.0
  %412 = vmatpush.msra.mxu0 0.0
  %413 = vmatpush.msra.mxu0 0.0
  %414 = vmatpush.msra.mxu0 0.0
  %415 = vmatpush.msra.mxu0 0.0
  %416 = vmatpush.msra.mxu0 %v165
  %417 = vmatpush.msra.mxu0 %v160
  %418 = vmatmul.f32.gmra.mxu0 %v373
  %v419 = vpop.f32.mrf.mxu0
  %v420 = vadd.f32 0.0, %v419
  %421 = vmatmul.f32.gmra.mxu0 %v376
  %v422 = vpop.f32.mrf.mxu0
  %v423 = vadd.f32 0.0, %v422
  %424 = vmatmul.f32.gmra.mxu0 %v379
  %v425 = vpop.f32.mrf.mxu0
  %v426 = vadd.f32 0.0, %v425
  %427 = vmatmul.f32.gmra.mxu0 %v382
  %v428 = vpop.f32.mrf.mxu0
  %v429 = vadd.f32 0.0, %v428
  %430 = vmatmul.f32.gmra.mxu0 %v385
  %v431 = vpop.f32.mrf.mxu0
  %v432 = vadd.f32 0.0, %v431
  %433 = vmatmul.f32.gmra.mxu0 %v388
  %v434 = vpop.f32.mrf.mxu0
  %v435 = vadd.f32 0.0, %v434
  %436 = vmatmul.f32.gmra.mxu0 %v391
  %v437 = vpop.f32.mrf.mxu0
  %v438 = vadd.f32 0.0, %v437
  %439 = vmatmul.f32.gmra.mxu0 %v394
  %v440 = vpop.f32.mrf.mxu0
  %v441 = vadd.f32 0.0, %v440
  %442 = vmatmul.f32.gmra.mxu0 %v397
  %v443 = vpop.f32.mrf.mxu0
  %v444 = vadd.f32 0.0, %v443
  %445 = vmatmul.f32.gmra.mxu0 %v400
  %v446 = vpop.f32.mrf.mxu0
  %v447 = vadd.f32 0.0, %v446
  %448 = vdwg.mxu0
  %v450 = vsel %vm217, %v71, 0
  %v453 = vsel %vm217, %v72, 0
  %v456 = vsel %vm217, %v73, 0
  %v459 = vsel %vm217, %v74, 0
  %v462 = vsel %vm217, %v75, 0
  %v465 = vsel %vm217, %v76, 0
  %v468 = vsel %vm217, %v77, 0
  %v471 = vsel %vm217, %v78, 0
  %v474 = vsel %vm217, %v79, 0
  %v477 = vsel %vm217, %v80, 0
  %479 = vmatpush.msra.mxu0 0.0
  %480 = vmatpush.msra.mxu0 0.0
  %481 = vmatpush.msra.mxu0 0.0
  %482 = vmatpush.msra.mxu0 0.0
  %483 = vmatpush.msra.mxu0 0.0
  %484 = vmatpush.msra.mxu0 0.0
  %485 = vmatpush.msra.mxu0 0.0
  %486 = vmatpush.msra.mxu0 0.0
  %487 = vmatpush.msra.mxu0 0.0
  %488 = vmatpush.msra.mxu0 0.0
  %489 = vmatpush.msra.mxu0 0.0
  %490 = vmatpush.msra.mxu0 0.0
  %491 = vmatpush.msra.mxu0 0.0
  %492 = vmatpush.msra.mxu0 0.0
  %493 = vmatpush.msra.mxu0 %v175
  %494 = vmatpush.msra.mxu0 %v170
  %495 = vmatmul.f32.gmra.mxu0 %v450
  %v496 = vpop.f32.mrf.mxu0
  %v497 = vadd.f32 0.0, %v496
  %498 = vmatmul.f32.gmra.mxu0 %v453
  %v499 = vpop.f32.mrf.mxu0
  %v500 = vadd.f32 0.0, %v499
  %501 = vmatmul.f32.gmra.mxu0 %v456
  %v502 = vpop.f32.mrf.mxu0
  %v503 = vadd.f32 0.0, %v502
  %504 = vmatmul.f32.gmra.mxu0 %v459
  %v505 = vpop.f32.mrf.mxu0
  %v506 = vadd.f32 0.0, %v505
  %507 = vmatmul.f32.gmra.mxu0 %v462
  %v508 = vpop.f32.mrf.mxu0
  %v509 = vadd.f32 0.0, %v508
  %510 = vmatmul.f32.gmra.mxu0 %v465
  %v511 = vpop.f32.mrf.mxu0
  %v512 = vadd.f32 0.0, %v511
  %513 = vmatmul.f32.gmra.mxu0 %v468
  %v514 = vpop.f32.mrf.mxu0
  %v515 = vadd.f32 0.0, %v514
  %516 = vmatmul.f32.gmra.mxu0 %v471
  %v517 = vpop.f32.mrf.mxu0
  %v518 = vadd.f32 0.0, %v517
  %519 = vmatmul.f32.gmra.mxu0 %v474
  %v520 = vpop.f32.mrf.mxu0
  %v521 = vadd.f32 0.0, %v520
  %522 = vmatmul.f32.gmra.mxu0 %v477
  %v523 = vpop.f32.mrf.mxu0
  %v524 = vadd.f32 0.0, %v523
  %525 = vdwg.mxu0
  %v527 = vsel %vm217, %v81, 0
  %v530 = vsel %vm217, %v82, 0
  %v533 = vsel %vm217, %v83, 0
  %v536 = vsel %vm217, %v84, 0
  %v539 = vsel %vm217, %v85, 0
  %v542 = vsel %vm217, %v86, 0
  %v545 = vsel %vm217, %v87, 0
  %v548 = vsel %vm217, %v88, 0
  %v551 = vsel %vm217, %v89, 0
  %v554 = vsel %vm217, %v90, 0
  %556 = vmatpush.msra.mxu0 0.0
  %557 = vmatpush.msra.mxu0 0.0
  %558 = vmatpush.msra.mxu0 0.0
  %559 = vmatpush.msra.mxu0 0.0
  %560 = vmatpush.msra.mxu0 0.0
  %561 = vmatpush.msra.mxu0 0.0
  %562 = vmatpush.msra.mxu0 0.0
  %563 = vmatpush.msra.mxu0 0.0
  %564 = vmatpush.msra.mxu0 0.0
  %565 = vmatpush.msra.mxu0 0.0
  %566 = vmatpush.msra.mxu0 0.0
  %567 = vmatpush.msra.mxu0 0.0
  %568 = vmatpush.msra.mxu0 0.0
  %569 = vmatpush.msra.mxu0 0.0
  %570 = vmatpush.msra.mxu0 %v185
  %571 = vmatpush.msra.mxu0 %v180
  %572 = vmatmul.f32.gmra.mxu0 %v527
  %v573 = vpop.f32.mrf.mxu0
  %v574 = vadd.f32 0.0, %v573
  %575 = vmatmul.f32.gmra.mxu0 %v530
  %v576 = vpop.f32.mrf.mxu0
  %v577 = vadd.f32 0.0, %v576
  %578 = vmatmul.f32.gmra.mxu0 %v533
  %v579 = vpop.f32.mrf.mxu0
  %v580 = vadd.f32 0.0, %v579
  %581 = vmatmul.f32.gmra.mxu0 %v536
  %v582 = vpop.f32.mrf.mxu0
  %v583 = vadd.f32 0.0, %v582
  %584 = vmatmul.f32.gmra.mxu0 %v539
  %v585 = vpop.f32.mrf.mxu0
  %v586 = vadd.f32 0.0, %v585
  %587 = vmatmul.f32.gmra.mxu0 %v542
  %v588 = vpop.f32.mrf.mxu0
  %v589 = vadd.f32 0.0, %v588
  %590 = vmatmul.f32.gmra.mxu0 %v545
  %v591 = vpop.f32.mrf.mxu0
  %v592 = vadd.f32 0.0, %v591
  %593 = vmatmul.f32.gmra.mxu0 %v548
  %v594 = vpop.f32.mrf.mxu0
  %v595 = vadd.f32 0.0, %v594
  %596 = vmatmul.f32.gmra.mxu0 %v551
  %v597 = vpop.f32.mrf.mxu0
  %v598 = vadd.f32 0.0, %v597
  %599 = vmatmul.f32.gmra.mxu0 %v554
  %v600 = vpop.f32.mrf.mxu0
  %v601 = vadd.f32 0.0, %v600
  %602 = vdwg.mxu0
  %v604 = vsel %vm217, %v91, 0
  %v607 = vsel %vm217, %v92, 0
  %v610 = vsel %vm217, %v93, 0
  %v613 = vsel %vm217, %v94, 0
  %v616 = vsel %vm217, %v95, 0
  %v619 = vsel %vm217, %v96, 0
  %v622 = vsel %vm217, %v97, 0
  %v625 = vsel %vm217, %v98, 0
  %v628 = vsel %vm217, %v99, 0
  %v631 = vsel %vm217, %v100, 0
  %633 = vmatpush.msra.mxu0 0.0
  %634 = vmatpush.msra.mxu0 0.0
  %635 = vmatpush.msra.mxu0 0.0
  %636 = vmatpush.msra.mxu0 0.0
  %637 = vmatpush.msra.mxu0 0.0
  %638 = vmatpush.msra.mxu0 0.0
  %639 = vmatpush.msra.mxu0 0.0
  %640 = vmatpush.msra.mxu0 0.0
  %641 = vmatpush.msra.mxu0 0.0
  %642 = vmatpush.msra.mxu0 0.0
  %643 = vmatpush.msra.mxu0 0.0
  %644 = vmatpush.msra.mxu0 0.0
  %645 = vmatpush.msra.mxu0 0.0
  %646 = vmatpush.msra.mxu0 0.0
  %647 = vmatpush.msra.mxu0 %v195
  %648 = vmatpush.msra.mxu0 %v190
  %649 = vmatmul.f32.gmra.mxu0 %v604
  %v650 = vpop.f32.mrf.mxu0
  %v651 = vadd.f32 0.0, %v650
  %652 = vmatmul.f32.gmra.mxu0 %v607
  %v653 = vpop.f32.mrf.mxu0
  %v654 = vadd.f32 0.0, %v653
  %655 = vmatmul.f32.gmra.mxu0 %v610
  %v656 = vpop.f32.mrf.mxu0
  %v657 = vadd.f32 0.0, %v656
  %658 = vmatmul.f32.gmra.mxu0 %v613
  %v659 = vpop.f32.mrf.mxu0
  %v660 = vadd.f32 0.0, %v659
  %661 = vmatmul.f32.gmra.mxu0 %v616
  %v662 = vpop.f32.mrf.mxu0
  %v663 = vadd.f32 0.0, %v662
  %664 = vmatmul.f32.gmra.mxu0 %v619
  %v665 = vpop.f32.mrf.mxu0
  %v666 = vadd.f32 0.0, %v665
  %667 = vmatmul.f32.gmra.mxu0 %v622
  %v668 = vpop.f32.mrf.mxu0
  %v669 = vadd.f32 0.0, %v668
  %670 = vmatmul.f32.gmra.mxu0 %v625
  %v671 = vpop.f32.mrf.mxu0
  %v672 = vadd.f32 0.0, %v671
  %673 = vmatmul.f32.gmra.mxu0 %v628
  %v674 = vpop.f32.mrf.mxu0
  %v675 = vadd.f32 0.0, %v674
  %676 = vmatmul.f32.gmra.mxu0 %v631
  %v677 = vpop.f32.mrf.mxu0
  %v678 = vadd.f32 0.0, %v677
  %679 = vdwg.mxu0
  %v681 = vsel %vm217, %v101, 0
  %v684 = vsel %vm217, %v102, 0
  %v687 = vsel %vm217, %v103, 0
  %v690 = vsel %vm217, %v104, 0
  %v693 = vsel %vm217, %v105, 0
  %v696 = vsel %vm217, %v106, 0
  %v699 = vsel %vm217, %v107, 0
  %v702 = vsel %vm217, %v108, 0
  %v705 = vsel %vm217, %v109, 0
  %v708 = vsel %vm217, %v110, 0
  %710 = vmatpush.msra.mxu0 0.0
  %711 = vmatpush.msra.mxu0 0.0
  %712 = vmatpush.msra.mxu0 0.0
  %713 = vmatpush.msra.mxu0 0.0
  %714 = vmatpush.msra.mxu0 0.0
  %715 = vmatpush.msra.mxu0 0.0
  %716 = vmatpush.msra.mxu0 0.0
  %717 = vmatpush.msra.mxu0 0.0
  %718 = vmatpush.msra.mxu0 0.0
  %719 = vmatpush.msra.mxu0 0.0
  %720 = vmatpush.msra.mxu0 0.0
  %721 = vmatpush.msra.mxu0 0.0
  %722 = vmatpush.msra.mxu0 0.0
  %723 = vmatpush.msra.mxu0 0.0
  %724 = vmatpush.msra.mxu0 %v205
  %725 = vmatpush.msra.mxu0 %v200
  %726 = vmatmul.f32.gmra.mxu0 %v681
  %v727 = vpop.f32.mrf.mxu0
  %v728 = vadd.f32 0.0, %v727
  %729 = vmatmul.f32.gmra.mxu0 %v684
  %v730 = vpop.f32.mrf.mxu0
  %v731 = vadd.f32 0.0, %v730
  %732 = vmatmul.f32.gmra.mxu0 %v687
  %v733 = vpop.f32.mrf.mxu0
  %v734 = vadd.f32 0.0, %v733
  %735 = vmatmul.f32.gmra.mxu0 %v690
  %v736 = vpop.f32.mrf.mxu0
  %v737 = vadd.f32 0.0, %v736
  %738 = vmatmul.f32.gmra.mxu0 %v693
  %v739 = vpop.f32.mrf.mxu0
  %v740 = vadd.f32 0.0, %v739
  %741 = vmatmul.f32.gmra.mxu0 %v696
  %v742 = vpop.f32.mrf.mxu0
  %v743 = vadd.f32 0.0, %v742
  %744 = vmatmul.f32.gmra.mxu0 %v699
  %v745 = vpop.f32.mrf.mxu0
  %v746 = vadd.f32 0.0, %v745
  %747 = vmatmul.f32.gmra.mxu0 %v702
  %v748 = vpop.f32.mrf.mxu0
  %v749 = vadd.f32 0.0, %v748
  %750 = vmatmul.f32.gmra.mxu0 %v705
  %v751 = vpop.f32.mrf.mxu0
  %v752 = vadd.f32 0.0, %v751
  %753 = vmatmul.f32.gmra.mxu0 %v708
  %v754 = vpop.f32.mrf.mxu0
  %v755 = vadd.f32 0.0, %v754
  %756 = vdwg.mxu0
  %v758 = vsel %vm217, %v111, 0
  %v761 = vsel %vm217, %v112, 0
  %v764 = vsel %vm217, %v113, 0
  %v767 = vsel %vm217, %v114, 0
  %v770 = vsel %vm217, %v115, 0
  %v773 = vsel %vm217, %v116, 0
  %v776 = vsel %vm217, %v117, 0
  %v779 = vsel %vm217, %v118, 0
  %v782 = vsel %vm217, %v119, 0
  %v785 = vsel %vm217, %v120, 0
  %787 = vmatpush.msra.mxu0 0.0
  %788 = vmatpush.msra.mxu0 0.0
  %789 = vmatpush.msra.mxu0 0.0
  %790 = vmatpush.msra.mxu0 0.0
  %791 = vmatpush.msra.mxu0 0.0
  %792 = vmatpush.msra.mxu0 0.0
  %793 = vmatpush.msra.mxu0 0.0
  %794 = vmatpush.msra.mxu0 0.0
  %795 = vmatpush.msra.mxu0 0.0
  %796 = vmatpush.msra.mxu0 0.0
  %797 = vmatpush.msra.mxu0 0.0
  %798 = vmatpush.msra.mxu0 0.0
  %799 = vmatpush.msra.mxu0 0.0
  %800 = vmatpush.msra.mxu0 0.0
  %801 = vmatpush.msra.mxu0 %v215
  %802 = vmatpush.msra.mxu0 %v210
  %803 = vmatmul.f32.gmra.mxu0 %v758
  %v804 = vpop.f32.mrf.mxu0
  %v805 = vadd.f32 0.0, %v804
  %806 = vmatmul.f32.gmra.mxu0 %v761
  %v807 = vpop.f32.mrf.mxu0
  %v808 = vadd.f32 0.0, %v807
  %809 = vmatmul.f32.gmra.mxu0 %v764
  %v810 = vpop.f32.mrf.mxu0
  %v811 = vadd.f32 0.0, %v810
  %812 = vmatmul.f32.gmra.mxu0 %v767
  %v813 = vpop.f32.mrf.mxu0
  %v814 = vadd.f32 0.0, %v813
  %815 = vmatmul.f32.gmra.mxu0 %v770
  %v816 = vpop.f32.mrf.mxu0
  %v817 = vadd.f32 0.0, %v816
  %818 = vmatmul.f32.gmra.mxu0 %v773
  %v819 = vpop.f32.mrf.mxu0
  %v820 = vadd.f32 0.0, %v819
  %821 = vmatmul.f32.gmra.mxu0 %v776
  %v822 = vpop.f32.mrf.mxu0
  %v823 = vadd.f32 0.0, %v822
  %824 = vmatmul.f32.gmra.mxu0 %v779
  %v825 = vpop.f32.mrf.mxu0
  %v826 = vadd.f32 0.0, %v825
  %827 = vmatmul.f32.gmra.mxu0 %v782
  %v828 = vpop.f32.mrf.mxu0
  %v829 = vadd.f32 0.0, %v828
  %830 = vmatmul.f32.gmra.mxu0 %v785
  %v831 = vpop.f32.mrf.mxu0
  %v832 = vadd.f32 0.0, %v831
  %833 = vdwg.mxu0
  %v834 = vld [vmem:[%s2] sm:$0x1f]
  %v835 = vperm.slane %v834, 0
  %v836 = vmul.f32 %v266, %v835
  %v837 = vmul.f32 %v269, %v835
  %v838 = vmul.f32 %v343, %v835
  %v839 = vmul.f32 %v346, %v835
  %v840 = vmul.f32 %v420, %v835
  %v841 = vmul.f32 %v423, %v835
  %v842 = vmul.f32 %v497, %v835
  %v843 = vmul.f32 %v500, %v835
  %v844 = vmul.f32 %v574, %v835
  %v845 = vmul.f32 %v577, %v835
  %v846 = vmul.f32 %v651, %v835
  %v847 = vmul.f32 %v654, %v835
  %v848 = vmul.f32 %v728, %v835
  %v849 = vmul.f32 %v731, %v835
  %v850 = vmul.f32 %v805, %v835
  %v851 = vmul.f32 %v808, %v835
  %v852 = vperm.slane %v834, 1
  %v853 = vmul.f32 %v272, %v852
  %v854 = vmul.f32 %v275, %v852
  %v855 = vmul.f32 %v349, %v852
  %v856 = vmul.f32 %v352, %v852
  %v857 = vmul.f32 %v426, %v852
  %v858 = vmul.f32 %v429, %v852
  %v859 = vmul.f32 %v503, %v852
  %v860 = vmul.f32 %v506, %v852
  %v861 = vmul.f32 %v580, %v852
  %v862 = vmul.f32 %v583, %v852
  %v863 = vmul.f32 %v657, %v852
  %v864 = vmul.f32 %v660, %v852
  %v865 = vmul.f32 %v734, %v852
  %v866 = vmul.f32 %v737, %v852
  %v867 = vmul.f32 %v811, %v852
  %v868 = vmul.f32 %v814, %v852
  %v869 = vadd.f32 %v836, %v853
  %v870 = vadd.f32 %v837, %v854
  %v871 = vadd.f32 %v838, %v855
  %v872 = vadd.f32 %v839, %v856
  %v873 = vadd.f32 %v840, %v857
  %v874 = vadd.f32 %v841, %v858
  %v875 = vadd.f32 %v842, %v859
  %v876 = vadd.f32 %v843, %v860
  %v877 = vadd.f32 %v844, %v861
  %v878 = vadd.f32 %v845, %v862
  %v879 = vadd.f32 %v846, %v863
  %v880 = vadd.f32 %v847, %v864
  %v881 = vadd.f32 %v848, %v865
  %v882 = vadd.f32 %v849, %v866
  %v883 = vadd.f32 %v850, %v867
  %v884 = vadd.f32 %v851, %v868
  %v885 = vperm.slane %v834, 2
  %v886 = vmul.f32 %v278, %v885
  %v887 = vmul.f32 %v281, %v885
  %v888 = vmul.f32 %v355, %v885
  %v889 = vmul.f32 %v358, %v885
  %v890 = vmul.f32 %v432, %v885
  %v891 = vmul.f32 %v435, %v885
  %v892 = vmul.f32 %v509, %v885
  %v893 = vmul.f32 %v512, %v885
  %v894 = vmul.f32 %v586, %v885
  %v895 = vmul.f32 %v589, %v885
  %v896 = vmul.f32 %v663, %v885
  %v897 = vmul.f32 %v666, %v885
  %v898 = vmul.f32 %v740, %v885
  %v899 = vmul.f32 %v743, %v885
  %v900 = vmul.f32 %v817, %v885
  %v901 = vmul.f32 %v820, %v885
  %v902 = vadd.f32 %v869, %v886
  %v903 = vadd.f32 %v870, %v887
  %v904 = vadd.f32 %v871, %v888
  %v905 = vadd.f32 %v872, %v889
  %v906 = vadd.f32 %v873, %v890
  %v907 = vadd.f32 %v874, %v891
  %v908 = vadd.f32 %v875, %v892
  %v909 = vadd.f32 %v876, %v893
  %v910 = vadd.f32 %v877, %v894
  %v911 = vadd.f32 %v878, %v895
  %v912 = vadd.f32 %v879, %v896
  %v913 = vadd.f32 %v880, %v897
  %v914 = vadd.f32 %v881, %v898
  %v915 = vadd.f32 %v882, %v899
  %v916 = vadd.f32 %v883, %v900
  %v917 = vadd.f32 %v884, %v901
  %v918 = vperm.slane %v834, 3
  %v919 = vmul.f32 %v284, %v918
  %v920 = vmul.f32 %v287, %v918
  %v921 = vmul.f32 %v361, %v918
  %v922 = vmul.f32 %v364, %v918
  %v923 = vmul.f32 %v438, %v918
  %v924 = vmul.f32 %v441, %v918
  %v925 = vmul.f32 %v515, %v918
  %v926 = vmul.f32 %v518, %v918
  %v927 = vmul.f32 %v592, %v918
  %v928 = vmul.f32 %v595, %v918
  %v929 = vmul.f32 %v669, %v918
  %v930 = vmul.f32 %v672, %v918
  %v931 = vmul.f32 %v746, %v918
  %v932 = vmul.f32 %v749, %v918
  %v933 = vmul.f32 %v823, %v918
  %v934 = vmul.f32 %v826, %v918
  %v935 = vadd.f32 %v902, %v919
  %v936 = vadd.f32 %v903, %v920
  %v937 = vadd.f32 %v904, %v921
  %v938 = vadd.f32 %v905, %v922
  %v939 = vadd.f32 %v906, %v923
  %v940 = vadd.f32 %v907, %v924
  %v941 = vadd.f32 %v908, %v925
  %v942 = vadd.f32 %v909, %v926
  %v943 = vadd.f32 %v910, %v927
  %v944 = vadd.f32 %v911, %v928
  %v945 = vadd.f32 %v912, %v929
  %v946 = vadd.f32 %v913, %v930
  %v947 = vadd.f32 %v914, %v931
  %v948 = vadd.f32 %v915, %v932
  %v949 = vadd.f32 %v916, %v933
  %v950 = vadd.f32 %v917, %v934
  %v951 = vperm.slane %v834, 4
  %v952 = vmul.f32 %v290, %v951
  %v953 = vmul.f32 %v293, %v951
  %v954 = vmul.f32 %v367, %v951
  %v955 = vmul.f32 %v370, %v951
  %v956 = vmul.f32 %v444, %v951
  %v957 = vmul.f32 %v447, %v951
  %v958 = vmul.f32 %v521, %v951
  %v959 = vmul.f32 %v524, %v951
  %v960 = vmul.f32 %v598, %v951
  %v961 = vmul.f32 %v601, %v951
  %v962 = vmul.f32 %v675, %v951
  %v963 = vmul.f32 %v678, %v951
  %v964 = vmul.f32 %v752, %v951
  %v965 = vmul.f32 %v755, %v951
  %v966 = vmul.f32 %v829, %v951
  %v967 = vmul.f32 %v832, %v951
  %v968 = vadd.f32 %v935, %v952
  %v969 = vadd.f32 %v936, %v953
  %v970 = vadd.f32 %v937, %v954
  %v971 = vadd.f32 %v938, %v955
  %v972 = vadd.f32 %v939, %v956
  %v973 = vadd.f32 %v940, %v957
  %v974 = vadd.f32 %v941, %v958
  %v975 = vadd.f32 %v942, %v959
  %v976 = vadd.f32 %v943, %v960
  %v977 = vadd.f32 %v944, %v961
  %v978 = vadd.f32 %v945, %v962
  %v979 = vadd.f32 %v946, %v963
  %v980 = vadd.f32 %v947, %v964
  %v981 = vadd.f32 %v948, %v965
  %v982 = vadd.f32 %v949, %v966
  %v983 = vadd.f32 %v950, %v967
  %v984 = vld [vmem:[%s3] sm:$0x1]
  %v986 = vperm.slane %v984, 0
  %v988 = vadd.f32 %v968, %v986
  %v989 = vadd.f32 %v969, %v986
  %v990 = vadd.f32 %v970, %v986
  %v991 = vadd.f32 %v971, %v986
  %v992 = vadd.f32 %v972, %v986
  %v993 = vadd.f32 %v973, %v986
  %v994 = vadd.f32 %v974, %v986
  %v995 = vadd.f32 %v975, %v986
  %v996 = vadd.f32 %v976, %v986
  %v997 = vadd.f32 %v977, %v986
  %v998 = vadd.f32 %v978, %v986
  %v999 = vadd.f32 %v979, %v986
  %v1000 = vadd.f32 %v980, %v986
  %v1001 = vadd.f32 %v981, %v986
  %v1002 = vadd.f32 %v982, %v986
  %v1003 = vadd.f32 %v983, %v986
  %v1004 = vmax.f32 %v988, 0.0
  %v1005 = vmax.f32 %v989, 0.0
  %v1006 = vmax.f32 %v990, 0.0
  %v1007 = vmax.f32 %v991, 0.0
  %v1008 = vmax.f32 %v992, 0.0
  %v1009 = vmax.f32 %v993, 0.0
  %v1010 = vmax.f32 %v994, 0.0
  %v1011 = vmax.f32 %v995, 0.0
  %v1012 = vmax.f32 %v996, 0.0
  %v1013 = vmax.f32 %v997, 0.0
  %v1014 = vmax.f32 %v998, 0.0
  %v1015 = vmax.f32 %v999, 0.0
  %v1016 = vmax.f32 %v1000, 0.0
  %v1017 = vmax.f32 %v1001, 0.0
  %v1018 = vmax.f32 %v1002, 0.0
  %v1019 = vmax.f32 %v1003, 0.0
  %1020 = vmatpush.msra.mxu0 0.0
  %1021 = vmatpush.msra.mxu0 0.0
  %1022 = vmatpush.msra.mxu0 0.0
  %1023 = vmatpush.msra.mxu0 0.0
  %1024 = vmatpush.msra.mxu0 0.0
  %1025 = vmatpush.msra.mxu0 0.0
  %1026 = vmatpush.msra.mxu0 0.0
  %1027 = vmatpush.msra.mxu0 0.0
  %1028 = vmatpush.msra.mxu0 0.0
  %1029 = vmatpush.msra.mxu0 0.0
  %1030 = vmatpush.msra.mxu0 0.0
  %1031 = vmatpush.msra.mxu0 0.0
  %1032 = vmatpush.msra.mxu0 0.0
  %1033 = vmatpush.msra.mxu0 0.0
  %1034 = vmatpush.msra.mxu0 %v1005
  %1035 = vmatpush.msra.mxu0 %v1004
  %1036 = vmatmul.f32.gmra.mxu0 %v219
  %v1037 = vpop.f32.mrf.mxu0
  %v1038 = vadd.f32 0.0, %v1037
  %1039 = vmatmul.f32.gmra.mxu0 %v222
  %v1040 = vpop.f32.mrf.mxu0
  %v1041 = vadd.f32 0.0, %v1040
  %1042 = vmatmul.f32.gmra.mxu0 %v225
  %v1043 = vpop.f32.mrf.mxu0
  %v1044 = vadd.f32 0.0, %v1043
  %1045 = vmatmul.f32.gmra.mxu0 %v228
  %v1046 = vpop.f32.mrf.mxu0
  %v1047 = vadd.f32 0.0, %v1046
  %1048 = vmatmul.f32.gmra.mxu0 %v231
  %v1049 = vpop.f32.mrf.mxu0
  %v1050 = vadd.f32 0.0, %v1049
  %1051 = vmatmul.f32.gmra.mxu0 %v234
  %v1052 = vpop.f32.mrf.mxu0
  %v1053 = vadd.f32 0.0, %v1052
  %1054 = vmatmul.f32.gmra.mxu0 %v237
  %v1055 = vpop.f32.mrf.mxu0
  %v1056 = vadd.f32 0.0, %v1055
  %1057 = vmatmul.f32.gmra.mxu0 %v240
  %v1058 = vpop.f32.mrf.mxu0
  %v1059 = vadd.f32 0.0, %v1058
  %1060 = vmatmul.f32.gmra.mxu0 %v243
  %v1061 = vpop.f32.mrf.mxu0
  %v1062 = vadd.f32 0.0, %v1061
  %1063 = vmatmul.f32.gmra.mxu0 %v246
  %v1064 = vpop.f32.mrf.mxu0
  %v1065 = vadd.f32 0.0, %v1064
  %1066 = vdwg.mxu0
  %1067 = vmatpush.msra.mxu0 0.0
  %1068 = vmatpush.msra.mxu0 0.0
  %1069 = vmatpush.msra.mxu0 0.0
  %1070 = vmatpush.msra.mxu0 0.0
  %1071 = vmatpush.msra.mxu0 0.0
  %1072 = vmatpush.msra.mxu0 0.0
  %1073 = vmatpush.msra.mxu0 0.0
  %1074 = vmatpush.msra.mxu0 0.0
  %1075 = vmatpush.msra.mxu0 0.0
  %1076 = vmatpush.msra.mxu0 0.0
  %1077 = vmatpush.msra.mxu0 0.0
  %1078 = vmatpush.msra.mxu0 0.0
  %1079 = vmatpush.msra.mxu0 0.0
  %1080 = vmatpush.msra.mxu0 0.0
  %1081 = vmatpush.msra.mxu0 %v1007
  %1082 = vmatpush.msra.mxu0 %v1006
  %1083 = vmatmul.f32.gmra.mxu0 %v296
  %v1084 = vpop.f32.mrf.mxu0
  %v1085 = vadd.f32 0.0, %v1084
  %1086 = vmatmul.f32.gmra.mxu0 %v299
  %v1087 = vpop.f32.mrf.mxu0
  %v1088 = vadd.f32 0.0, %v1087
  %1089 = vmatmul.f32.gmra.mxu0 %v302
  %v1090 = vpop.f32.mrf.mxu0
  %v1091 = vadd.f32 0.0, %v1090
  %1092 = vmatmul.f32.gmra.mxu0 %v305
  %v1093 = vpop.f32.mrf.mxu0
  %v1094 = vadd.f32 0.0, %v1093
  %1095 = vmatmul.f32.gmra.mxu0 %v308
  %v1096 = vpop.f32.mrf.mxu0
  %v1097 = vadd.f32 0.0, %v1096
  %1098 = vmatmul.f32.gmra.mxu0 %v311
  %v1099 = vpop.f32.mrf.mxu0
  %v1100 = vadd.f32 0.0, %v1099
  %1101 = vmatmul.f32.gmra.mxu0 %v314
  %v1102 = vpop.f32.mrf.mxu0
  %v1103 = vadd.f32 0.0, %v1102
  %1104 = vmatmul.f32.gmra.mxu0 %v317
  %v1105 = vpop.f32.mrf.mxu0
  %v1106 = vadd.f32 0.0, %v1105
  %1107 = vmatmul.f32.gmra.mxu0 %v320
  %v1108 = vpop.f32.mrf.mxu0
  %v1109 = vadd.f32 0.0, %v1108
  %1110 = vmatmul.f32.gmra.mxu0 %v323
  %v1111 = vpop.f32.mrf.mxu0
  %v1112 = vadd.f32 0.0, %v1111
  %1113 = vdwg.mxu0
  %1114 = vmatpush.msra.mxu0 0.0
  %1115 = vmatpush.msra.mxu0 0.0
  %1116 = vmatpush.msra.mxu0 0.0
  %1117 = vmatpush.msra.mxu0 0.0
  %1118 = vmatpush.msra.mxu0 0.0
  %1119 = vmatpush.msra.mxu0 0.0
  %1120 = vmatpush.msra.mxu0 0.0
  %1121 = vmatpush.msra.mxu0 0.0
  %1122 = vmatpush.msra.mxu0 0.0
  %1123 = vmatpush.msra.mxu0 0.0
  %1124 = vmatpush.msra.mxu0 0.0
  %1125 = vmatpush.msra.mxu0 0.0
  %1126 = vmatpush.msra.mxu0 0.0
  %1127 = vmatpush.msra.mxu0 0.0
  %1128 = vmatpush.msra.mxu0 %v1009
  %1129 = vmatpush.msra.mxu0 %v1008
  %1130 = vmatmul.f32.gmra.mxu0 %v373
  %v1131 = vpop.f32.mrf.mxu0
  %v1132 = vadd.f32 0.0, %v1131
  %1133 = vmatmul.f32.gmra.mxu0 %v376
  %v1134 = vpop.f32.mrf.mxu0
  %v1135 = vadd.f32 0.0, %v1134
  %1136 = vmatmul.f32.gmra.mxu0 %v379
  %v1137 = vpop.f32.mrf.mxu0
  %v1138 = vadd.f32 0.0, %v1137
  %1139 = vmatmul.f32.gmra.mxu0 %v382
  %v1140 = vpop.f32.mrf.mxu0
  %v1141 = vadd.f32 0.0, %v1140
  %1142 = vmatmul.f32.gmra.mxu0 %v385
  %v1143 = vpop.f32.mrf.mxu0
  %v1144 = vadd.f32 0.0, %v1143
  %1145 = vmatmul.f32.gmra.mxu0 %v388
  %v1146 = vpop.f32.mrf.mxu0
  %v1147 = vadd.f32 0.0, %v1146
  %1148 = vmatmul.f32.gmra.mxu0 %v391
  %v1149 = vpop.f32.mrf.mxu0
  %v1150 = vadd.f32 0.0, %v1149
  %1151 = vmatmul.f32.gmra.mxu0 %v394
  %v1152 = vpop.f32.mrf.mxu0
  %v1153 = vadd.f32 0.0, %v1152
  %1154 = vmatmul.f32.gmra.mxu0 %v397
  %v1155 = vpop.f32.mrf.mxu0
  %v1156 = vadd.f32 0.0, %v1155
  %1157 = vmatmul.f32.gmra.mxu0 %v400
  %v1158 = vpop.f32.mrf.mxu0
  %v1159 = vadd.f32 0.0, %v1158
  %1160 = vdwg.mxu0
  %1161 = vmatpush.msra.mxu0 0.0
  %1162 = vmatpush.msra.mxu0 0.0
  %1163 = vmatpush.msra.mxu0 0.0
  %1164 = vmatpush.msra.mxu0 0.0
  %1165 = vmatpush.msra.mxu0 0.0
  %1166 = vmatpush.msra.mxu0 0.0
  %1167 = vmatpush.msra.mxu0 0.0
  %1168 = vmatpush.msra.mxu0 0.0
  %1169 = vmatpush.msra.mxu0 0.0
  %1170 = vmatpush.msra.mxu0 0.0
  %1171 = vmatpush.msra.mxu0 0.0
  %1172 = vmatpush.msra.mxu0 0.0
  %1173 = vmatpush.msra.mxu0 0.0
  %1174 = vmatpush.msra.mxu0 0.0
  %1175 = vmatpush.msra.mxu0 %v1011
  %1176 = vmatpush.msra.mxu0 %v1010
  %1177 = vmatmul.f32.gmra.mxu0 %v450
  %v1178 = vpop.f32.mrf.mxu0
  %v1179 = vadd.f32 0.0, %v1178
  %1180 = vmatmul.f32.gmra.mxu0 %v453
  %v1181 = vpop.f32.mrf.mxu0
  %v1182 = vadd.f32 0.0, %v1181
  %1183 = vmatmul.f32.gmra.mxu0 %v456
  %v1184 = vpop.f32.mrf.mxu0
  %v1185 = vadd.f32 0.0, %v1184
  %1186 = vmatmul.f32.gmra.mxu0 %v459
  %v1187 = vpop.f32.mrf.mxu0
  %v1188 = vadd.f32 0.0, %v1187
  %1189 = vmatmul.f32.gmra.mxu0 %v462
  %v1190 = vpop.f32.mrf.mxu0
  %v1191 = vadd.f32 0.0, %v1190
  %1192 = vmatmul.f32.gmra.mxu0 %v465
  %v1193 = vpop.f32.mrf.mxu0
  %v1194 = vadd.f32 0.0, %v1193
  %1195 = vmatmul.f32.gmra.mxu0 %v468
  %v1196 = vpop.f32.mrf.mxu0
  %v1197 = vadd.f32 0.0, %v1196
  %1198 = vmatmul.f32.gmra.mxu0 %v471
  %v1199 = vpop.f32.mrf.mxu0
  %v1200 = vadd.f32 0.0, %v1199
  %1201 = vmatmul.f32.gmra.mxu0 %v474
  %v1202 = vpop.f32.mrf.mxu0
  %v1203 = vadd.f32 0.0, %v1202
  %1204 = vmatmul.f32.gmra.mxu0 %v477
  %v1205 = vpop.f32.mrf.mxu0
  %v1206 = vadd.f32 0.0, %v1205
  %1207 = vdwg.mxu0
  %1208 = vmatpush.msra.mxu0 0.0
  %1209 = vmatpush.msra.mxu0 0.0
  %1210 = vmatpush.msra.mxu0 0.0
  %1211 = vmatpush.msra.mxu0 0.0
  %1212 = vmatpush.msra.mxu0 0.0
  %1213 = vmatpush.msra.mxu0 0.0
  %1214 = vmatpush.msra.mxu0 0.0
  %1215 = vmatpush.msra.mxu0 0.0
  %1216 = vmatpush.msra.mxu0 0.0
  %1217 = vmatpush.msra.mxu0 0.0
  %1218 = vmatpush.msra.mxu0 0.0
  %1219 = vmatpush.msra.mxu0 0.0
  %1220 = vmatpush.msra.mxu0 0.0
  %1221 = vmatpush.msra.mxu0 0.0
  %1222 = vmatpush.msra.mxu0 %v1013
  %1223 = vmatpush.msra.mxu0 %v1012
  %1224 = vmatmul.f32.gmra.mxu0 %v527
  %v1225 = vpop.f32.mrf.mxu0
  %v1226 = vadd.f32 0.0, %v1225
  %1227 = vmatmul.f32.gmra.mxu0 %v530
  %v1228 = vpop.f32.mrf.mxu0
  %v1229 = vadd.f32 0.0, %v1228
  %1230 = vmatmul.f32.gmra.mxu0 %v533
  %v1231 = vpop.f32.mrf.mxu0
  %v1232 = vadd.f32 0.0, %v1231
  %1233 = vmatmul.f32.gmra.mxu0 %v536
  %v1234 = vpop.f32.mrf.mxu0
  %v1235 = vadd.f32 0.0, %v1234
  %1236 = vmatmul.f32.gmra.mxu0 %v539
  %v1237 = vpop.f32.mrf.mxu0
  %v1238 = vadd.f32 0.0, %v1237
  %1239 = vmatmul.f32.gmra.mxu0 %v542
  %v1240 = vpop.f32.mrf.mxu0
  %v1241 = vadd.f32 0.0, %v1240
  %1242 = vmatmul.f32.gmra.mxu0 %v545
  %v1243 = vpop.f32.mrf.mxu0
  %v1244 = vadd.f32 0.0, %v1243
  %1245 = vmatmul.f32.gmra.mxu0 %v548
  %v1246 = vpop.f32.mrf.mxu0
  %v1247 = vadd.f32 0.0, %v1246
  %1248 = vmatmul.f32.gmra.mxu0 %v551
  %v1249 = vpop.f32.mrf.mxu0
  %v1250 = vadd.f32 0.0, %v1249
  %1251 = vmatmul.f32.gmra.mxu0 %v554
  %v1252 = vpop.f32.mrf.mxu0
  %v1253 = vadd.f32 0.0, %v1252
  %1254 = vdwg.mxu0
  %1255 = vmatpush.msra.mxu0 0.0
  %1256 = vmatpush.msra.mxu0 0.0
  %1257 = vmatpush.msra.mxu0 0.0
  %1258 = vmatpush.msra.mxu0 0.0
  %1259 = vmatpush.msra.mxu0 0.0
  %1260 = vmatpush.msra.mxu0 0.0
  %1261 = vmatpush.msra.mxu0 0.0
  %1262 = vmatpush.msra.mxu0 0.0
  %1263 = vmatpush.msra.mxu0 0.0
  %1264 = vmatpush.msra.mxu0 0.0
  %1265 = vmatpush.msra.mxu0 0.0
  %1266 = vmatpush.msra.mxu0 0.0
  %1267 = vmatpush.msra.mxu0 0.0
  %1268 = vmatpush.msra.mxu0 0.0
  %1269 = vmatpush.msra.mxu0 %v1015
  %1270 = vmatpush.msra.mxu0 %v1014
  %1271 = vmatmul.f32.gmra.mxu0 %v604
  %v1272 = vpop.f32.mrf.mxu0
  %v1273 = vadd.f32 0.0, %v1272
  %1274 = vmatmul.f32.gmra.mxu0 %v607
  %v1275 = vpop.f32.mrf.mxu0
  %v1276 = vadd.f32 0.0, %v1275
  %1277 = vmatmul.f32.gmra.mxu0 %v610
  %v1278 = vpop.f32.mrf.mxu0
  %v1279 = vadd.f32 0.0, %v1278
  %1280 = vmatmul.f32.gmra.mxu0 %v613
  %v1281 = vpop.f32.mrf.mxu0
  %v1282 = vadd.f32 0.0, %v1281
  %1283 = vmatmul.f32.gmra.mxu0 %v616
  %v1284 = vpop.f32.mrf.mxu0
  %v1285 = vadd.f32 0.0, %v1284
  %1286 = vmatmul.f32.gmra.mxu0 %v619
  %v1287 = vpop.f32.mrf.mxu0
  %v1288 = vadd.f32 0.0, %v1287
  %1289 = vmatmul.f32.gmra.mxu0 %v622
  %v1290 = vpop.f32.mrf.mxu0
  %v1291 = vadd.f32 0.0, %v1290
  %1292 = vmatmul.f32.gmra.mxu0 %v625
  %v1293 = vpop.f32.mrf.mxu0
  %v1294 = vadd.f32 0.0, %v1293
  %1295 = vmatmul.f32.gmra.mxu0 %v628
  %v1296 = vpop.f32.mrf.mxu0
  %v1297 = vadd.f32 0.0, %v1296
  %1298 = vmatmul.f32.gmra.mxu0 %v631
  %v1299 = vpop.f32.mrf.mxu0
  %v1300 = vadd.f32 0.0, %v1299
  %1301 = vdwg.mxu0
  %1302 = vmatpush.msra.mxu0 0.0
  %1303 = vmatpush.msra.mxu0 0.0
  %1304 = vmatpush.msra.mxu0 0.0
  %1305 = vmatpush.msra.mxu0 0.0
  %1306 = vmatpush.msra.mxu0 0.0
  %1307 = vmatpush.msra.mxu0 0.0
  %1308 = vmatpush.msra.mxu0 0.0
  %1309 = vmatpush.msra.mxu0 0.0
  %1310 = vmatpush.msra.mxu0 0.0
  %1311 = vmatpush.msra.mxu0 0.0
  %1312 = vmatpush.msra.mxu0 0.0
  %1313 = vmatpush.msra.mxu0 0.0
  %1314 = vmatpush.msra.mxu0 0.0
  %1315 = vmatpush.msra.mxu0 0.0
  %1316 = vmatpush.msra.mxu0 %v1017
  %1317 = vmatpush.msra.mxu0 %v1016
  %1318 = vmatmul.f32.gmra.mxu0 %v681
  %v1319 = vpop.f32.mrf.mxu0
  %v1320 = vadd.f32 0.0, %v1319
  %1321 = vmatmul.f32.gmra.mxu0 %v684
  %v1322 = vpop.f32.mrf.mxu0
  %v1323 = vadd.f32 0.0, %v1322
  %1324 = vmatmul.f32.gmra.mxu0 %v687
  %v1325 = vpop.f32.mrf.mxu0
  %v1326 = vadd.f32 0.0, %v1325
  %1327 = vmatmul.f32.gmra.mxu0 %v690
  %v1328 = vpop.f32.mrf.mxu0
  %v1329 = vadd.f32 0.0, %v1328
  %1330 = vmatmul.f32.gmra.mxu0 %v693
  %v1331 = vpop.f32.mrf.mxu0
  %v1332 = vadd.f32 0.0, %v1331
  %1333 = vmatmul.f32.gmra.mxu0 %v696
  %v1334 = vpop.f32.mrf.mxu0
  %v1335 = vadd.f32 0.0, %v1334
  %1336 = vmatmul.f32.gmra.mxu0 %v699
  %v1337 = vpop.f32.mrf.mxu0
  %v1338 = vadd.f32 0.0, %v1337
  %1339 = vmatmul.f32.gmra.mxu0 %v702
  %v1340 = vpop.f32.mrf.mxu0
  %v1341 = vadd.f32 0.0, %v1340
  %1342 = vmatmul.f32.gmra.mxu0 %v705
  %v1343 = vpop.f32.mrf.mxu0
  %v1344 = vadd.f32 0.0, %v1343
  %1345 = vmatmul.f32.gmra.mxu0 %v708
  %v1346 = vpop.f32.mrf.mxu0
  %v1347 = vadd.f32 0.0, %v1346
  %1348 = vdwg.mxu0
  %1349 = vmatpush.msra.mxu0 0.0
  %1350 = vmatpush.msra.mxu0 0.0
  %1351 = vmatpush.msra.mxu0 0.0
  %1352 = vmatpush.msra.mxu0 0.0
  %1353 = vmatpush.msra.mxu0 0.0
  %1354 = vmatpush.msra.mxu0 0.0
  %1355 = vmatpush.msra.mxu0 0.0
  %1356 = vmatpush.msra.mxu0 0.0
  %1357 = vmatpush.msra.mxu0 0.0
  %1358 = vmatpush.msra.mxu0 0.0
  %1359 = vmatpush.msra.mxu0 0.0
  %1360 = vmatpush.msra.mxu0 0.0
  %1361 = vmatpush.msra.mxu0 0.0
  %1362 = vmatpush.msra.mxu0 0.0
  %1363 = vmatpush.msra.mxu0 %v1019
  %1364 = vmatpush.msra.mxu0 %v1018
  %1365 = vmatmul.f32.gmra.mxu0 %v758
  %v1366 = vpop.f32.mrf.mxu0
  %v1367 = vadd.f32 0.0, %v1366
  %1368 = vmatmul.f32.gmra.mxu0 %v761
  %v1369 = vpop.f32.mrf.mxu0
  %v1370 = vadd.f32 0.0, %v1369
  %1371 = vmatmul.f32.gmra.mxu0 %v764
  %v1372 = vpop.f32.mrf.mxu0
  %v1373 = vadd.f32 0.0, %v1372
  %1374 = vmatmul.f32.gmra.mxu0 %v767
  %v1375 = vpop.f32.mrf.mxu0
  %v1376 = vadd.f32 0.0, %v1375
  %1377 = vmatmul.f32.gmra.mxu0 %v770
  %v1378 = vpop.f32.mrf.mxu0
  %v1379 = vadd.f32 0.0, %v1378
  %1380 = vmatmul.f32.gmra.mxu0 %v773
  %v1381 = vpop.f32.mrf.mxu0
  %v1382 = vadd.f32 0.0, %v1381
  %1383 = vmatmul.f32.gmra.mxu0 %v776
  %v1384 = vpop.f32.mrf.mxu0
  %v1385 = vadd.f32 0.0, %v1384
  %1386 = vmatmul.f32.gmra.mxu0 %v779
  %v1387 = vpop.f32.mrf.mxu0
  %v1388 = vadd.f32 0.0, %v1387
  %1389 = vmatmul.f32.gmra.mxu0 %v782
  %v1390 = vpop.f32.mrf.mxu0
  %v1391 = vadd.f32 0.0, %v1390
  %1392 = vmatmul.f32.gmra.mxu0 %v785
  %v1393 = vpop.f32.mrf.mxu0
  %v1394 = vadd.f32 0.0, %v1393
  %1395 = vdwg.mxu0
  %1412 = vrot.lane.b32.xlu0 %v1044, 8
  %v1413 = vpop.permute.xlu0 %1412
  %1414 = vrot.lane.b32.xlu0 %v1047, 8
  %v1415 = vpop.permute.xlu0 %1414
  %1416 = vrot.lane.b32.xlu0 %v1091, 8
  %v1417 = vpop.permute.xlu0 %1416
  %1418 = vrot.lane.b32.xlu0 %v1094, 8
  %v1419 = vpop.permute.xlu0 %1418
  %1420 = vrot.lane.b32.xlu0 %v1138, 8
  %v1421 = vpop.permute.xlu0 %1420
  %1422 = vrot.lane.b32.xlu0 %v1141, 8
  %v1423 = vpop.permute.xlu0 %1422
  %1424 = vrot.lane.b32.xlu0 %v1185, 8
  %v1425 = vpop.permute.xlu0 %1424
  %1426 = vrot.lane.b32.xlu0 %v1188, 8
  %v1427 = vpop.permute.xlu0 %1426
  %1428 = vrot.lane.b32.xlu0 %v1232, 8
  %v1429 = vpop.permute.xlu0 %1428
  %1430 = vrot.lane.b32.xlu0 %v1235, 8
  %v1431 = vpop.permute.xlu0 %1430
  %1432 = vrot.lane.b32.xlu0 %v1279, 8
  %v1433 = vpop.permute.xlu0 %1432
  %1434 = vrot.lane.b32.xlu0 %v1282, 8
  %v1435 = vpop.permute.xlu0 %1434
  %1436 = vrot.lane.b32.xlu0 %v1326, 8
  %v1437 = vpop.permute.xlu0 %1436
  %1438 = vrot.lane.b32.xlu0 %v1329, 8
  %v1439 = vpop.permute.xlu0 %1438
  %1440 = vrot.lane.b32.xlu0 %v1373, 8
  %v1441 = vpop.permute.xlu0 %1440
  %1442 = vrot.lane.b32.xlu0 %v1376, 8
  %v1443 = vpop.permute.xlu0 %1442
  %1476 = vrot.lane.b32.xlu0 %v1050, 16
  %v1477 = vpop.permute.xlu0 %1476
  %1478 = vrot.lane.b32.xlu0 %v1053, 16
  %v1479 = vpop.permute.xlu0 %1478
  %1480 = vrot.lane.b32.xlu0 %v1097, 16
  %v1481 = vpop.permute.xlu0 %1480
  %1482 = vrot.lane.b32.xlu0 %v1100, 16
  %v1483 = vpop.permute.xlu0 %1482
  %1484 = vrot.lane.b32.xlu0 %v1144, 16
  %v1485 = vpop.permute.xlu0 %1484
  %1486 = vrot.lane.b32.xlu0 %v1147, 16
  %v1487 = vpop.permute.xlu0 %1486
  %1488 = vrot.lane.b32.xlu0 %v1191, 16
  %v1489 = vpop.permute.xlu0 %1488
  %1490 = vrot.lane.b32.xlu0 %v1194, 16
  %v1491 = vpop.permute.xlu0 %1490
  %1492 = vrot.lane.b32.xlu0 %v1238, 16
  %v1493 = vpop.permute.xlu0 %1492
  %1494 = vrot.lane.b32.xlu0 %v1241, 16
  %v1495 = vpop.permute.xlu0 %1494
  %1496 = vrot.lane.b32.xlu0 %v1285, 16
  %v1497 = vpop.permute.xlu0 %1496
  %1498 = vrot.lane.b32.xlu0 %v1288, 16
  %v1499 = vpop.permute.xlu0 %1498
  %1500 = vrot.lane.b32.xlu0 %v1332, 16
  %v1501 = vpop.permute.xlu0 %1500
  %1502 = vrot.lane.b32.xlu0 %v1335, 16
  %v1503 = vpop.permute.xlu0 %1502
  %1504 = vrot.lane.b32.xlu0 %v1379, 16
  %v1505 = vpop.permute.xlu0 %1504
  %1506 = vrot.lane.b32.xlu0 %v1382, 16
  %v1507 = vpop.permute.xlu0 %1506
  %1540 = vrot.lane.b32.xlu0 %v1056, 24
  %v1541 = vpop.permute.xlu0 %1540
  %1542 = vrot.lane.b32.xlu0 %v1059, 24
  %v1543 = vpop.permute.xlu0 %1542
  %1544 = vrot.lane.b32.xlu0 %v1103, 24
  %v1545 = vpop.permute.xlu0 %1544
  %1546 = vrot.lane.b32.xlu0 %v1106, 24
  %v1547 = vpop.permute.xlu0 %1546
  %1548 = vrot.lane.b32.xlu0 %v1150, 24
  %v1549 = vpop.permute.xlu0 %1548
  %1550 = vrot.lane.b32.xlu0 %v1153, 24
  %v1551 = vpop.permute.xlu0 %1550
  %1552 = vrot.lane.b32.xlu0 %v1197, 24
  %v1553 = vpop.permute.xlu0 %1552
  %1554 = vrot.lane.b32.xlu0 %v1200, 24
  %v1555 = vpop.permute.xlu0 %1554
  %1556 = vrot.lane.b32.xlu0 %v1244, 24
  %v1557 = vpop.permute.xlu0 %1556
  %1558 = vrot.lane.b32.xlu0 %v1247, 24
  %v1559 = vpop.permute.xlu0 %1558
  %1560 = vrot.lane.b32.xlu0 %v1291, 24
  %v1561 = vpop.permute.xlu0 %1560
  %1562 = vrot.lane.b32.xlu0 %v1294, 24
  %v1563 = vpop.permute.xlu0 %1562
  %1564 = vrot.lane.b32.xlu0 %v1338, 24
  %v1565 = vpop.permute.xlu0 %1564
  %1566 = vrot.lane.b32.xlu0 %v1341, 24
  %v1567 = vpop.permute.xlu0 %1566
  %1568 = vrot.lane.b32.xlu0 %v1385, 24
  %v1569 = vpop.permute.xlu0 %1568
  %1570 = vrot.lane.b32.xlu0 %v1388, 24
  %v1571 = vpop.permute.xlu0 %1570
  %1604 = vrot.lane.b32.xlu0 %v1062, 32
  %v1605 = vpop.permute.xlu0 %1604
  %1606 = vrot.lane.b32.xlu0 %v1065, 32
  %v1607 = vpop.permute.xlu0 %1606
  %1608 = vrot.lane.b32.xlu0 %v1109, 32
  %v1609 = vpop.permute.xlu0 %1608
  %1610 = vrot.lane.b32.xlu0 %v1112, 32
  %v1611 = vpop.permute.xlu0 %1610
  %1612 = vrot.lane.b32.xlu0 %v1156, 32
  %v1613 = vpop.permute.xlu0 %1612
  %1614 = vrot.lane.b32.xlu0 %v1159, 32
  %v1615 = vpop.permute.xlu0 %1614
  %1616 = vrot.lane.b32.xlu0 %v1203, 32
  %v1617 = vpop.permute.xlu0 %1616
  %1618 = vrot.lane.b32.xlu0 %v1206, 32
  %v1619 = vpop.permute.xlu0 %1618
  %1620 = vrot.lane.b32.xlu0 %v1250, 32
  %v1621 = vpop.permute.xlu0 %1620
  %1622 = vrot.lane.b32.xlu0 %v1253, 32
  %v1623 = vpop.permute.xlu0 %1622
  %1624 = vrot.lane.b32.xlu0 %v1297, 32
  %v1625 = vpop.permute.xlu0 %1624
  %1626 = vrot.lane.b32.xlu0 %v1300, 32
  %v1627 = vpop.permute.xlu0 %1626
  %1628 = vrot.lane.b32.xlu0 %v1344, 32
  %v1629 = vpop.permute.xlu0 %1628
  %1630 = vrot.lane.b32.xlu0 %v1347, 32
  %v1631 = vpop.permute.xlu0 %1630
  %1632 = vrot.lane.b32.xlu0 %v1391, 32
  %v1633 = vpop.permute.xlu0 %1632
  %1634 = vrot.lane.b32.xlu0 %v1394, 32
  %v1635 = vpop.permute.xlu0 %1634
  %vm1652 = vcmask 64512
  %v1653 = vsel %vm1652, %v1038, %v1413
  %v1654 = vsel %vm1652, %v1041, %v1415
  %v1655 = vsel %vm1652, %v1085, %v1417
  %v1656 = vsel %vm1652, %v1088, %v1419
  %v1657 = vsel %vm1652, %v1132, %v1421
  %v1658 = vsel %vm1652, %v1135, %v1423
  %v1659 = vsel %vm1652, %v1179, %v1425
  %v1660 = vsel %vm1652, %v1182, %v1427
  %v1661 = vsel %vm1652, %v1226, %v1429
  %v1662 = vsel %vm1652, %v1229, %v1431
  %v1663 = vsel %vm1652, %v1273, %v1433
  %v1664 = vsel %vm1652, %v1276, %v1435
  %v1665 = vsel %vm1652, %v1320, %v1437
  %v1666 = vsel %vm1652, %v1323, %v1439
  %v1667 = vsel %vm1652, %v1367, %v1441
  %v1668 = vsel %vm1652, %v1370, %v1443
  %v1669 = vsel %vm217, %v1653, %v1477
  %v1670 = vsel %vm217, %v1654, %v1479
  %v1671 = vsel %vm217, %v1655, %v1481
  %v1672 = vsel %vm217, %v1656, %v1483
  %v1673 = vsel %vm217, %v1657, %v1485
  %v1674 = vsel %vm217, %v1658, %v1487
  %v1675 = vsel %vm217, %v1659, %v1489
  %v1676 = vsel %vm217, %v1660, %v1491
  %v1677 = vsel %vm217, %v1661, %v1493
  %v1678 = vsel %vm217, %v1662, %v1495
  %v1679 = vsel %vm217, %v1663, %v1497
  %v1680 = vsel %vm217, %v1664, %v1499
  %v1681 = vsel %vm217, %v1665, %v1501
  %v1682 = vsel %vm217, %v1666, %v1503
  %v1683 = vsel %vm217, %v1667, %v1505
  %v1684 = vsel %vm217, %v1668, %v1507
  %vm1685 = vcmask 195584
  %v1686 = vsel %vm1685, %v1669, %v1541
  %v1687 = vsel %vm1685, %v1670, %v1543
  %v1688 = vsel %vm1685, %v1671, %v1545
  %v1689 = vsel %vm1685, %v1672, %v1547
  %v1690 = vsel %vm1685, %v1673, %v1549
  %v1691 = vsel %vm1685, %v1674, %v1551
  %v1692 = vsel %vm1685, %v1675, %v1553
  %v1693 = vsel %vm1685, %v1676, %v1555
  %v1694 = vsel %vm1685, %v1677, %v1557
  %v1695 = vsel %vm1685, %v1678, %v1559
  %v1696 = vsel %vm1685, %v1679, %v1561
  %v1697 = vsel %vm1685, %v1680, %v1563
  %v1698 = vsel %vm1685, %v1681, %v1565
  %v1699 = vsel %vm1685, %v1682, %v1567
  %v1700 = vsel %vm1685, %v1683, %v1569
  %v1701 = vsel %vm1685, %v1684, %v1571
  %vm1702 = vcmask 261120
  %v1703 = vsel %vm1702, %v1686, %v1605
  %v1704 = vsel %vm1702, %v1687, %v1607
  %v1705 = vsel %vm1702, %v1688, %v1609
  %v1706 = vsel %vm1702, %v1689, %v1611
  %v1707 = vsel %vm1702, %v1690, %v1613
  %v1708 = vsel %vm1702, %v1691, %v1615
  %v1709 = vsel %vm1702, %v1692, %v1617
  %v1710 = vsel %vm1702, %v1693, %v1619
  %v1711 = vsel %vm1702, %v1694, %v1621
  %v1712 = vsel %vm1702, %v1695, %v1623
  %v1713 = vsel %vm1702, %v1696, %v1625
  %v1714 = vsel %vm1702, %v1697, %v1627
  %v1715 = vsel %vm1702, %v1698, %v1629
  %v1716 = vsel %vm1702, %v1699, %v1631
  %v1717 = vsel %vm1702, %v1700, %v1633
  %v1718 = vsel %vm1702, %v1701, %v1635
  %v1719 = vld [vmem:[%s4] sm:$0xff]
  %v1720 = vld [vmem:[%s4 + $0x8] sm:$0xff]
  %v1721 = vld [vmem:[%s4 + $0x10] sm:$0xff]
  %v1722 = vld [vmem:[%s4 + $0x18] sm:$0xff]
  %v1723 = vld [vmem:[%s4 + $0x20] sm:$0xff]
  %v1724 = vld [vmem:[%s5] sm:$0x1]
  %v1726 = vperm.slane %v1724, 0
  %vm1728 = vcmask 326656
  %v1730 = vsel %vm1728, %v1703, 0
  %v1733 = vsel %vm1728, %v1704, 0
  %1735 = vmatpush.msra.mxu0 0.0
  %1736 = vmatpush.msra.mxu0 0.0
  %1737 = vmatpush.msra.mxu0 0.0
  %1738 = vmatpush.msra.mxu0 0.0
  %1739 = vmatpush.msra.mxu0 0.0
  %1740 = vmatpush.msra.mxu0 0.0
  %1741 = vmatpush.msra.mxu0 0.0
  %1742 = vmatpush.msra.mxu0 0.0
  %1743 = vmatpush.msra.mxu0 0.0
  %1744 = vmatpush.msra.mxu0 0.0
  %1745 = vmatpush.msra.mxu0 0.0
  %1746 = vmatpush.msra.mxu0 %v1723
  %1747 = vmatpush.msra.mxu0 %v1722
  %1748 = vmatpush.msra.mxu0 %v1721
  %1749 = vmatpush.msra.mxu0 %v1720
  %1750 = vmatpush.msra.mxu0 %v1719
  %1751 = vmatmul.f32.gmra.mxu0 %v1730
  %v1752 = vpop.f32.mrf.mxu0
  %v1753 = vadd.f32 %v1726, %v1752
  %1754 = vmatmul.f32.gmra.mxu0 %v1733
  %v1755 = vpop.f32.mrf.mxu0
  %v1756 = vadd.f32 %v1726, %v1755
  %1757 = vdwg.mxu0
  %v1758 = vmax.f32 %v1753, 0.0
  %v1759 = vmax.f32 %v1756, 0.0
  %v1761 = vrot.slane %v1758, 1
  %1762 = vrot.lane.b32.xlu0 %v1761, 8
  %v1763 = vpop.permute.xlu0 %1762
  %v1765 = vrot.slane %v1758, 2
  %1766 = vrot.lane.b32.xlu0 %v1765, 16
  %v1767 = vpop.permute.xlu0 %1766
  %v1769 = vrot.slane %v1758, 3
  %1770 = vrot.lane.b32.xlu0 %v1769, 24
  %v1771 = vpop.permute.xlu0 %1770
  %v1773 = vrot.slane %v1758, 4
  %1774 = vrot.lane.b32.xlu0 %v1773, 32
  %v1775 = vpop.permute.xlu0 %1774
  %v1777 = vrot.slane %v1758, 5
  %1778 = vrot.lane.b32.xlu0 %v1777, 40
  %v1779 = vpop.permute.xlu0 %1778
  %v1781 = vrot.slane %v1758, 6
  %1782 = vrot.lane.b32.xlu0 %v1781, 48
  %v1783 = vpop.permute.xlu0 %1782
  %v1785 = vrot.slane %v1758, 7
  %1786 = vrot.lane.b32.xlu0 %v1785, 56
  %v1787 = vpop.permute.xlu0 %1786
  %1790 = vrot.lane.b32.xlu0 %v1759, 64
  %v1791 = vpop.permute.xlu0 %1790
  %v1793 = vrot.slane %v1759, 1
  %1794 = vrot.lane.b32.xlu0 %v1793, 72
  %v1795 = vpop.permute.xlu0 %1794
  %v1797 = vrot.slane %v1759, 2
  %1798 = vrot.lane.b32.xlu0 %v1797, 80
  %v1799 = vpop.permute.xlu0 %1798
  %v1801 = vrot.slane %v1759, 3
  %1802 = vrot.lane.b32.xlu0 %v1801, 88
  %v1803 = vpop.permute.xlu0 %1802
  %v1805 = vrot.slane %v1759, 4
  %1806 = vrot.lane.b32.xlu0 %v1805, 96
  %v1807 = vpop.permute.xlu0 %1806
  %v1809 = vrot.slane %v1759, 5
  %1810 = vrot.lane.b32.xlu0 %v1809, 104
  %v1811 = vpop.permute.xlu0 %1810
  %v1813 = vrot.slane %v1759, 6
  %1814 = vrot.lane.b32.xlu0 %v1813, 112
  %v1815 = vpop.permute.xlu0 %1814
  %v1817 = vrot.slane %v1759, 7
  %1818 = vrot.lane.b32.xlu0 %v1817, 120
  %v1819 = vpop.permute.xlu0 %1818
  %v1821 = vsel %vm1652, %v1758, %v1763
  %v1822 = vsel %vm217, %v1821, %v1767
  %v1823 = vsel %vm1685, %v1822, %v1771
  %v1824 = vsel %vm1702, %v1823, %v1775
  %v1825 = vsel %vm1728, %v1824, %v1779
  %vm1826 = vcmask 392192
  %v1827 = vsel %vm1826, %v1825, %v1783
  %vm1828 = vcmask 457728
  %v1829 = vsel %vm1828, %v1827, %v1787
  %vm1830 = vcmask 523264
  %v1831 = vsel %vm1830, %v1829, %v1791
  %vm1832 = vcmask 588800
  %v1833 = vsel %vm1832, %v1831, %v1795
  %vm1834 = vcmask 654336
  %v1835 = vsel %vm1834, %v1833, %v1799
  %vm1836 = vcmask 719872
  %v1837 = vsel %vm1836, %v1835, %v1803
  %vm1838 = vcmask 785408
  %v1839 = vsel %vm1838, %v1837, %v1807
  %vm1840 = vcmask 850944
  %v1841 = vsel %vm1840, %v1839, %v1811
  %vm1842 = vcmask 916480
  %v1843 = vsel %vm1842, %v1841, %v1815
  %vm1844 = vcmask 982016
  %v1845 = vsel %vm1844, %v1843, %v1819
  %v1847 = vsel %vm1728, %v1705, 0
  %v1850 = vsel %vm1728, %v1706, 0
  %1852 = vmatpush.msra.mxu0 0.0
  %1853 = vmatpush.msra.mxu0 0.0
  %1854 = vmatpush.msra.mxu0 0.0
  %1855 = vmatpush.msra.mxu0 0.0
  %1856 = vmatpush.msra.mxu0 0.0
  %1857 = vmatpush.msra.mxu0 0.0
  %1858 = vmatpush.msra.mxu0 0.0
  %1859 = vmatpush.msra.mxu0 0.0
  %1860 = vmatpush.msra.mxu0 0.0
  %1861 = vmatpush.msra.mxu0 0.0
  %1862 = vmatpush.msra.mxu0 0.0
  %1863 = vmatpush.msra.mxu0 %v1723
  %1864 = vmatpush.msra.mxu0 %v1722
  %1865 = vmatpush.msra.mxu0 %v1721
  %1866 = vmatpush.msra.mxu0 %v1720
  %1867 = vmatpush.msra.mxu0 %v1719
  %1868 = vmatmul.f32.gmra.mxu0 %v1847
  %v1869 = vpop.f32.mrf.mxu0
  %v1870 = vadd.f32 %v1726, %v1869
  %1871 = vmatmul.f32.gmra.mxu0 %v1850
  %v1872 = vpop.f32.mrf.mxu0
  %v1873 = vadd.f32 %v1726, %v1872
  %1874 = vdwg.mxu0
  %v1875 = vmax.f32 %v1870, 0.0
  %v1876 = vmax.f32 %v1873, 0.0
  %v1878 = vrot.slane %v1875, 1
  %1879 = vrot.lane.b32.xlu0 %v1878, 8
  %v1880 = vpop.permute.xlu0 %1879
  %v1882 = vrot.slane %v1875, 2
  %1883 = vrot.lane.b32.xlu0 %v1882, 16
  %v1884 = vpop.permute.xlu0 %1883
  %v1886 = vrot.slane %v1875, 3
  %1887 = vrot.lane.b32.xlu0 %v1886, 24
  %v1888 = vpop.permute.xlu0 %1887
  %v1890 = vrot.slane %v1875, 4
  %1891 = vrot.lane.b32.xlu0 %v1890, 32
  %v1892 = vpop.permute.xlu0 %1891
  %v1894 = vrot.slane %v1875, 5
  %1895 = vrot.lane.b32.xlu0 %v1894, 40
  %v1896 = vpop.permute.xlu0 %1895
  %v1898 = vrot.slane %v1875, 6
  %1899 = vrot.lane.b32.xlu0 %v1898, 48
  %v1900 = vpop.permute.xlu0 %1899
  %v1902 = vrot.slane %v1875, 7
  %1903 = vrot.lane.b32.xlu0 %v1902, 56
  %v1904 = vpop.permute.xlu0 %1903
  %1907 = vrot.lane.b32.xlu0 %v1876, 64
  %v1908 = vpop.permute.xlu0 %1907
  %v1910 = vrot.slane %v1876, 1
  %1911 = vrot.lane.b32.xlu0 %v1910, 72
  %v1912 = vpop.permute.xlu0 %1911
  %v1914 = vrot.slane %v1876, 2
  %1915 = vrot.lane.b32.xlu0 %v1914, 80
  %v1916 = vpop.permute.xlu0 %1915
  %v1918 = vrot.slane %v1876, 3
  %1919 = vrot.lane.b32.xlu0 %v1918, 88
  %v1920 = vpop.permute.xlu0 %1919
  %v1922 = vrot.slane %v1876, 4
  %1923 = vrot.lane.b32.xlu0 %v1922, 96
  %v1924 = vpop.permute.xlu0 %1923
  %v1926 = vrot.slane %v1876, 5
  %1927 = vrot.lane.b32.xlu0 %v1926, 104
  %v1928 = vpop.permute.xlu0 %1927
  %v1930 = vrot.slane %v1876, 6
  %1931 = vrot.lane.b32.xlu0 %v1930, 112
  %v1932 = vpop.permute.xlu0 %1931
  %v1934 = vrot.slane %v1876, 7
  %1935 = vrot.lane.b32.xlu0 %v1934, 120
  %v1936 = vpop.permute.xlu0 %1935
  %v1938 = vsel %vm1652, %v1875, %v1880
  %v1939 = vsel %vm217, %v1938, %v1884
  %v1940 = vsel %vm1685, %v1939, %v1888
  %v1941 = vsel %vm1702, %v1940, %v1892
  %v1942 = vsel %vm1728, %v1941, %v1896
  %v1943 = vsel %vm1826, %v1942, %v1900
  %v1944 = vsel %vm1828, %v1943, %v1904
  %v1945 = vsel %vm1830, %v1944, %v1908
  %v1946 = vsel %vm1832, %v1945, %v1912
  %v1947 = vsel %vm1834, %v1946, %v1916
  %v1948 = vsel %vm1836, %v1947, %v1920
  %v1949 = vsel %vm1838, %v1948, %v1924
  %v1950 = vsel %vm1840, %v1949, %v1928
  %v1951 = vsel %vm1842, %v1950, %v1932
  %v1952 = vsel %vm1844, %v1951, %v1936
  %v1954 = vsel %vm1728, %v1707, 0
  %v1957 = vsel %vm1728, %v1708, 0
  %1959 = vmatpush.msra.mxu0 0.0
  %1960 = vmatpush.msra.mxu0 0.0
  %1961 = vmatpush.msra.mxu0 0.0
  %1962 = vmatpush.msra.mxu0 0.0
  %1963 = vmatpush.msra.mxu0 0.0
  %1964 = vmatpush.msra.mxu0 0.0
  %1965 = vmatpush.msra.mxu0 0.0
  %1966 = vmatpush.msra.mxu0 0.0
  %1967 = vmatpush.msra.mxu0 0.0
  %1968 = vmatpush.msra.mxu0 0.0
  %1969 = vmatpush.msra.mxu0 0.0
  %1970 = vmatpush.msra.mxu0 %v1723
  %1971 = vmatpush.msra.mxu0 %v1722
  %1972 = vmatpush.msra.mxu0 %v1721
  %1973 = vmatpush.msra.mxu0 %v1720
  %1974 = vmatpush.msra.mxu0 %v1719
  %1975 = vmatmul.f32.gmra.mxu0 %v1954
  %v1976 = vpop.f32.mrf.mxu0
  %v1977 = vadd.f32 %v1726, %v1976
  %1978 = vmatmul.f32.gmra.mxu0 %v1957
  %v1979 = vpop.f32.mrf.mxu0
  %v1980 = vadd.f32 %v1726, %v1979
  %1981 = vdwg.mxu0
  %v1982 = vmax.f32 %v1977, 0.0
  %v1983 = vmax.f32 %v1980, 0.0
  %v1985 = vrot.slane %v1982, 1
  %1986 = vrot.lane.b32.xlu0 %v1985, 8
  %v1987 = vpop.permute.xlu0 %1986
  %v1989 = vrot.slane %v1982, 2
  %1990 = vrot.lane.b32.xlu0 %v1989, 16
  %v1991 = vpop.permute.xlu0 %1990
  %v1993 = vrot.slane %v1982, 3
  %1994 = vrot.lane.b32.xlu0 %v1993, 24
  %v1995 = vpop.permute.xlu0 %1994
  %v1997 = vrot.slane %v1982, 4
  %1998 = vrot.lane.b32.xlu0 %v1997, 32
  %v1999 = vpop.permute.xlu0 %1998
  %v2001 = vrot.slane %v1982, 5
  %2002 = vrot.lane.b32.xlu0 %v2001, 40
  %v2003 = vpop.permute.xlu0 %2002
  %v2005 = vrot.slane %v1982, 6
  %2006 = vrot.lane.b32.xlu0 %v2005, 48
  %v2007 = vpop.permute.xlu0 %2006
  %v2009 = vrot.slane %v1982, 7
  %2010 = vrot.lane.b32.xlu0 %v2009, 56
  %v2011 = vpop.permute.xlu0 %2010
  %2014 = vrot.lane.b32.xlu0 %v1983, 64
  %v2015 = vpop.permute.xlu0 %2014
  %v2017 = vrot.slane %v1983, 1
  %2018 = vrot.lane.b32.xlu0 %v2017, 72
  %v2019 = vpop.permute.xlu0 %2018
  %v2021 = vrot.slane %v1983, 2
  %2022 = vrot.lane.b32.xlu0 %v2021, 80
  %v2023 = vpop.permute.xlu0 %2022
  %v2025 = vrot.slane %v1983, 3
  %2026 = vrot.lane.b32.xlu0 %v2025, 88
  %v2027 = vpop.permute.xlu0 %2026
  %v2029 = vrot.slane %v1983, 4
  %2030 = vrot.lane.b32.xlu0 %v2029, 96
  %v2031 = vpop.permute.xlu0 %2030
  %v2033 = vrot.slane %v1983, 5
  %2034 = vrot.lane.b32.xlu0 %v2033, 104
  %v2035 = vpop.permute.xlu0 %2034
  %v2037 = vrot.slane %v1983, 6
  %2038 = vrot.lane.b32.xlu0 %v2037, 112
  %v2039 = vpop.permute.xlu0 %2038
  %v2041 = vrot.slane %v1983, 7
  %2042 = vrot.lane.b32.xlu0 %v2041, 120
  %v2043 = vpop.permute.xlu0 %2042
  %v2045 = vsel %vm1652, %v1982, %v1987
  %v2046 = vsel %vm217, %v2045, %v1991
  %v2047 = vsel %vm1685, %v2046, %v1995
  %v2048 = vsel %vm1702, %v2047, %v1999
  %v2049 = vsel %vm1728, %v2048, %v2003
  %v2050 = vsel %vm1826, %v2049, %v2007
  %v2051 = vsel %vm1828, %v2050, %v2011
  %v2052 = vsel %vm1830, %v2051, %v2015
  %v2053 = vsel %vm1832, %v2052, %v2019
  %v2054 = vsel %vm1834, %v2053, %v2023
  %v2055 = vsel %vm1836, %v2054, %v2027
  %v2056 = vsel %vm1838, %v2055, %v2031
  %v2057 = vsel %vm1840, %v2056, %v2035
  %v2058 = vsel %vm1842, %v2057, %v2039
  %v2059 = vsel %vm1844, %v2058, %v2043
  %v2061 = vsel %vm1728, %v1709, 0
  %v2064 = vsel %vm1728, %v1710, 0
  %2066 = vmatpush.msra.mxu0 0.0
  %2067 = vmatpush.msra.mxu0 0.0
  %2068 = vmatpush.msra.mxu0 0.0
  %2069 = vmatpush.msra.mxu0 0.0
  %2070 = vmatpush.msra.mxu0 0.0
  %2071 = vmatpush.msra.mxu0 0.0
  %2072 = vmatpush.msra.mxu0 0.0
  %2073 = vmatpush.msra.mxu0 0.0
  %2074 = vmatpush.msra.mxu0 0.0
  %2075 = vmatpush.msra.mxu0 0.0
  %2076 = vmatpush.msra.mxu0 0.0
  %2077 = vmatpush.msra.mxu0 %v1723
  %2078 = vmatpush.msra.mxu0 %v1722
  %2079 = vmatpush.msra.mxu0 %v1721
  %2080 = vmatpush.msra.mxu0 %v1720
  %2081 = vmatpush.msra.mxu0 %v1719
  %2082 = vmatmul.f32.gmra.mxu0 %v2061
  %v2083 = vpop.f32.mrf.mxu0
  %v2084 = vadd.f32 %v1726, %v2083
  %2085 = vmatmul.f32.gmra.mxu0 %v2064
  %v2086 = vpop.f32.mrf.mxu0
  %v2087 = vadd.f32 %v1726, %v2086
  %2088 = vdwg.mxu0
  %v2089 = vmax.f32 %v2084, 0.0
  %v2090 = vmax.f32 %v2087, 0.0
  %v2092 = vrot.slane %v2089, 1
  %2093 = vrot.lane.b32.xlu0 %v2092, 8
  %v2094 = vpop.permute.xlu0 %2093
  %v2096 = vrot.slane %v2089, 2
  %2097 = vrot.lane.b32.xlu0 %v2096, 16
  %v2098 = vpop.permute.xlu0 %2097
  %v2100 = vrot.slane %v2089, 3
  %2101 = vrot.lane.b32.xlu0 %v2100, 24
  %v2102 = vpop.permute.xlu0 %2101
  %v2104 = vrot.slane %v2089, 4
  %2105 = vrot.lane.b32.xlu0 %v2104, 32
  %v2106 = vpop.permute.xlu0 %2105
  %v2108 = vrot.slane %v2089, 5
  %2109 = vrot.lane.b32.xlu0 %v2108, 40
  %v2110 = vpop.permute.xlu0 %2109
  %v2112 = vrot.slane %v2089, 6
  %2113 = vrot.lane.b32.xlu0 %v2112, 48
  %v2114 = vpop.permute.xlu0 %2113
  %v2116 = vrot.slane %v2089, 7
  %2117 = vrot.lane.b32.xlu0 %v2116, 56
  %v2118 = vpop.permute.xlu0 %2117
  %2121 = vrot.lane.b32.xlu0 %v2090, 64
  %v2122 = vpop.permute.xlu0 %2121
  %v2124 = vrot.slane %v2090, 1
  %2125 = vrot.lane.b32.xlu0 %v2124, 72
  %v2126 = vpop.permute.xlu0 %2125
  %v2128 = vrot.slane %v2090, 2
  %2129 = vrot.lane.b32.xlu0 %v2128, 80
  %v2130 = vpop.permute.xlu0 %2129
  %v2132 = vrot.slane %v2090, 3
  %2133 = vrot.lane.b32.xlu0 %v2132, 88
  %v2134 = vpop.permute.xlu0 %2133
  %v2136 = vrot.slane %v2090, 4
  %2137 = vrot.lane.b32.xlu0 %v2136, 96
  %v2138 = vpop.permute.xlu0 %2137
  %v2140 = vrot.slane %v2090, 5
  %2141 = vrot.lane.b32.xlu0 %v2140, 104
  %v2142 = vpop.permute.xlu0 %2141
  %v2144 = vrot.slane %v2090, 6
  %2145 = vrot.lane.b32.xlu0 %v2144, 112
  %v2146 = vpop.permute.xlu0 %2145
  %v2148 = vrot.slane %v2090, 7
  %2149 = vrot.lane.b32.xlu0 %v2148, 120
  %v2150 = vpop.permute.xlu0 %2149
  %v2152 = vsel %vm1652, %v2089, %v2094
  %v2153 = vsel %vm217, %v2152, %v2098
  %v2154 = vsel %vm1685, %v2153, %v2102
  %v2155 = vsel %vm1702, %v2154, %v2106
  %v2156 = vsel %vm1728, %v2155, %v2110
  %v2157 = vsel %vm1826, %v2156, %v2114
  %v2158 = vsel %vm1828, %v2157, %v2118
  %v2159 = vsel %vm1830, %v2158, %v2122
  %v2160 = vsel %vm1832, %v2159, %v2126
  %v2161 = vsel %vm1834, %v2160, %v2130
  %v2162 = vsel %vm1836, %v2161, %v2134
  %v2163 = vsel %vm1838, %v2162, %v2138
  %v2164 = vsel %vm1840, %v2163, %v2142
  %v2165 = vsel %vm1842, %v2164, %v2146
  %v2166 = vsel %vm1844, %v2165, %v2150
  %v2168 = vsel %vm1728, %v1711, 0
  %v2171 = vsel %vm1728, %v1712, 0
  %2173 = vmatpush.msra.mxu0 0.0
  %2174 = vmatpush.msra.mxu0 0.0
  %2175 = vmatpush.msra.mxu0 0.0
  %2176 = vmatpush.msra.mxu0 0.0
  %2177 = vmatpush.msra.mxu0 0.0
  %2178 = vmatpush.msra.mxu0 0.0
  %2179 = vmatpush.msra.mxu0 0.0
  %2180 = vmatpush.msra.mxu0 0.0
  %2181 = vmatpush.msra.mxu0 0.0
  %2182 = vmatpush.msra.mxu0 0.0
  %2183 = vmatpush.msra.mxu0 0.0
  %2184 = vmatpush.msra.mxu0 %v1723
  %2185 = vmatpush.msra.mxu0 %v1722
  %2186 = vmatpush.msra.mxu0 %v1721
  %2187 = vmatpush.msra.mxu0 %v1720
  %2188 = vmatpush.msra.mxu0 %v1719
  %2189 = vmatmul.f32.gmra.mxu0 %v2168
  %v2190 = vpop.f32.mrf.mxu0
  %v2191 = vadd.f32 %v1726, %v2190
  %2192 = vmatmul.f32.gmra.mxu0 %v2171
  %v2193 = vpop.f32.mrf.mxu0
  %v2194 = vadd.f32 %v1726, %v2193
  %2195 = vdwg.mxu0
  %v2196 = vmax.f32 %v2191, 0.0
  %v2197 = vmax.f32 %v2194, 0.0
  %v2199 = vrot.slane %v2196, 1
  %2200 = vrot.lane.b32.xlu0 %v2199, 8
  %v2201 = vpop.permute.xlu0 %2200
  %v2203 = vrot.slane %v2196, 2
  %2204 = vrot.lane.b32.xlu0 %v2203, 16
  %v2205 = vpop.permute.xlu0 %2204
  %v2207 = vrot.slane %v2196, 3
  %2208 = vrot.lane.b32.xlu0 %v2207, 24
  %v2209 = vpop.permute.xlu0 %2208
  %v2211 = vrot.slane %v2196, 4
  %2212 = vrot.lane.b32.xlu0 %v2211, 32
  %v2213 = vpop.permute.xlu0 %2212
  %v2215 = vrot.slane %v2196, 5
  %2216 = vrot.lane.b32.xlu0 %v2215, 40
  %v2217 = vpop.permute.xlu0 %2216
  %v2219 = vrot.slane %v2196, 6
  %2220 = vrot.lane.b32.xlu0 %v2219, 48
  %v2221 = vpop.permute.xlu0 %2220
  %v2223 = vrot.slane %v2196, 7
  %2224 = vrot.lane.b32.xlu0 %v2223, 56
  %v2225 = vpop.permute.xlu0 %2224
  %2228 = vrot.lane.b32.xlu0 %v2197, 64
  %v2229 = vpop.permute.xlu0 %2228
  %v2231 = vrot.slane %v2197, 1
  %2232 = vrot.lane.b32.xlu0 %v2231, 72
  %v2233 = vpop.permute.xlu0 %2232
  %v2235 = vrot.slane %v2197, 2
  %2236 = vrot.lane.b32.xlu0 %v2235, 80
  %v2237 = vpop.permute.xlu0 %2236
  %v2239 = vrot.slane %v2197, 3
  %2240 = vrot.lane.b32.xlu0 %v2239, 88
  %v2241 = vpop.permute.xlu0 %2240
  %v2243 = vrot.slane %v2197, 4
  %2244 = vrot.lane.b32.xlu0 %v2243, 96
  %v2245 = vpop.permute.xlu0 %2244
  %v2247 = vrot.slane %v2197, 5
  %2248 = vrot.lane.b32.xlu0 %v2247, 104
  %v2249 = vpop.permute.xlu0 %2248
  %v2251 = vrot.slane %v2197, 6
  %2252 = vrot.lane.b32.xlu0 %v2251, 112
  %v2253 = vpop.permute.xlu0 %2252
  %v2255 = vrot.slane %v2197, 7
  %2256 = vrot.lane.b32.xlu0 %v2255, 120
  %v2257 = vpop.permute.xlu0 %2256
  %v2259 = vsel %vm1652, %v2196, %v2201
  %v2260 = vsel %vm217, %v2259, %v2205
  %v2261 = vsel %vm1685, %v2260, %v2209
  %v2262 = vsel %vm1702, %v2261, %v2213
  %v2263 = vsel %vm1728, %v2262, %v2217
  %v2264 = vsel %vm1826, %v2263, %v2221
  %v2265 = vsel %vm1828, %v2264, %v2225
  %v2266 = vsel %vm1830, %v2265, %v2229
  %v2267 = vsel %vm1832, %v2266, %v2233
  %v2268 = vsel %vm1834, %v2267, %v2237
  %v2269 = vsel %vm1836, %v2268, %v2241
  %v2270 = vsel %vm1838, %v2269, %v2245
  %v2271 = vsel %vm1840, %v2270, %v2249
  %v2272 = vsel %vm1842, %v2271, %v2253
  %v2273 = vsel %vm1844, %v2272, %v2257
  %v2275 = vsel %vm1728, %v1713, 0
  %v2278 = vsel %vm1728, %v1714, 0
  %2280 = vmatpush.msra.mxu0 0.0
  %2281 = vmatpush.msra.mxu0 0.0
  %2282 = vmatpush.msra.mxu0 0.0
  %2283 = vmatpush.msra.mxu0 0.0
  %2284 = vmatpush.msra.mxu0 0.0
  %2285 = vmatpush.msra.mxu0 0.0
  %2286 = vmatpush.msra.mxu0 0.0
  %2287 = vmatpush.msra.mxu0 0.0
  %2288 = vmatpush.msra.mxu0 0.0
  %2289 = vmatpush.msra.mxu0 0.0
  %2290 = vmatpush.msra.mxu0 0.0
  %2291 = vmatpush.msra.mxu0 %v1723
  %2292 = vmatpush.msra.mxu0 %v1722
  %2293 = vmatpush.msra.mxu0 %v1721
  %2294 = vmatpush.msra.mxu0 %v1720
  %2295 = vmatpush.msra.mxu0 %v1719
  %2296 = vmatmul.f32.gmra.mxu0 %v2275
  %v2297 = vpop.f32.mrf.mxu0
  %v2298 = vadd.f32 %v1726, %v2297
  %2299 = vmatmul.f32.gmra.mxu0 %v2278
  %v2300 = vpop.f32.mrf.mxu0
  %v2301 = vadd.f32 %v1726, %v2300
  %2302 = vdwg.mxu0
  %v2303 = vmax.f32 %v2298, 0.0
  %v2304 = vmax.f32 %v2301, 0.0
  %v2306 = vrot.slane %v2303, 1
  %2307 = vrot.lane.b32.xlu0 %v2306, 8
  %v2308 = vpop.permute.xlu0 %2307
  %v2310 = vrot.slane %v2303, 2
  %2311 = vrot.lane.b32.xlu0 %v2310, 16
  %v2312 = vpop.permute.xlu0 %2311
  %v2314 = vrot.slane %v2303, 3
  %2315 = vrot.lane.b32.xlu0 %v2314, 24
  %v2316 = vpop.permute.xlu0 %2315
  %v2318 = vrot.slane %v2303, 4
  %2319 = vrot.lane.b32.xlu0 %v2318, 32
  %v2320 = vpop.permute.xlu0 %2319
  %v2322 = vrot.slane %v2303, 5
  %2323 = vrot.lane.b32.xlu0 %v2322, 40
  %v2324 = vpop.permute.xlu0 %2323
  %v2326 = vrot.slane %v2303, 6
  %2327 = vrot.lane.b32.xlu0 %v2326, 48
  %v2328 = vpop.permute.xlu0 %2327
  %v2330 = vrot.slane %v2303, 7
  %2331 = vrot.lane.b32.xlu0 %v2330, 56
  %v2332 = vpop.permute.xlu0 %2331
  %2335 = vrot.lane.b32.xlu0 %v2304, 64
  %v2336 = vpop.permute.xlu0 %2335
  %v2338 = vrot.slane %v2304, 1
  %2339 = vrot.lane.b32.xlu0 %v2338, 72
  %v2340 = vpop.permute.xlu0 %2339
  %v2342 = vrot.slane %v2304, 2
  %2343 = vrot.lane.b32.xlu0 %v2342, 80
  %v2344 = vpop.permute.xlu0 %2343
  %v2346 = vrot.slane %v2304, 3
  %2347 = vrot.lane.b32.xlu0 %v2346, 88
  %v2348 = vpop.permute.xlu0 %2347
  %v2350 = vrot.slane %v2304, 4
  %2351 = vrot.lane.b32.xlu0 %v2350, 96
  %v2352 = vpop.permute.xlu0 %2351
  %v2354 = vrot.slane %v2304, 5
  %2355 = vrot.lane.b32.xlu0 %v2354, 104
  %v2356 = vpop.permute.xlu0 %2355
  %v2358 = vrot.slane %v2304, 6
  %2359 = vrot.lane.b32.xlu0 %v2358, 112
  %v2360 = vpop.permute.xlu0 %2359
  %v2362 = vrot.slane %v2304, 7
  %2363 = vrot.lane.b32.xlu0 %v2362, 120
  %v2364 = vpop.permute.xlu0 %2363
  %v2366 = vsel %vm1652, %v2303, %v2308
  %v2367 = vsel %vm217, %v2366, %v2312
  %v2368 = vsel %vm1685, %v2367, %v2316
  %v2369 = vsel %vm1702, %v2368, %v2320
  %v2370 = vsel %vm1728, %v2369, %v2324
  %v2371 = vsel %vm1826, %v2370, %v2328
  %v2372 = vsel %vm1828, %v2371, %v2332
  %v2373 = vsel %vm1830, %v2372, %v2336
  %v2374 = vsel %vm1832, %v2373, %v2340
  %v2375 = vsel %vm1834, %v2374, %v2344
  %v2376 = vsel %vm1836, %v2375, %v2348
  %v2377 = vsel %vm1838, %v2376, %v2352
  %v2378 = vsel %vm1840, %v2377, %v2356
  %v2379 = vsel %vm1842, %v2378, %v2360
  %v2380 = vsel %vm1844, %v2379, %v2364
  %v2382 = vsel %vm1728, %v1715, 0
  %v2385 = vsel %vm1728, %v1716, 0
  %2387 = vmatpush.msra.mxu0 0.0
  %2388 = vmatpush.msra.mxu0 0.0
  %2389 = vmatpush.msra.mxu0 0.0
  %2390 = vmatpush.msra.mxu0 0.0
  %2391 = vmatpush.msra.mxu0 0.0
  %2392 = vmatpush.msra.mxu0 0.0
  %2393 = vmatpush.msra.mxu0 0.0
  %2394 = vmatpush.msra.mxu0 0.0
  %2395 = vmatpush.msra.mxu0 0.0
  %2396 = vmatpush.msra.mxu0 0.0
  %2397 = vmatpush.msra.mxu0 0.0
  %2398 = vmatpush.msra.mxu0 %v1723
  %2399 = vmatpush.msra.mxu0 %v1722
  %2400 = vmatpush.msra.mxu0 %v1721
  %2401 = vmatpush.msra.mxu0 %v1720
  %2402 = vmatpush.msra.mxu0 %v1719
  %2403 = vmatmul.f32.gmra.mxu0 %v2382
  %v2404 = vpop.f32.mrf.mxu0
  %v2405 = vadd.f32 %v1726, %v2404
  %2406 = vmatmul.f32.gmra.mxu0 %v2385
  %v2407 = vpop.f32.mrf.mxu0
  %v2408 = vadd.f32 %v1726, %v2407
  %2409 = vdwg.mxu0
  %v2410 = vmax.f32 %v2405, 0.0
  %v2411 = vmax.f32 %v2408, 0.0
  %v2413 = vrot.slane %v2410, 1
  %2414 = vrot.lane.b32.xlu0 %v2413, 8
  %v2415 = vpop.permute.xlu0 %2414
  %v2417 = vrot.slane %v2410, 2
  %2418 = vrot.lane.b32.xlu0 %v2417, 16
  %v2419 = vpop.permute.xlu0 %2418
  %v2421 = vrot.slane %v2410, 3
  %2422 = vrot.lane.b32.xlu0 %v2421, 24
  %v2423 = vpop.permute.xlu0 %2422
  %v2425 = vrot.slane %v2410, 4
  %2426 = vrot.lane.b32.xlu0 %v2425, 32
  %v2427 = vpop.permute.xlu0 %2426
  %v2429 = vrot.slane %v2410, 5
  %2430 = vrot.lane.b32.xlu0 %v2429, 40
  %v2431 = vpop.permute.xlu0 %2430
  %v2433 = vrot.slane %v2410, 6
  %2434 = vrot.lane.b32.xlu0 %v2433, 48
  %v2435 = vpop.permute.xlu0 %2434
  %v2437 = vrot.slane %v2410, 7
  %2438 = vrot.lane.b32.xlu0 %v2437, 56
  %v2439 = vpop.permute.xlu0 %2438
  %2442 = vrot.lane.b32.xlu0 %v2411, 64
  %v2443 = vpop.permute.xlu0 %2442
  %v2445 = vrot.slane %v2411, 1
  %2446 = vrot.lane.b32.xlu0 %v2445, 72
  %v2447 = vpop.permute.xlu0 %2446
  %v2449 = vrot.slane %v2411, 2
  %2450 = vrot.lane.b32.xlu0 %v2449, 80
  %v2451 = vpop.permute.xlu0 %2450
  %v2453 = vrot.slane %v2411, 3
  %2454 = vrot.lane.b32.xlu0 %v2453, 88
  %v2455 = vpop.permute.xlu0 %2454
  %v2457 = vrot.slane %v2411, 4
  %2458 = vrot.lane.b32.xlu0 %v2457, 96
  %v2459 = vpop.permute.xlu0 %2458
  %v2461 = vrot.slane %v2411, 5
  %2462 = vrot.lane.b32.xlu0 %v2461, 104
  %v2463 = vpop.permute.xlu0 %2462
  %v2465 = vrot.slane %v2411, 6
  %2466 = vrot.lane.b32.xlu0 %v2465, 112
  %v2467 = vpop.permute.xlu0 %2466
  %v2469 = vrot.slane %v2411, 7
  %2470 = vrot.lane.b32.xlu0 %v2469, 120
  %v2471 = vpop.permute.xlu0 %2470
  %v2473 = vsel %vm1652, %v2410, %v2415
  %v2474 = vsel %vm217, %v2473, %v2419
  %v2475 = vsel %vm1685, %v2474, %v2423
  %v2476 = vsel %vm1702, %v2475, %v2427
  %v2477 = vsel %vm1728, %v2476, %v2431
  %v2478 = vsel %vm1826, %v2477, %v2435
  %v2479 = vsel %vm1828, %v2478, %v2439
  %v2480 = vsel %vm1830, %v2479, %v2443
  %v2481 = vsel %vm1832, %v2480, %v2447
  %v2482 = vsel %vm1834, %v2481, %v2451
  %v2483 = vsel %vm1836, %v2482, %v2455
  %v2484 = vsel %vm1838, %v2483, %v2459
  %v2485 = vsel %vm1840, %v2484, %v2463
  %v2486 = vsel %vm1842, %v2485, %v2467
  %v2487 = vsel %vm1844, %v2486, %v2471
  %v2489 = vsel %vm1728, %v1717, 0
  %v2492 = vsel %vm1728, %v1718, 0
  %2494 = vmatpush.msra.mxu0 0.0
  %2495 = vmatpush.msra.mxu0 0.0
  %2496 = vmatpush.msra.mxu0 0.0
  %2497 = vmatpush.msra.mxu0 0.0
  %2498 = vmatpush.msra.mxu0 0.0
  %2499 = vmatpush.msra.mxu0 0.0
  %2500 = vmatpush.msra.mxu0 0.0
  %2501 = vmatpush.msra.mxu0 0.0
  %2502 = vmatpush.msra.mxu0 0.0
  %2503 = vmatpush.msra.mxu0 0.0
  %2504 = vmatpush.msra.mxu0 0.0
  %2505 = vmatpush.msra.mxu0 %v1723
  %2506 = vmatpush.msra.mxu0 %v1722
  %2507 = vmatpush.msra.mxu0 %v1721
  %2508 = vmatpush.msra.mxu0 %v1720
  %2509 = vmatpush.msra.mxu0 %v1719
  %2510 = vmatmul.f32.gmra.mxu0 %v2489
  %v2511 = vpop.f32.mrf.mxu0
  %v2512 = vadd.f32 %v1726, %v2511
  %2513 = vmatmul.f32.gmra.mxu0 %v2492
  %v2514 = vpop.f32.mrf.mxu0
  %v2515 = vadd.f32 %v1726, %v2514
  %2516 = vdwg.mxu0
  %v2517 = vmax.f32 %v2512, 0.0
  %v2518 = vmax.f32 %v2515, 0.0
  %v2520 = vrot.slane %v2517, 1
  %2521 = vrot.lane.b32.xlu0 %v2520, 8
  %v2522 = vpop.permute.xlu0 %2521
  %v2524 = vrot.slane %v2517, 2
  %2525 = vrot.lane.b32.xlu0 %v2524, 16
  %v2526 = vpop.permute.xlu0 %2525
  %v2528 = vrot.slane %v2517, 3
  %2529 = vrot.lane.b32.xlu0 %v2528, 24
  %v2530 = vpop.permute.xlu0 %2529
  %v2532 = vrot.slane %v2517, 4
  %2533 = vrot.lane.b32.xlu0 %v2532, 32
  %v2534 = vpop.permute.xlu0 %2533
  %v2536 = vrot.slane %v2517, 5
  %2537 = vrot.lane.b32.xlu0 %v2536, 40
  %v2538 = vpop.permute.xlu0 %2537
  %v2540 = vrot.slane %v2517, 6
  %2541 = vrot.lane.b32.xlu0 %v2540, 48
  %v2542 = vpop.permute.xlu0 %2541
  %v2544 = vrot.slane %v2517, 7
  %2545 = vrot.lane.b32.xlu0 %v2544, 56
  %v2546 = vpop.permute.xlu0 %2545
  %2549 = vrot.lane.b32.xlu0 %v2518, 64
  %v2550 = vpop.permute.xlu0 %2549
  %v2552 = vrot.slane %v2518, 1
  %2553 = vrot.lane.b32.xlu0 %v2552, 72
  %v2554 = vpop.permute.xlu0 %2553
  %v2556 = vrot.slane %v2518, 2
  %2557 = vrot.lane.b32.xlu0 %v2556, 80
  %v2558 = vpop.permute.xlu0 %2557
  %v2560 = vrot.slane %v2518, 3
  %2561 = vrot.lane.b32.xlu0 %v2560, 88
  %v2562 = vpop.permute.xlu0 %2561
  %v2564 = vrot.slane %v2518, 4
  %2565 = vrot.lane.b32.xlu0 %v2564, 96
  %v2566 = vpop.permute.xlu0 %2565
  %v2568 = vrot.slane %v2518, 5
  %2569 = vrot.lane.b32.xlu0 %v2568, 104
  %v2570 = vpop.permute.xlu0 %2569
  %v2572 = vrot.slane %v2518, 6
  %2573 = vrot.lane.b32.xlu0 %v2572, 112
  %v2574 = vpop.permute.xlu0 %2573
  %v2576 = vrot.slane %v2518, 7
  %2577 = vrot.lane.b32.xlu0 %v2576, 120
  %v2578 = vpop.permute.xlu0 %2577
  %v2580 = vsel %vm1652, %v2517, %v2522
  %v2581 = vsel %vm217, %v2580, %v2526
  %v2582 = vsel %vm1685, %v2581, %v2530
  %v2583 = vsel %vm1702, %v2582, %v2534
  %v2584 = vsel %vm1728, %v2583, %v2538
  %v2585 = vsel %vm1826, %v2584, %v2542
  %v2586 = vsel %vm1828, %v2585, %v2546
  %v2587 = vsel %vm1830, %v2586, %v2550
  %v2588 = vsel %vm1832, %v2587, %v2554
  %v2589 = vsel %vm1834, %v2588, %v2558
  %v2590 = vsel %vm1836, %v2589, %v2562
  %v2591 = vsel %vm1838, %v2590, %v2566
  %v2592 = vsel %vm1840, %v2591, %v2570
  %v2593 = vsel %vm1842, %v2592, %v2574
  %v2594 = vsel %vm1844, %v2593, %v2578
  %v2596 = vrot.slane %v1952, 7
  %v2599 = vrot.slane %v2059, 6
  %v2602 = vrot.slane %v2166, 5
  %v2605 = vrot.slane %v2273, 4
  %v2608 = vrot.slane %v2380, 3
  %v2611 = vrot.slane %v2487, 2
  %v2614 = vrot.slane %v2594, 1
  %vm2616 = vcmask 1040384
  %v2617 = vsel %vm2616, %v1845, %v2596
  %vm2618 = vcmask 1041408
  %v2619 = vsel %vm2618, %v2617, %v2599
  %vm2620 = vcmask 1042432
  %v2621 = vsel %vm2620, %v2619, %v2602
  %vm2622 = vcmask 1043456
  %v2623 = vsel %vm2622, %v2621, %v2605
  %vm2624 = vcmask 1044480
  %v2625 = vsel %vm2624, %v2623, %v2608
  %vm2626 = vcmask 1045504
  %v2627 = vsel %vm2626, %v2625, %v2611
  %vm2628 = vcmask 1046528
  %v2629 = vsel %vm2628, %v2627, %v2614
  %v2630 = vld [vmem:[%s6] sm:$0xff]
  %v2631 = vld [vmem:[%s6 + $0x8] sm:$0xff]
  %v2632 = vld [vmem:[%s6 + $0x10] sm:$0xff]
  %v2633 = vld [vmem:[%s6 + $0x18] sm:$0xff]
  %v2634 = vld [vmem:[%s6 + $0x20] sm:$0xff]
  %v2635 = vld [vmem:[%s6 + $0x28] sm:$0xff]
  %v2636 = vld [vmem:[%s6 + $0x30] sm:$0xff]
  %v2637 = vld [vmem:[%s6 + $0x38] sm:$0xff]
  %v2638 = vld [vmem:[%s6 + $0x40] sm:$0xff]
  %v2639 = vld [vmem:[%s6 + $0x48] sm:$0xff]
  %v2640 = vld [vmem:[%s6 + $0x50] sm:$0xff]
  %v2641 = vld [vmem:[%s6 + $0x58] sm:$0xff]
  %v2642 = vld [vmem:[%s6 + $0x60] sm:$0xff]
  %v2643 = vld [vmem:[%s6 + $0x68] sm:$0xff]
  %v2644 = vld [vmem:[%s6 + $0x70] sm:$0xff]
  %v2645 = vld [vmem:[%s6 + $0x78] sm:$0xff]
  %v2646 = vld [vmem:[%s6 + $0x80] sm:$0xff]
  %v2647 = vld [vmem:[%s6 + $0x88] sm:$0xff]
  %v2648 = vld [vmem:[%s6 + $0x90] sm:$0xff]
  %v2649 = vld [vmem:[%s6 + $0x98] sm:$0xff]
  %v2650 = vld [vmem:[%s6 + $0xa0] sm:$0xff]
  %v2651 = vld [vmem:[%s6 + $0xa8] sm:$0xff]
  %v2652 = vld [vmem:[%s6 + $0xb0] sm:$0xff]
  %v2653 = vld [vmem:[%s6 + $0xb8] sm:$0xff]
  %v2654 = vld [vmem:[%s6 + $0xc0] sm:$0xff]
  %v2655 = vld [vmem:[%s6 + $0xc8] sm:$0xff]
  %v2656 = vld [vmem:[%s6 + $0xd0] sm:$0xff]
  %v2657 = vld [vmem:[%s6 + $0xd8] sm:$0xff]
  %v2658 = vld [vmem:[%s6 + $0xe0] sm:$0xff]
  %v2659 = vld [vmem:[%s6 + $0xe8] sm:$0xff]
  %v2660 = vld [vmem:[%s6 + $0xf0] sm:$0xff]
  %v2661 = vld [vmem:[%s6 + $0xf8] sm:$0xff]
  %v2662 = vld [vmem:[%s6 + $0x100] sm:$0xff]
  %v2663 = vld [vmem:[%s6 + $0x108] sm:$0xff]
  %v2664 = vld [vmem:[%s6 + $0x110] sm:$0xff]
  %v2665 = vld [vmem:[%s6 + $0x118] sm:$0xff]
  %v2666 = vld [vmem:[%s6 + $0x120] sm:$0xff]
  %v2667 = vld [vmem:[%s6 + $0x128] sm:$0xff]
  %v2668 = vld [vmem:[%s6 + $0x130] sm:$0xff]
  %v2669 = vld [vmem:[%s6 + $0x138] sm:$0xff]
  %v2670 = vld [vmem:[%s6 + $0x140] sm:$0xff]
  %v2671 = vld [vmem:[%s6 + $0x148] sm:$0xff]
  %v2672 = vld [vmem:[%s6 + $0x150] sm:$0xff]
  %v2673 = vld [vmem:[%s6 + $0x158] sm:$0xff]
  %v2674 = vld [vmem:[%s6 + $0x160] sm:$0xff]
  %v2675 = vld [vmem:[%s6 + $0x168] sm:$0xff]
  %v2676 = vld [vmem:[%s6 + $0x170] sm:$0xff]
  %v2677 = vld [vmem:[%s6 + $0x178] sm:$0xff]
  %v2678 = vld [vmem:[%s6 + $0x180] sm:$0xff]
  %v2679 = vld [vmem:[%s6 + $0x188] sm:$0xff]
  %v2680 = vld [vmem:[%s6 + $0x190] sm:$0xff]
  %v2681 = vld [vmem:[%s6 + $0x198] sm:$0xff]
  %v2682 = vld [vmem:[%s6 + $0x1a0] sm:$0xff]
  %v2683 = vld [vmem:[%s6 + $0x1a8] sm:$0xff]
  %v2684 = vld [vmem:[%s6 + $0x1b0] sm:$0xff]
  %v2685 = vld [vmem:[%s6 + $0x1b8] sm:$0xff]
  %v2686 = vld [vmem:[%s6 + $0x1c0] sm:$0xff]
  %v2687 = vld [vmem:[%s6 + $0x1c8] sm:$0xff]
  %v2688 = vld [vmem:[%s6 + $0x1d0] sm:$0xff]
  %v2689 = vld [vmem:[%s6 + $0x1d8] sm:$0xff]
  %v2690 = vld [vmem:[%s6 + $0x1e0] sm:$0xff]
  %v2691 = vld [vmem:[%s6 + $0x1e8] sm:$0xff]
  %v2692 = vld [vmem:[%s6 + $0x1f0] sm:$0xff]
  %v2693 = vld [vmem:[%s6 + $0x1f8] sm:$0xff]
  %v2694 = vld [vmem:[%s6 + $0x200] sm:$0xff]
  %v2695 = vld [vmem:[%s6 + $0x208] sm:$0xff]
  %v2696 = vld [vmem:[%s6 + $0x210] sm:$0xff]
  %v2697 = vld [vmem:[%s6 + $0x218] sm:$0xff]
  %v2698 = vld [vmem:[%s6 + $0x220] sm:$0xff]
  %v2699 = vld [vmem:[%s6 + $0x228] sm:$0xff]
  %v2700 = vld [vmem:[%s6 + $0x230] sm:$0xff]
  %v2701 = vld [vmem:[%s6 + $0x238] sm:$0xff]
  %v2702 = vld [vmem:[%s6 + $0x240] sm:$0xff]
  %v2703 = vld [vmem:[%s6 + $0x248] sm:$0xff]
  %v2704 = vld [vmem:[%s6 + $0x250] sm:$0xff]
  %v2705 = vld [vmem:[%s6 + $0x258] sm:$0xff]
  %v2706 = vld [vmem:[%s6 + $0x260] sm:$0xff]
  %v2707 = vld [vmem:[%s6 + $0x268] sm:$0xff]
  %v2708 = vld [vmem:[%s6 + $0x270] sm:$0xff]
  %v2709 = vld [vmem:[%s6 + $0x278] sm:$0xff]
  %v2710 = vld [vmem:[%s6 + $0x280] sm:$0xff]
  %v2711 = vld [vmem:[%s6 + $0x288] sm:$0xff]
  %v2712 = vld [vmem:[%s6 + $0x290] sm:$0xff]
  %v2713 = vld [vmem:[%s6 + $0x298] sm:$0xff]
  %v2714 = vld [vmem:[%s6 + $0x2a0] sm:$0xff]
  %v2715 = vld [vmem:[%s6 + $0x2a8] sm:$0xff]
  %v2716 = vld [vmem:[%s6 + $0x2b0] sm:$0xff]
  %v2717 = vld [vmem:[%s6 + $0x2b8] sm:$0xff]
  %v2718 = vld [vmem:[%s6 + $0x2c0] sm:$0xff]
  %v2719 = vld [vmem:[%s6 + $0x2c8] sm:$0xff]
  %v2720 = vld [vmem:[%s6 + $0x2d0] sm:$0xff]
  %v2721 = vld [vmem:[%s6 + $0x2d8] sm:$0xff]
  %v2722 = vld [vmem:[%s6 + $0x2e0] sm:$0xff]
  %v2723 = vld [vmem:[%s6 + $0x2e8] sm:$0xff]
  %v2724 = vld [vmem:[%s6 + $0x2f0] sm:$0xff]
  %v2725 = vld [vmem:[%s6 + $0x2f8] sm:$0xff]
  %v2726 = vld [vmem:[%s6 + $0x300] sm:$0xff]
  %v2727 = vld [vmem:[%s6 + $0x308] sm:$0xff]
  %v2728 = vld [vmem:[%s6 + $0x310] sm:$0xff]
  %v2729 = vld [vmem:[%s6 + $0x318] sm:$0xff]
  %v2730 = vld [vmem:[%s6 + $0x320] sm:$0xff]
  %v2731 = vld [vmem:[%s6 + $0x328] sm:$0xff]
  %v2732 = vld [vmem:[%s6 + $0x330] sm:$0xff]
  %v2733 = vld [vmem:[%s6 + $0x338] sm:$0xff]
  %v2734 = vld [vmem:[%s6 + $0x340] sm:$0xff]
  %v2735 = vld [vmem:[%s6 + $0x348] sm:$0xff]
  %v2736 = vld [vmem:[%s6 + $0x350] sm:$0xff]
  %v2737 = vld [vmem:[%s6 + $0x358] sm:$0xff]
  %v2738 = vld [vmem:[%s6 + $0x360] sm:$0xff]
  %v2739 = vld [vmem:[%s6 + $0x368] sm:$0xff]
  %v2740 = vld [vmem:[%s6 + $0x370] sm:$0xff]
  %v2741 = vld [vmem:[%s6 + $0x378] sm:$0xff]
  %v2742 = vld [vmem:[%s6 + $0x380] sm:$0xff]
  %v2743 = vld [vmem:[%s6 + $0x388] sm:$0xff]
  %v2744 = vld [vmem:[%s6 + $0x390] sm:$0xff]
  %v2745 = vld [vmem:[%s6 + $0x398] sm:$0xff]
  %v2746 = vld [vmem:[%s6 + $0x3a0] sm:$0xff]
  %v2747 = vld [vmem:[%s6 + $0x3a8] sm:$0xff]
  %v2748 = vld [vmem:[%s6 + $0x3b0] sm:$0xff]
  %v2749 = vld [vmem:[%s6 + $0x3b8] sm:$0xff]
  %v2750 = vld [vmem:[%s6 + $0x3c0] sm:$0xff]
  %v2751 = vld [vmem:[%s6 + $0x3c8] sm:$0xff]
  %v2752 = vld [vmem:[%s6 + $0x3d0] sm:$0xff]
  %v2753 = vld [vmem:[%s6 + $0x3d8] sm:$0xff]
  %v2754 = vld [vmem:[%s6 + $0x3e0] sm:$0xff]
  %v2755 = vld [vmem:[%s6 + $0x3e8] sm:$0xff]
  %v2756 = vld [vmem:[%s6 + $0x3f0] sm:$0xff]
  %v2757 = vld [vmem:[%s6 + $0x3f8] sm:$0xff]
  %v2758 = vld [vmem:[%s7] sm:$0xff]
  %v2760 = vperm.slane %v2758, 0
  %v2761 = vperm.slane %v2758, 1
  %v2762 = vperm.slane %v2758, 2
  %v2763 = vperm.slane %v2758, 3
  %v2764 = vperm.slane %v2758, 4
  %v2765 = vperm.slane %v2758, 5
  %v2766 = vperm.slane %v2758, 6
  %v2767 = vperm.slane %v2758, 7
  %2776 = vmatpush.msra.mxu0 %v2750
  %2777 = vmatpush.msra.mxu0 %v2742
  %2778 = vmatpush.msra.mxu0 %v2734
  %2779 = vmatpush.msra.mxu0 %v2726
  %2780 = vmatpush.msra.mxu0 %v2718
  %2781 = vmatpush.msra.mxu0 %v2710
  %2782 = vmatpush.msra.mxu0 %v2702
  %2783 = vmatpush.msra.mxu0 %v2694
  %2784 = vmatpush.msra.mxu0 %v2686
  %2785 = vmatpush.msra.mxu0 %v2678
  %2786 = vmatpush.msra.mxu0 %v2670
  %2787 = vmatpush.msra.mxu0 %v2662
  %2788 = vmatpush.msra.mxu0 %v2654
  %2789 = vmatpush.msra.mxu0 %v2646
  %2790 = vmatpush.msra.mxu0 %v2638
  %2791 = vmatpush.msra.mxu0 %v2630
  %2792 = vmatmul.f32.gmra.mxu0 %v2629
  %v2793 = vpop.f32.mrf.mxu0
  %v2794 = vadd.f32 %v2760, %v2793
  %2795 = vdwg.mxu0
  %2796 = vmatpush.msra.mxu0 %v2751
  %2797 = vmatpush.msra.mxu0 %v2743
  %2798 = vmatpush.msra.mxu0 %v2735
  %2799 = vmatpush.msra.mxu0 %v2727
  %2800 = vmatpush.msra.mxu0 %v2719
  %2801 = vmatpush.msra.mxu0 %v2711
  %2802 = vmatpush.msra.mxu0 %v2703
  %2803 = vmatpush.msra.mxu0 %v2695
  %2804 = vmatpush.msra.mxu0 %v2687
  %2805 = vmatpush.msra.mxu0 %v2679
  %2806 = vmatpush.msra.mxu0 %v2671
  %2807 = vmatpush.msra.mxu0 %v2663
  %2808 = vmatpush.msra.mxu0 %v2655
  %2809 = vmatpush.msra.mxu0 %v2647
  %2810 = vmatpush.msra.mxu0 %v2639
  %2811 = vmatpush.msra.mxu0 %v2631
  %2812 = vmatmul.f32.gmra.mxu0 %v2629
  %v2813 = vpop.f32.mrf.mxu0
  %v2814 = vadd.f32 %v2761, %v2813
  %2815 = vdwg.mxu0
  %2816 = vmatpush.msra.mxu0 %v2752
  %2817 = vmatpush.msra.mxu0 %v2744
  %2818 = vmatpush.msra.mxu0 %v2736
  %2819 = vmatpush.msra.mxu0 %v2728
  %2820 = vmatpush.msra.mxu0 %v2720
  %2821 = vmatpush.msra.mxu0 %v2712
  %2822 = vmatpush.msra.mxu0 %v2704
  %2823 = vmatpush.msra.mxu0 %v2696
  %2824 = vmatpush.msra.mxu0 %v2688
  %2825 = vmatpush.msra.mxu0 %v2680
  %2826 = vmatpush.msra.mxu0 %v2672
  %2827 = vmatpush.msra.mxu0 %v2664
  %2828 = vmatpush.msra.mxu0 %v2656
  %2829 = vmatpush.msra.mxu0 %v2648
  %2830 = vmatpush.msra.mxu0 %v2640
  %2831 = vmatpush.msra.mxu0 %v2632
  %2832 = vmatmul.f32.gmra.mxu0 %v2629
  %v2833 = vpop.f32.mrf.mxu0
  %v2834 = vadd.f32 %v2762, %v2833
  %2835 = vdwg.mxu0
  %2836 = vmatpush.msra.mxu0 %v2753
  %2837 = vmatpush.msra.mxu0 %v2745
  %2838 = vmatpush.msra.mxu0 %v2737
  %2839 = vmatpush.msra.mxu0 %v2729
  %2840 = vmatpush.msra.mxu0 %v2721
  %2841 = vmatpush.msra.mxu0 %v2713
  %2842 = vmatpush.msra.mxu0 %v2705
  %2843 = vmatpush.msra.mxu0 %v2697
  %2844 = vmatpush.msra.mxu0 %v2689
  %2845 = vmatpush.msra.mxu0 %v2681
  %2846 = vmatpush.msra.mxu0 %v2673
  %2847 = vmatpush.msra.mxu0 %v2665
  %2848 = vmatpush.msra.mxu0 %v2657
  %2849 = vmatpush.msra.mxu0 %v2649
  %2850 = vmatpush.msra.mxu0 %v2641
  %2851 = vmatpush.msra.mxu0 %v2633
  %2852 = vmatmul.f32.gmra.mxu0 %v2629
  %v2853 = vpop.f32.mrf.mxu0
  %v2854 = vadd.f32 %v2763, %v2853
  %2855 = vdwg.mxu0
  %2856 = vmatpush.msra.mxu0 %v2754
  %2857 = vmatpush.msra.mxu0 %v2746
  %2858 = vmatpush.msra.mxu0 %v2738
  %2859 = vmatpush.msra.mxu0 %v2730
  %2860 = vmatpush.msra.mxu0 %v2722
  %2861 = vmatpush.msra.mxu0 %v2714
  %2862 = vmatpush.msra.mxu0 %v2706
  %2863 = vmatpush.msra.mxu0 %v2698
  %2864 = vmatpush.msra.mxu0 %v2690
  %2865 = vmatpush.msra.mxu0 %v2682
  %2866 = vmatpush.msra.mxu0 %v2674
  %2867 = vmatpush.msra.mxu0 %v2666
  %2868 = vmatpush.msra.mxu0 %v2658
  %2869 = vmatpush.msra.mxu0 %v2650
  %2870 = vmatpush.msra.mxu0 %v2642
  %2871 = vmatpush.msra.mxu0 %v2634
  %2872 = vmatmul.f32.gmra.mxu0 %v2629
  %v2873 = vpop.f32.mrf.mxu0
  %v2874 = vadd.f32 %v2764, %v2873
  %2875 = vdwg.mxu0
  %2876 = vmatpush.msra.mxu0 %v2755
  %2877 = vmatpush.msra.mxu0 %v2747
  %2878 = vmatpush.msra.mxu0 %v2739
  %2879 = vmatpush.msra.mxu0 %v2731
  %2880 = vmatpush.msra.mxu0 %v2723
  %2881 = vmatpush.msra.mxu0 %v2715
  %2882 = vmatpush.msra.mxu0 %v2707
  %2883 = vmatpush.msra.mxu0 %v2699
  %2884 = vmatpush.msra.mxu0 %v2691
  %2885 = vmatpush.msra.mxu0 %v2683
  %2886 = vmatpush.msra.mxu0 %v2675
  %2887 = vmatpush.msra.mxu0 %v2667
  %2888 = vmatpush.msra.mxu0 %v2659
  %2889 = vmatpush.msra.mxu0 %v2651
  %2890 = vmatpush.msra.mxu0 %v2643
  %2891 = vmatpush.msra.mxu0 %v2635
  %2892 = vmatmul.f32.gmra.mxu0 %v2629
  %v2893 = vpop.f32.mrf.mxu0
  %v2894 = vadd.f32 %v2765, %v2893
  %2895 = vdwg.mxu0
  %2896 = vmatpush.msra.mxu0 %v2756
  %2897 = vmatpush.msra.mxu0 %v2748
  %2898 = vmatpush.msra.mxu0 %v2740
  %2899 = vmatpush.msra.mxu0 %v2732
  %2900 = vmatpush.msra.mxu0 %v2724
  %2901 = vmatpush.msra.mxu0 %v2716
  %2902 = vmatpush.msra.mxu0 %v2708
  %2903 = vmatpush.msra.mxu0 %v2700
  %2904 = vmatpush.msra.mxu0 %v2692
  %2905 = vmatpush.msra.mxu0 %v2684
  %2906 = vmatpush.msra.mxu0 %v2676
  %2907 = vmatpush.msra.mxu0 %v2668
  %2908 = vmatpush.msra.mxu0 %v2660
  %2909 = vmatpush.msra.mxu0 %v2652
  %2910 = vmatpush.msra.mxu0 %v2644
  %2911 = vmatpush.msra.mxu0 %v2636
  %2912 = vmatmul.f32.gmra.mxu0 %v2629
  %v2913 = vpop.f32.mrf.mxu0
  %v2914 = vadd.f32 %v2766, %v2913
  %2915 = vdwg.mxu0
  %2916 = vmatpush.msra.mxu0 %v2757
  %2917 = vmatpush.msra.mxu0 %v2749
  %2918 = vmatpush.msra.mxu0 %v2741
  %2919 = vmatpush.msra.mxu0 %v2733
  %2920 = vmatpush.msra.mxu0 %v2725
  %2921 = vmatpush.msra.mxu0 %v2717
  %2922 = vmatpush.msra.mxu0 %v2709
  %2923 = vmatpush.msra.mxu0 %v2701
  %2924 = vmatpush.msra.mxu0 %v2693
  %2925 = vmatpush.msra.mxu0 %v2685
  %2926 = vmatpush.msra.mxu0 %v2677
  %2927 = vmatpush.msra.mxu0 %v2669
  %2928 = vmatpush.msra.mxu0 %v2661
  %2929 = vmatpush.msra.mxu0 %v2653
  %2930 = vmatpush.msra.mxu0 %v2645
  %2931 = vmatpush.msra.mxu0 %v2637
  %2932 = vmatmul.f32.gmra.mxu0 %v2629
  %v2933 = vpop.f32.mrf.mxu0
  %v2934 = vadd.f32 %v2767, %v2933
  %2935 = vdwg.mxu0
  %v2936 = vmax.f32 %v2794, 0.0
  %v2937 = vmax.f32 %v2814, 0.0
  %v2938 = vmax.f32 %v2834, 0.0
  %v2939 = vmax.f32 %v2854, 0.0
  %v2940 = vmax.f32 %v2874, 0.0
  %v2941 = vmax.f32 %v2894, 0.0
  %v2942 = vmax.f32 %v2914, 0.0
  %v2943 = vmax.f32 %v2934, 0.0
  %v2944 = vld [vmem:[%s8] sm:$0xff]
  %v2945 = vld [vmem:[%s8 + $0x8] sm:$0xff]
  %v2946 = vld [vmem:[%s8 + $0x10] sm:$0xff]
  %v2947 = vld [vmem:[%s8 + $0x18] sm:$0xff]
  %v2948 = vld [vmem:[%s8 + $0x20] sm:$0xff]
  %v2949 = vld [vmem:[%s8 + $0x28] sm:$0xff]
  %v2950 = vld [vmem:[%s8 + $0x30] sm:$0xff]
  %v2951 = vld [vmem:[%s8 + $0x38] sm:$0xff]
  %v2952 = vld [vmem:[%s8 + $0x40] sm:$0xff]
  %v2953 = vld [vmem:[%s8 + $0x48] sm:$0xff]
  %v2954 = vld [vmem:[%s8 + $0x50] sm:$0xff]
  %v2955 = vld [vmem:[%s8 + $0x58] sm:$0xff]
  %v2956 = vld [vmem:[%s8 + $0x60] sm:$0xff]
  %v2957 = vld [vmem:[%s8 + $0x68] sm:$0xff]
  %v2958 = vld [vmem:[%s8 + $0x70] sm:$0xff]
  %v2959 = vld [vmem:[%s8 + $0x78] sm:$0xff]
  %v2960 = vld [vmem:[%s8 + $0x80] sm:$0xff]
  %v2961 = vld [vmem:[%s8 + $0x88] sm:$0xff]
  %v2962 = vld [vmem:[%s8 + $0x90] sm:$0xff]
  %v2963 = vld [vmem:[%s8 + $0x98] sm:$0xff]
  %v2964 = vld [vmem:[%s8 + $0xa0] sm:$0xff]
  %v2965 = vld [vmem:[%s8 + $0xa8] sm:$0xff]
  %v2966 = vld [vmem:[%s8 + $0xb0] sm:$0xff]
  %v2967 = vld [vmem:[%s8 + $0xb8] sm:$0xff]
  %v2968 = vld [vmem:[%s8 + $0xc0] sm:$0xff]
  %v2969 = vld [vmem:[%s8 + $0xc8] sm:$0xff]
  %v2970 = vld [vmem:[%s8 + $0xd0] sm:$0xff]
  %v2971 = vld [vmem:[%s8 + $0xd8] sm:$0xff]
  %v2972 = vld [vmem:[%s8 + $0xe0] sm:$0xff]
  %v2973 = vld [vmem:[%s8 + $0xe8] sm:$0xff]
  %v2974 = vld [vmem:[%s8 + $0xf0] sm:$0xff]
  %v2975 = vld [vmem:[%s8 + $0xf8] sm:$0xff]
  %v2976 = vld [vmem:[%s8 + $0x100] sm:$0xff]
  %v2977 = vld [vmem:[%s8 + $0x108] sm:$0xff]
  %v2978 = vld [vmem:[%s8 + $0x110] sm:$0xff]
  %v2979 = vld [vmem:[%s8 + $0x118] sm:$0xff]
  %v2980 = vld [vmem:[%s8 + $0x120] sm:$0xff]
  %v2981 = vld [vmem:[%s8 + $0x128] sm:$0xff]
  %v2982 = vld [vmem:[%s8 + $0x130] sm:$0xff]
  %v2983 = vld [vmem:[%s8 + $0x138] sm:$0xff]
  %v2984 = vld [vmem:[%s8 + $0x140] sm:$0xff]
  %v2985 = vld [vmem:[%s8 + $0x148] sm:$0xff]
  %v2986 = vld [vmem:[%s8 + $0x150] sm:$0xff]
  %v2987 = vld [vmem:[%s8 + $0x158] sm:$0xff]
  %v2988 = vld [vmem:[%s8 + $0x160] sm:$0xff]
  %v2989 = vld [vmem:[%s8 + $0x168] sm:$0xff]
  %v2990 = vld [vmem:[%s8 + $0x170] sm:$0xff]
  %v2991 = vld [vmem:[%s8 + $0x178] sm:$0xff]
  %v2992 = vld [vmem:[%s8 + $0x180] sm:$0xff]
  %v2993 = vld [vmem:[%s8 + $0x188] sm:$0xff]
  %v2994 = vld [vmem:[%s8 + $0x190] sm:$0xff]
  %v2995 = vld [vmem:[%s8 + $0x198] sm:$0xff]
  %v2996 = vld [vmem:[%s8 + $0x1a0] sm:$0xff]
  %v2997 = vld [vmem:[%s8 + $0x1a8] sm:$0xff]
  %v2998 = vld [vmem:[%s8 + $0x1b0] sm:$0xff]
  %v2999 = vld [vmem:[%s8 + $0x1b8] sm:$0xff]
  %v3000 = vld [vmem:[%s8 + $0x1c0] sm:$0xff]
  %v3001 = vld [vmem:[%s8 + $0x1c8] sm:$0xff]
  %v3002 = vld [vmem:[%s8 + $0x1d0] sm:$0xff]
  %v3003 = vld [vmem:[%s8 + $0x1d8] sm:$0xff]
  %v3004 = vld [vmem:[%s8 + $0x1e0] sm:$0xff]
  %v3005 = vld [vmem:[%s8 + $0x1e8] sm:$0xff]
  %v3006 = vld [vmem:[%s8 + $0x1f0] sm:$0xff]
  %v3007 = vld [vmem:[%s8 + $0x1f8] sm:$0xff]
  %v3008 = vld [vmem:[%s8 + $0x200] sm:$0xff]
  %v3009 = vld [vmem:[%s8 + $0x208] sm:$0xff]
  %v3010 = vld [vmem:[%s8 + $0x210] sm:$0xff]
  %v3011 = vld [vmem:[%s8 + $0x218] sm:$0xff]
  %v3012 = vld [vmem:[%s8 + $0x220] sm:$0xff]
  %v3013 = vld [vmem:[%s8 + $0x228] sm:$0xff]
  %v3014 = vld [vmem:[%s8 + $0x230] sm:$0xff]
  %v3015 = vld [vmem:[%s8 + $0x238] sm:$0xff]
  %v3016 = vld [vmem:[%s8 + $0x240] sm:$0xff]
  %v3017 = vld [vmem:[%s8 + $0x248] sm:$0xff]
  %v3018 = vld [vmem:[%s8 + $0x250] sm:$0xff]
  %v3019 = vld [vmem:[%s8 + $0x258] sm:$0xff]
  %v3020 = vld [vmem:[%s8 + $0x260] sm:$0xff]
  %v3021 = vld [vmem:[%s8 + $0x268] sm:$0xff]
  %v3022 = vld [vmem:[%s8 + $0x270] sm:$0xff]
  %v3023 = vld [vmem:[%s8 + $0x278] sm:$0xff]
  %v3024 = vld [vmem:[%s8 + $0x280] sm:$0xff]
  %v3025 = vld [vmem:[%s8 + $0x288] sm:$0xff]
  %v3026 = vld [vmem:[%s8 + $0x290] sm:$0xff]
  %v3027 = vld [vmem:[%s8 + $0x298] sm:$0xff]
  %v3028 = vld [vmem:[%s8 + $0x2a0] sm:$0xff]
  %v3029 = vld [vmem:[%s8 + $0x2a8] sm:$0xff]
  %v3030 = vld [vmem:[%s8 + $0x2b0] sm:$0xff]
  %v3031 = vld [vmem:[%s8 + $0x2b8] sm:$0xff]
  %v3032 = vld [vmem:[%s8 + $0x2c0] sm:$0xff]
  %v3033 = vld [vmem:[%s8 + $0x2c8] sm:$0xff]
  %v3034 = vld [vmem:[%s8 + $0x2d0] sm:$0xff]
  %v3035 = vld [vmem:[%s8 + $0x2d8] sm:$0xff]
  %v3036 = vld [vmem:[%s8 + $0x2e0] sm:$0xff]
  %v3037 = vld [vmem:[%s8 + $0x2e8] sm:$0xff]
  %v3038 = vld [vmem:[%s8 + $0x2f0] sm:$0xff]
  %v3039 = vld [vmem:[%s8 + $0x2f8] sm:$0xff]
  %v3040 = vld [vmem:[%s8 + $0x300] sm:$0xff]
  %v3041 = vld [vmem:[%s8 + $0x308] sm:$0xff]
  %v3042 = vld [vmem:[%s8 + $0x310] sm:$0xff]
  %v3043 = vld [vmem:[%s8 + $0x318] sm:$0xff]
  %v3044 = vld [vmem:[%s8 + $0x320] sm:$0xff]
  %v3045 = vld [vmem:[%s8 + $0x328] sm:$0xff]
  %v3046 = vld [vmem:[%s8 + $0x330] sm:$0xff]
  %v3047 = vld [vmem:[%s8 + $0x338] sm:$0xff]
  %v3048 = vld [vmem:[%s8 + $0x340] sm:$0xff]
  %v3049 = vld [vmem:[%s8 + $0x348] sm:$0xff]
  %v3050 = vld [vmem:[%s8 + $0x350] sm:$0xff]
  %v3051 = vld [vmem:[%s8 + $0x358] sm:$0xff]
  %v3052 = vld [vmem:[%s8 + $0x360] sm:$0xff]
  %v3053 = vld [vmem:[%s8 + $0x368] sm:$0xff]
  %v3054 = vld [vmem:[%s8 + $0x370] sm:$0xff]
  %v3055 = vld [vmem:[%s8 + $0x378] sm:$0xff]
  %v3056 = vld [vmem:[%s8 + $0x380] sm:$0xff]
  %v3057 = vld [vmem:[%s8 + $0x388] sm:$0xff]
  %v3058 = vld [vmem:[%s8 + $0x390] sm:$0xff]
  %v3059 = vld [vmem:[%s8 + $0x398] sm:$0xff]
  %v3060 = vld [vmem:[%s8 + $0x3a0] sm:$0xff]
  %v3061 = vld [vmem:[%s8 + $0x3a8] sm:$0xff]
  %v3062 = vld [vmem:[%s8 + $0x3b0] sm:$0xff]
  %v3063 = vld [vmem:[%s8 + $0x3b8] sm:$0xff]
  %v3064 = vld [vmem:[%s8 + $0x3c0] sm:$0xff]
  %v3065 = vld [vmem:[%s8 + $0x3c8] sm:$0xff]
  %v3066 = vld [vmem:[%s8 + $0x3d0] sm:$0xff]
  %v3067 = vld [vmem:[%s8 + $0x3d8] sm:$0xff]
  %v3068 = vld [vmem:[%s8 + $0x3e0] sm:$0xff]
  %v3069 = vld [vmem:[%s8 + $0x3e8] sm:$0xff]
  %v3070 = vld [vmem:[%s8 + $0x3f0] sm:$0xff]
  %v3071 = vld [vmem:[%s8 + $0x3f8] sm:$0xff]
  %v3072 = vld [vmem:[%s9] sm:$0x1]
  %v3074 = vperm.slane %v3072, 0
  %3076 = vmatpush.msra.mxu0 %v2959
  %3077 = vmatpush.msra.mxu0 %v2958
  %3078 = vmatpush.msra.mxu0 %v2957
  %3079 = vmatpush.msra.mxu0 %v2956
  %3080 = vmatpush.msra.mxu0 %v2955
  %3081 = vmatpush.msra.mxu0 %v2954
  %3082 = vmatpush.msra.mxu0 %v2953
  %3083 = vmatpush.msra.mxu0 %v2952
  %3084 = vmatpush.msra.mxu0 %v2951
  %3085 = vmatpush.msra.mxu0 %v2950
  %3086 = vmatpush.msra.mxu0 %v2949
  %3087 = vmatpush.msra.mxu0 %v2948
  %3088 = vmatpush.msra.mxu0 %v2947
  %3089 = vmatpush.msra.mxu0 %v2946
  %3090 = vmatpush.msra.mxu0 %v2945
  %3091 = vmatpush.msra.mxu0 %v2944
  %3092 = vmatmul.f32.gmra.mxu0 %v2936
  %v3093 = vpop.f32.mrf.mxu0
  %v3094 = vadd.f32 %v3074, %v3093
  %3095 = vdwg.mxu0
  %3096 = vmatpush.msra.mxu0 %v2975
  %3097 = vmatpush.msra.mxu0 %v2974
  %3098 = vmatpush.msra.mxu0 %v2973
  %3099 = vmatpush.msra.mxu0 %v2972
  %3100 = vmatpush.msra.mxu0 %v2971
  %3101 = vmatpush.msra.mxu0 %v2970
  %3102 = vmatpush.msra.mxu0 %v2969
  %3103 = vmatpush.msra.mxu0 %v2968
  %3104 = vmatpush.msra.mxu0 %v2967
  %3105 = vmatpush.msra.mxu0 %v2966
  %3106 = vmatpush.msra.mxu0 %v2965
  %3107 = vmatpush.msra.mxu0 %v2964
  %3108 = vmatpush.msra.mxu0 %v2963
  %3109 = vmatpush.msra.mxu0 %v2962
  %3110 = vmatpush.msra.mxu0 %v2961
  %3111 = vmatpush.msra.mxu0 %v2960
  %3112 = vmatmul.f32.gmra.mxu0 %v2937
  %v3113 = vpop.f32.mrf.mxu0
  %v3114 = vadd.f32 %v3094, %v3113
  %3115 = vdwg.mxu0
  %3116 = vmatpush.msra.mxu0 %v2991
  %3117 = vmatpush.msra.mxu0 %v2990
  %3118 = vmatpush.msra.mxu0 %v2989
  %3119 = vmatpush.msra.mxu0 %v2988
  %3120 = vmatpush.msra.mxu0 %v2987
  %3121 = vmatpush.msra.mxu0 %v2986
  %3122 = vmatpush.msra.mxu0 %v2985
  %3123 = vmatpush.msra.mxu0 %v2984
  %3124 = vmatpush.msra.mxu0 %v2983
  %3125 = vmatpush.msra.mxu0 %v2982
  %3126 = vmatpush.msra.mxu0 %v2981
  %3127 = vmatpush.msra.mxu0 %v2980
  %3128 = vmatpush.msra.mxu0 %v2979
  %3129 = vmatpush.msra.mxu0 %v2978
  %3130 = vmatpush.msra.mxu0 %v2977
  %3131 = vmatpush.msra.mxu0 %v2976
  %3132 = vmatmul.f32.gmra.mxu0 %v2938
  %v3133 = vpop.f32.mrf.mxu0
  %v3134 = vadd.f32 %v3114, %v3133
  %3135 = vdwg.mxu0
  %3136 = vmatpush.msra.mxu0 %v3007
  %3137 = vmatpush.msra.mxu0 %v3006
  %3138 = vmatpush.msra.mxu0 %v3005
  %3139 = vmatpush.msra.mxu0 %v3004
  %3140 = vmatpush.msra.mxu0 %v3003
  %3141 = vmatpush.msra.mxu0 %v3002
  %3142 = vmatpush.msra.mxu0 %v3001
  %3143 = vmatpush.msra.mxu0 %v3000
  %3144 = vmatpush.msra.mxu0 %v2999
  %3145 = vmatpush.msra.mxu0 %v2998
  %3146 = vmatpush.msra.mxu0 %v2997
  %3147 = vmatpush.msra.mxu0 %v2996
  %3148 = vmatpush.msra.mxu0 %v2995
  %3149 = vmatpush.msra.mxu0 %v2994
  %3150 = vmatpush.msra.mxu0 %v2993
  %3151 = vmatpush.msra.mxu0 %v2992
  %3152 = vmatmul.f32.gmra.mxu0 %v2939
  %v3153 = vpop.f32.mrf.mxu0
  %v3154 = vadd.f32 %v3134, %v3153
  %3155 = vdwg.mxu0
  %3156 = vmatpush.msra.mxu0 %v3023
  %3157 = vmatpush.msra.mxu0 %v3022
  %3158 = vmatpush.msra.mxu0 %v3021
  %3159 = vmatpush.msra.mxu0 %v3020
  %3160 = vmatpush.msra.mxu0 %v3019
  %3161 = vmatpush.msra.mxu0 %v3018
  %3162 = vmatpush.msra.mxu0 %v3017
  %3163 = vmatpush.msra.mxu0 %v3016
  %3164 = vmatpush.msra.mxu0 %v3015
  %3165 = vmatpush.msra.mxu0 %v3014
  %3166 = vmatpush.msra.mxu0 %v3013
  %3167 = vmatpush.msra.mxu0 %v3012
  %3168 = vmatpush.msra.mxu0 %v3011
  %3169 = vmatpush.msra.mxu0 %v3010
  %3170 = vmatpush.msra.mxu0 %v3009
  %3171 = vmatpush.msra.mxu0 %v3008
  %3172 = vmatmul.f32.gmra.mxu0 %v2940
  %v3173 = vpop.f32.mrf.mxu0
  %v3174 = vadd.f32 %v3154, %v3173
  %3175 = vdwg.mxu0
  %3176 = vmatpush.msra.mxu0 %v3039
  %3177 = vmatpush.msra.mxu0 %v3038
  %3178 = vmatpush.msra.mxu0 %v3037
  %3179 = vmatpush.msra.mxu0 %v3036
  %3180 = vmatpush.msra.mxu0 %v3035
  %3181 = vmatpush.msra.mxu0 %v3034
  %3182 = vmatpush.msra.mxu0 %v3033
  %3183 = vmatpush.msra.mxu0 %v3032
  %3184 = vmatpush.msra.mxu0 %v3031
  %3185 = vmatpush.msra.mxu0 %v3030
  %3186 = vmatpush.msra.mxu0 %v3029
  %3187 = vmatpush.msra.mxu0 %v3028
  %3188 = vmatpush.msra.mxu0 %v3027
  %3189 = vmatpush.msra.mxu0 %v3026
  %3190 = vmatpush.msra.mxu0 %v3025
  %3191 = vmatpush.msra.mxu0 %v3024
  %3192 = vmatmul.f32.gmra.mxu0 %v2941
  %v3193 = vpop.f32.mrf.mxu0
  %v3194 = vadd.f32 %v3174, %v3193
  %3195 = vdwg.mxu0
  %3196 = vmatpush.msra.mxu0 %v3055
  %3197 = vmatpush.msra.mxu0 %v3054
  %3198 = vmatpush.msra.mxu0 %v3053
  %3199 = vmatpush.msra.mxu0 %v3052
  %3200 = vmatpush.msra.mxu0 %v3051
  %3201 = vmatpush.msra.mxu0 %v3050
  %3202 = vmatpush.msra.mxu0 %v3049
  %3203 = vmatpush.msra.mxu0 %v3048
  %3204 = vmatpush.msra.mxu0 %v3047
  %3205 = vmatpush.msra.mxu0 %v3046
  %3206 = vmatpush.msra.mxu0 %v3045
  %3207 = vmatpush.msra.mxu0 %v3044
  %3208 = vmatpush.msra.mxu0 %v3043
  %3209 = vmatpush.msra.mxu0 %v3042
  %3210 = vmatpush.msra.mxu0 %v3041
  %3211 = vmatpush.msra.mxu0 %v3040
  %3212 = vmatmul.f32.gmra.mxu0 %v2942
  %v3213 = vpop.f32.mrf.mxu0
  %v3214 = vadd.f32 %v3194, %v3213
  %3215 = vdwg.mxu0
  %3216 = vmatpush.msra.mxu0 %v3071
  %3217 = vmatpush.msra.mxu0 %v3070
  %3218 = vmatpush.msra.mxu0 %v3069
  %3219 = vmatpush.msra.mxu0 %v3068
  %3220 = vmatpush.msra.mxu0 %v3067
  %3221 = vmatpush.msra.mxu0 %v3066
  %3222 = vmatpush.msra.mxu0 %v3065
  %3223 = vmatpush.msra.mxu0 %v3064
  %3224 = vmatpush.msra.mxu0 %v3063
  %3225 = vmatpush.msra.mxu0 %v3062
  %3226 = vmatpush.msra.mxu0 %v3061
  %3227 = vmatpush.msra.mxu0 %v3060
  %3228 = vmatpush.msra.mxu0 %v3059
  %3229 = vmatpush.msra.mxu0 %v3058
  %3230 = vmatpush.msra.mxu0 %v3057
  %3231 = vmatpush.msra.mxu0 %v3056
  %3232 = vmatmul.f32.gmra.mxu0 %v2943
  %v3233 = vpop.f32.mrf.mxu0
  %v3234 = vadd.f32 %v3214, %v3233
  %3235 = vdwg.mxu0
  %v3236 = vmax.f32 %v3234, 0.0
  %v3237 = vld [vmem:[%s10] sm:$0xff]
  %v3238 = vld [vmem:[%s10 + $0x8] sm:$0xff]
  %v3239 = vld [vmem:[%s10 + $0x10] sm:$0xff]
  %v3240 = vld [vmem:[%s10 + $0x18] sm:$0xff]
  %v3241 = vld [vmem:[%s10 + $0x20] sm:$0xff]
  %v3242 = vld [vmem:[%s10 + $0x28] sm:$0xff]
  %v3243 = vld [vmem:[%s10 + $0x30] sm:$0xff]
  %v3244 = vld [vmem:[%s10 + $0x38] sm:$0xff]
  %v3245 = vld [vmem:[%s10 + $0x40] sm:$0xff]
  %v3246 = vld [vmem:[%s10 + $0x48] sm:$0xff]
  %v3247 = vld [vmem:[%s10 + $0x50] sm:$0xff]
  %v3248 = vld [vmem:[%s10 + $0x58] sm:$0xff]
  %v3249 = vld [vmem:[%s10 + $0x60] sm:$0xff]
  %v3250 = vld [vmem:[%s10 + $0x68] sm:$0xff]
  %v3251 = vld [vmem:[%s10 + $0x70] sm:$0xff]
  %v3252 = vld [vmem:[%s10 + $0x78] sm:$0xff]
  %v3253 = vld [vmem:[%s11] sm:$0x1]
  %v3255 = vperm.slane %v3253, 0
  %3257 = vmatpush.msra.mxu0 %v3252
  %3258 = vmatpush.msra.mxu0 %v3251
  %3259 = vmatpush.msra.mxu0 %v3250
  %3260 = vmatpush.msra.mxu0 %v3249
  %3261 = vmatpush.msra.mxu0 %v3248
  %3262 = vmatpush.msra.mxu0 %v3247
  %3263 = vmatpush.msra.mxu0 %v3246
  %3264 = vmatpush.msra.mxu0 %v3245
  %3265 = vmatpush.msra.mxu0 %v3244
  %3266 = vmatpush.msra.mxu0 %v3243
  %3267 = vmatpush.msra.mxu0 %v3242
  %3268 = vmatpush.msra.mxu0 %v3241
  %3269 = vmatpush.msra.mxu0 %v3240
  %3270 = vmatpush.msra.mxu0 %v3239
  %3271 = vmatpush.msra.mxu0 %v3238
  %3272 = vmatpush.msra.mxu0 %v3237
  %3273 = vmatmul.f32.gmra.mxu0 %v3236
  %v3274 = vpop.f32.mrf.mxu0
  %v3275 = vadd.f32 %v3255, %v3274
  %3276 = vdwg.mxu0
  %v3277 = vmax.f32 %v3275, 0.0
  %v3278 = vmin.f32 %v3277, 110.0
  %3279 = vst [vmem:[%s12] sm:$0xff] %v3278
  // Predicated region
  $region50: #{graph_head_forward.1} parent=0 // pred_check
    _
  $region51: #{graph_head_forward.1} parent=0 // pred_check_branch
    %3281 = sbr.rel (0) target = $region53
  $region52: #{graph_head_forward.1} parent=0 // pred_region
    _
  $region53: #{graph_head_forward.1} parent=0 // pred_fallthru
    _
  // Predicated region
  $region54: #{graph_head_forward.1} parent=0 // pred_check
    _
  $region55: #{graph_head_forward.1} parent=0 // pred_check_branch
    %3283 = sbr.rel (0) target = $region57
  $region56: #{graph_head_forward.1} parent=0 // pred_region
    _
  $region57: #{graph_head_forward.1} parent=0 // pred_fallthru
    _

</llo_original>
